<compile_context>
chip_gen: v7x
topology: tpu7x:2x2x1
jax: 0.10.0
libtpu: 0.0.40
codegen_flags: <defaults>
</compile_context>

<pallas_src>
import functools

import jax
import jax.numpy as jnp
from jax.experimental import pallas as pl
from jax.experimental.pallas import tpu as pltpu

BN_EPS = 1e-5
LEAKY_SLOPE = 0.2          # F.leaky_relu(x, 0.2)
LANE = 128
VMEM_LIMIT = 48 * 1024 * 1024


# ----------------------------- helpers --------------------------------------

def _round_up(x, m):
    return (x + m - 1) // m * m


def _tiles(M, Kd):
    """Row tile (mult of 16 for bf16 sublanes), padded M, and K tile."""
    tm = min(512, _round_up(M, 16))
    Mp = _round_up(M, tm)
    tk = 2048 if (Kd > 2048 and Kd % 2048 == 0) else Kd
    return tm, Mp, tk


def _compiler_params():
    return pltpu.CompilerParams(
        dimension_semantics=("parallel", "arbitrary"),
        vmem_limit_bytes=VMEM_LIMIT,
    )


# ----------------------------- Pallas kernels -------------------------------

def _matmul_bias_act_kernel(p_ref, w_ref, b_ref, o_ref, acc_ref, *, act):
    """K-tiled  o = act(P @ W + b).  bf16 operands, f32 accumulation."""
    @pl.when(pl.program_id(1) == 0)
    def _():
        acc_ref[...] = jnp.zeros_like(acc_ref)

    acc_ref[...] += jnp.dot(p_ref[...], w_ref[...],
                            preferred_element_type=jnp.float32)

    @pl.when(pl.program_id(1) == pl.num_programs(1) - 1)
    def _():
        y = acc_ref[...] + b_ref[...]
        if act == "leaky":
            y = jnp.where(y >= 0, y, LEAKY_SLOPE * y)
        else:  # sigmoid
            y = 1.0 / (1.0 + jnp.exp(-y))
        o_ref[...] = y.astype(o_ref.dtype)


def _matmul_stats_kernel(p_ref, w_ref, o_ref, stats_ref, acc_ref):
    """K-tiled  o = P @ W,  plus per-tile partial col-sum / col-sum-of-squares
    (row 0 / row 1 of an (8, Cpad) stats block) for BatchNorm batch stats."""
    @pl.when(pl.program_id(1) == 0)
    def _():
        acc_ref[...] = jnp.zeros_like(acc_ref)

    acc_ref[...] += jnp.dot(p_ref[...], w_ref[...],
                            preferred_element_type=jnp.float32)

    @pl.when(pl.program_id(1) == pl.num_programs(1) - 1)
    def _():
        acc = acc_ref[...]
        o_ref[...] = acc
        s = jnp.sum(acc, axis=0, keepdims=True)          # (1, Cpad)
        sq = jnp.sum(acc * acc, axis=0, keepdims=True)   # (1, Cpad)
        row = jax.lax.broadcasted_iota(jnp.int32, (8, acc.shape[1]), 0)
        stats_ref[...] = jnp.where(row == 0, s, jnp.where(row == 1, sq, 0.0))


def _scale_shift_act_kernel(x_ref, scale_ref, shift_ref, o_ref):
    """Per-channel affine (BatchNorm) + leaky_relu(0.2); writes bf16."""
    y = x_ref[...] * scale_ref[...] + shift_ref[...]
    o_ref[...] = jnp.where(y >= 0, y, LEAKY_SLOPE * y).astype(o_ref.dtype)


# ----------------------------- kernel wrappers ------------------------------

def matmul_bias_act(P, Wm, bias_row, act, out_dtype):
    """P:(M,Kd) bf16, Wm:(Kd,Cpad) bf16, bias_row:(1,Cpad) f32.
    Returns act(P@Wm + b) with padded rows, shape (Mp, Cpad)."""
    M, Kd = P.shape
    Cpad = Wm.shape[1]
    tm, Mp, tk = _tiles(M, Kd)
    if Mp != M:
        P = jnp.pad(P, ((0, Mp - M), (0, 0)))
    nm, nk = Mp // tm, Kd // tk
    return pl.pallas_call(
        functools.partial(_matmul_bias_act_kernel, act=act),
        grid=(nm, nk),
        in_specs=[
            pl.BlockSpec((tm, tk), lambda i, k: (i, k)),
            pl.BlockSpec((tk, Cpad), lambda i, k: (k, 0)),
            pl.BlockSpec((1, Cpad), lambda i, k: (0, 0)),
        ],
        out_specs=pl.BlockSpec((tm, Cpad), lambda i, k: (i, 0)),
        out_shape=jax.ShapeDtypeStruct((Mp, Cpad), out_dtype),
        scratch_shapes=[pltpu.VMEM((tm, Cpad), jnp.float32)],
        compiler_params=_compiler_params(),
    )(P, Wm, bias_row)


def matmul_with_stats(P, Wm):
    """Returns (out (Mp,Cpad) f32, colsum (Cpad,), colsumsq (Cpad,))."""
    M, Kd = P.shape
    Cpad = Wm.shape[1]
    tm, Mp, tk = _tiles(M, Kd)
    if Mp != M:
        P = jnp.pad(P, ((0, Mp - M), (0, 0)))
    nm, nk = Mp // tm, Kd // tk
    out, stats = pl.pallas_call(
        _matmul_stats_kernel,
        grid=(nm, nk),
        in_specs=[
            pl.BlockSpec((tm, tk), lambda i, k: (i, k)),
            pl.BlockSpec((tk, Cpad), lambda i, k: (k, 0)),
        ],
        out_specs=(
            pl.BlockSpec((tm, Cpad), lambda i, k: (i, 0)),
            pl.BlockSpec((8, Cpad), lambda i, k: (i, 0)),
        ),
        out_shape=(
            jax.ShapeDtypeStruct((Mp, Cpad), jnp.float32),
            jax.ShapeDtypeStruct((nm * 8, Cpad), jnp.float32),
        ),
        scratch_shapes=[pltpu.VMEM((tm, Cpad), jnp.float32)],
        compiler_params=_compiler_params(),
    )(P, Wm)
    stats = stats.reshape(nm, 8, Cpad)
    csum = jnp.sum(stats[:, 0, :], axis=0)
    csq = jnp.sum(stats[:, 1, :], axis=0)
    return out, csum, csq


def scale_shift_act(X, scale, shift):
    """X:(Mp,Cpad) f32 -> bf16 leaky(X*scale + shift)."""
    Mp, Cpad = X.shape
    tm = min(512, Mp)
    return pl.pallas_call(
        _scale_shift_act_kernel,
        grid=(Mp // tm,),
        in_specs=[
            pl.BlockSpec((tm, Cpad), lambda i: (i, 0)),
            pl.BlockSpec((1, Cpad), lambda i: (0, 0)),
            pl.BlockSpec((1, Cpad), lambda i: (0, 0)),
        ],
        out_specs=pl.BlockSpec((tm, Cpad), lambda i: (i, 0)),
        out_shape=jax.ShapeDtypeStruct((Mp, Cpad), jnp.bfloat16),
        compiler_params=pltpu.CompilerParams(
            dimension_semantics=("parallel",), vmem_limit_bytes=VMEM_LIMIT),
    )(X, scale.reshape(1, Cpad).astype(jnp.float32),
      shift.reshape(1, Cpad).astype(jnp.float32))


# ------------------ Conv2d(4, stride=2, pad=1) as s2d + im2col ---------------

def conv_s2_im2col(x_nhwc, w):
    """x_nhwc: (N,H,W,Cin); w: PyTorch Conv2d weight (Cout,Cin,4,4).

    Space-to-depth (2x2) turns the stride-2 4x4 conv into a stride-1 2x2 conv
    over 4*Cin channels; im2col then needs only 4 shifted slabs (4x data,
    vs 16x for direct im2col)."""
    N, H, W, Cin = x_nhwc.shape
    Cout = w.shape[0]
    Ho, Wo = H // 2, W // 2

    xp = jnp.pad(x_nhwc, ((0, 0), (1, 1), (1, 1), (0, 0)))
    Hs, Ws = (H + 2) // 2, (W + 2) // 2
    # xs[n,i,j,(dy*2+dx)*Cin+c] = xp[n, 2i+dy, 2j+dx, c]
    xs = xp.reshape(N, Hs, 2, Ws, 2, Cin).transpose(0, 1, 3, 2, 4, 5)
    xs = xs.reshape(N, Hs, Ws, 4 * Cin)

    slabs = [xs[:, qy:qy + Ho, qx:qx + Wo, :] for qy in (0, 1) for qx in (0, 1)]
    P = jnp.concatenate(slabs, axis=-1).reshape(N * Ho * Wo, 16 * Cin)
    P = P.astype(jnp.bfloat16)

    # Wm[(qy*2+qx)*4Cin + (dy*2+dx)*Cin + c, co] = w[co, c, 2qy+dy, 2qx+dx]
    Cpad = _round_up(max(Cout, LANE), LANE)
    w_r = jnp.transpose(w, (2, 3, 1, 0))                      # (ky,kx,c,co)
    w_r = w_r.reshape(2, 2, 2, 2, Cin, Cout).transpose(0, 2, 1, 3, 4, 5)
    Wm = w_r.reshape(16 * Cin, Cout)
    Wm = jnp.pad(Wm, ((0, 0), (0, Cpad - Cout))).astype(jnp.bfloat16)
    return P, Wm, (N, Ho, Wo), Cout, Cpad


# ------------------------------- layers --------------------------------------

def conv_bias_leaky_block(x_nhwc, w, bias):
    """conv1: Conv2d(4,2,1,bias) + leaky(0.2) fused into the matmul epilogue."""
    P, Wm, (N, Ho, Wo), Cout, Cpad = conv_s2_im2col(x_nhwc, w)
    M = N * Ho * Wo
    b = jnp.pad(bias, (0, Cpad - Cout)).reshape(1, Cpad).astype(jnp.float32)
    act = matmul_bias_act(P, Wm, b, act="leaky", out_dtype=jnp.bfloat16)
    return act[:M, :Cout].reshape(N, Ho, Wo, Cout)


def conv_bn_leaky_block(x_nhwc, w, gamma, beta):
    """Conv2d(4,2,1,no-bias) -> BatchNorm2d (batch stats) -> leaky(0.2)."""
    P, Wm, (N, Ho, Wo), Cout, Cpad = conv_s2_im2col(x_nhwc, w)
    M = N * Ho * Wo
    out_p, csum, csq = matmul_with_stats(P, Wm)
    mean = csum / M
    var = jnp.maximum(csq / M - mean * mean, 0.0)   # clamp fp cancellation
    g = jnp.pad(gamma, (0, Cpad - Cout))            # padded lanes: gamma=0 -> 0
    b = jnp.pad(beta, (0, Cpad - Cout))
    scale = g * jax.lax.rsqrt(var + BN_EPS)
    shift = b - mean * scale
    act = scale_shift_act(out_p, scale, shift)      # bf16
    return act[:M, :Cout].reshape(N, Ho, Wo, Cout)


def final_conv_sigmoid(x_nhwc, w, bias):
    """conv5: Conv2d(4,1,0,bias) on a 4x4 map -> full reduction -> sigmoid."""
    N, H, W, Cin = x_nhwc.shape
    Cout = w.shape[0]
    Cpad = LANE
    P = x_nhwc.reshape(N, H * W * Cin).astype(jnp.bfloat16)
    Wm = jnp.transpose(w, (2, 3, 1, 0)).reshape(H * W * Cin, Cout)
    Wm = jnp.pad(Wm, ((0, 0), (0, Cpad - Cout))).astype(jnp.bfloat16)
    b = jnp.pad(bias, (0, Cpad - Cout)).reshape(1, Cpad).astype(jnp.float32)
    out = matmul_bias_act(P, Wm, b, act="sigmoid", out_dtype=jnp.float32)
    return out[:N, :Cout].reshape(N, 1, 1, Cout)


# ----------------------------- Discriminator ---------------------------------

def discriminator_forward(x_nchw, params):
    h = jnp.transpose(x_nchw, (0, 2, 3, 1)).astype(jnp.bfloat16)  # NCHW -> NHWC
    h = conv_bias_leaky_block(h, params["w1"], params["b1"])       # dropout == id
    h = conv_bn_leaky_block(h, params["w2"], params["g2"], params["be2"])
    h = conv_bn_leaky_block(h, params["w3"], params["g3"], params["be3"])
    h = conv_bn_leaky_block(h, params["w4"], params["g4"], params["be4"])
    out = final_conv_sigmoid(h, params["w5"], params["b5"])        # (N,1,1,1) NHWC
    return jnp.transpose(out, (0, 3, 1, 2))                        # -> NCHW


def init_params(key, nc, ndf):
    ks = jax.random.split(key, 13)

    def wconv(k, cout, cin):
        return 0.05 * jax.random.normal(k, (cout, cin, 4, 4), jnp.float32)

    return {
        "w1": wconv(ks[0], ndf, nc),
        "b1": 0.1 * jax.random.normal(ks[1], (ndf,), jnp.float32),
        "w2": wconv(ks[2], ndf * 2, ndf),
        "g2": 1.0 + 0.1 * jax.random.normal(ks[3], (ndf * 2,), jnp.float32),
        "be2": 0.1 * jax.random.normal(ks[4], (ndf * 2,), jnp.float32),
        "w3": wconv(ks[5], ndf * 4, ndf * 2),
        "g3": 1.0 + 0.1 * jax.random.normal(ks[6], (ndf * 4,), jnp.float32),
        "be3": 0.1 * jax.random.normal(ks[7], (ndf * 4,), jnp.float32),
        "w4": wconv(ks[8], ndf * 8, ndf * 4),
        "g4": 1.0 + 0.1 * jax.random.normal(ks[9], (ndf * 8,), jnp.float32),
        "be4": 0.1 * jax.random.normal(ks[10], (ndf * 8,), jnp.float32),
        "w5": wconv(ks[11], 1, ndf * 8),
        "b5": 0.1 * jax.random.normal(ks[12], (1,), jnp.float32),
    }


if __name__ == "__main__":
    nc, ndf, batch = 3, 8, 2
    key = jax.random.PRNGKey(0)
    kp, kx = jax.random.split(key)
    params = init_params(kp, nc, ndf)
    x = jax.random.normal(kx, (batch, nc, 64, 64), jnp.float32)

    y = jax.jit(discriminator_forward)(x, params)
    y = jax.block_until_ready(y)

    assert y.shape == (batch, 1, 1, 1), y.shape
    assert bool(jnp.all(jnp.isfinite(y)))
    assert bool(jnp.all((y >= 0.0) & (y <= 1.0)))  # sigmoid output range
    print("KERNEL_OK")
</pallas_src>

<mosaic_0001>
module attributes {stable_mosaic.version = 11 : i64} {
  func.func @_matmul_bias_act_kernel(%arg0: i32, %arg1: i32, %arg2: memref<512x48xbf16, #tpu.memory_space<vmem>>, %arg3: memref<48x128xbf16, #tpu.memory_space<vmem>>, %arg4: memref<1x128xf32, #tpu.memory_space<vmem>>, %arg5: memref<512x128xbf16, #tpu.memory_space<vmem>>, %arg6: memref<512x128xf32, #tpu.memory_space<vmem>>) attributes {dimension_semantics = [#tpu.dimension_semantics<parallel>, #tpu.dimension_semantics<arbitrary>], iteration_bounds = array<i64: 4, 1>, scalar_prefetch = 0 : i64, scratch_operands = 1 : i64, tpu.core_type = #tpu.core_type<tc>, window_params = [{transform_indices = @transform_0, window_bounds = array<i64: 512, 48>}, {transform_indices = @transform_1, window_bounds = array<i64: 48, 128>}, {pipeline_mode = #tpu.pipeline_mode<synchronous>, transform_indices = @transform_2, window_bounds = array<i64: 1, 128>}, {transform_indices = @transform_3, window_bounds = array<i64: 512, 128>}]} {
    %c0_i32 = arith.constant 0 : i32
    %0 = arith.cmpi eq, %arg1, %c0_i32 : i32
    %1 = arith.extui %0 : i1 to i32
    %c0_i32_0 = arith.constant 0 : i32
    %2 = arith.cmpi ne, %1, %c0_i32_0 : i32
    scf.if %2 {
      %cst_10 = arith.constant 0.000000e+00 : f32
      %12 = vector.broadcast %cst_10 : f32 to vector<512x128xf32>
      %c0_11 = arith.constant 0 : index
      %c0_12 = arith.constant 0 : index
      %13 = vector.load %arg6[%c0_11, %c0_12] : memref<512x128xf32, #tpu.memory_space<vmem>>, vector<512x128xf32>
      tpu.vector_store %arg6[%c0_11, %c0_12], %12 {strides = array<i32>} : memref<512x128xf32, #tpu.memory_space<vmem>>, vector<512x128xf32>,
    } else {
    }
    %c0 = arith.constant 0 : index
    %c0_1 = arith.constant 0 : index
    %3 = vector.load %arg6[%c0, %c0_1] : memref<512x128xf32, #tpu.memory_space<vmem>>, vector<512x128xf32>
    %c0_2 = arith.constant 0 : index
    %c0_3 = arith.constant 0 : index
    %4 = vector.load %arg2[%c0_2, %c0_3] : memref<512x48xbf16, #tpu.memory_space<vmem>>, vector<512x48xbf16>
    %c0_4 = arith.constant 0 : index
    %c0_5 = arith.constant 0 : index
    %5 = vector.load %arg3[%c0_4, %c0_5] : memref<48x128xbf16, #tpu.memory_space<vmem>>, vector<48x128xbf16>
    %cst = arith.constant dense<0.000000e+00> : vector<512x128xf32>
    %6 = tpu.matmul %4, %5, %cst {dimension_numbers = #tpu.dot_dimension_numbers<[1], [0], [0], [1], [0, 0, 1, 1], [], []>} : vector<512x48xbf16>, vector<48x128xbf16>, vector<512x128xf32> -> vector<512x128xf32>
    %7 = arith.addf %3, %6 : vector<512x128xf32>
    %c0_6 = arith.constant 0 : index
    %c0_7 = arith.constant 0 : index
    %8 = vector.load %arg6[%c0_6, %c0_7] : memref<512x128xf32, #tpu.memory_space<vmem>>, vector<512x128xf32>
    tpu.vector_store %arg6[%c0_6, %c0_7], %7 {strides = array<i32>} : memref<512x128xf32, #tpu.memory_space<vmem>>, vector<512x128xf32>,
    %c0_i32_8 = arith.constant 0 : i32
    %9 = arith.cmpi eq, %arg1, %c0_i32_8 : i32
    %10 = arith.extui %9 : i1 to i32
    %c0_i32_9 = arith.constant 0 : i32
    %11 = arith.cmpi ne, %10, %c0_i32_9 : i32
    scf.if %11 {
      %c0_10 = arith.constant 0 : index
      %c0_11 = arith.constant 0 : index
      %12 = vector.load %arg6[%c0_10, %c0_11] : memref<512x128xf32, #tpu.memory_space<vmem>>, vector<512x128xf32>
      %c0_12 = arith.constant 0 : index
      %c0_13 = arith.constant 0 : index
      %13 = vector.load %arg4[%c0_12, %c0_13] : memref<1x128xf32, #tpu.memory_space<vmem>>, vector<1x128xf32>
      %14 = vector.broadcast %13 : vector<1x128xf32> to vector<512x128xf32>
      %15 = arith.addf %12, %14 : vector<512x128xf32>
      %cst_14 = arith.constant 0.000000e+00 : f32
      %16 = vector.broadcast %cst_14 : f32 to vector<512x128xf32>
      %17 = arith.cmpf oge, %15, %16 : vector<512x128xf32>
      %cst_15 = arith.constant 2.000000e-01 : f32
      %18 = vector.broadcast %cst_15 : f32 to vector<512x128xf32>
      %19 = arith.mulf %18, %15 : vector<512x128xf32>
      %20 = arith.select %17, %15, %19 : vector<512x128xi1>, vector<512x128xf32>
      %21 = arith.truncf %20 : vector<512x128xf32> to vector<512x128xbf16>
      %c0_16 = arith.constant 0 : index
      %c0_17 = arith.constant 0 : index
      %22 = vector.load %arg5[%c0_16, %c0_17] : memref<512x128xbf16, #tpu.memory_space<vmem>>, vector<512x128xbf16>
      tpu.vector_store %arg5[%c0_16, %c0_17], %21 {strides = array<i32>} : memref<512x128xbf16, #tpu.memory_space<vmem>>, vector<512x128xbf16>,
    } else {
    }
    return
  }
  func.func @transform_0(%arg0: i32, %arg1: i32) -> (i32, i32) {
    %c0_i32 = arith.constant 0 : i32
    return %arg0, %arg1 : i32, i32
  }
  func.func @transform_1(%arg0: i32, %arg1: i32) -> (i32, i32) {
    %c0_i32 = arith.constant 0 : i32
    %c0_i32_0 = arith.constant 0 : i32
    return %arg1, %c0_i32 : i32, i32
  }
  func.func @transform_2(%arg0: i32, %arg1: i32) -> (i32, i32) {
    %c0_i32 = arith.constant 0 : i32
    %c0_i32_0 = arith.constant 0 : i32
    %c0_i32_1 = arith.constant 0 : i32
    return %c0_i32, %c0_i32_0 : i32, i32
  }
  func.func @transform_3(%arg0: i32, %arg1: i32) -> (i32, i32) {
    %c0_i32 = arith.constant 0 : i32
    %c0_i32_0 = arith.constant 0 : i32
    return %arg0, %c0_i32 : i32, i32
  }
}

module attributes {stable_mosaic.version = 11 : i64} {
  func.func @_matmul_stats_kernel(%arg0: i32, %arg1: i32, %arg2: memref<512x128xbf16, #tpu.memory_space<vmem>>, %arg3: memref<128x128xbf16, #tpu.memory_space<vmem>>, %arg4: memref<512x128xf32, #tpu.memory_space<vmem>>, %arg5: memref<8x128xf32, #tpu.memory_space<vmem>>, %arg6: memref<512x128xf32, #tpu.memory_space<vmem>>) attributes {dimension_semantics = [#tpu.dimension_semantics<parallel>, #tpu.dimension_semantics<arbitrary>], iteration_bounds = array<i64: 1, 1>, scalar_prefetch = 0 : i64, scratch_operands = 1 : i64, tpu.core_type = #tpu.core_type<tc>, window_params = [{transform_indices = @transform_0, window_bounds = array<i64: 512, 128>}, {transform_indices = @transform_1, window_bounds = array<i64: 128, 128>}, {transform_indices = @transform_2, window_bounds = array<i64: 512, 128>}, {transform_indices = @transform_3, window_bounds = array<i64: 8, 128>}]} {
    %c0_i32 = arith.constant 0 : i32
    %0 = arith.cmpi eq, %arg1, %c0_i32 : i32
    %1 = arith.extui %0 : i1 to i32
    %c0_i32_0 = arith.constant 0 : i32
    %2 = arith.cmpi ne, %1, %c0_i32_0 : i32
    scf.if %2 {
      %cst_10 = arith.constant 0.000000e+00 : f32
      %12 = vector.broadcast %cst_10 : f32 to vector<512x128xf32>
      %c0_11 = arith.constant 0 : index
      %c0_12 = arith.constant 0 : index
      %13 = vector.load %arg6[%c0_11, %c0_12] : memref<512x128xf32, #tpu.memory_space<vmem>>, vector<512x128xf32>
      tpu.vector_store %arg6[%c0_11, %c0_12], %12 {strides = array<i32>} : memref<512x128xf32, #tpu.memory_space<vmem>>, vector<512x128xf32>,
    } else {
    }
    %c0 = arith.constant 0 : index
    %c0_1 = arith.constant 0 : index
    %3 = vector.load %arg6[%c0, %c0_1] : memref<512x128xf32, #tpu.memory_space<vmem>>, vector<512x128xf32>
    %c0_2 = arith.constant 0 : index
    %c0_3 = arith.constant 0 : index
    %4 = vector.load %arg2[%c0_2, %c0_3] : memref<512x128xbf16, #tpu.memory_space<vmem>>, vector<512x128xbf16>
    %c0_4 = arith.constant 0 : index
    %c0_5 = arith.constant 0 : index
    %5 = vector.load %arg3[%c0_4, %c0_5] : memref<128x128xbf16, #tpu.memory_space<vmem>>, vector<128x128xbf16>
    %cst = arith.constant dense<0.000000e+00> : vector<512x128xf32>
    %6 = tpu.matmul %4, %5, %cst {dimension_numbers = #tpu.dot_dimension_numbers<[1], [0], [0], [1], [0, 0, 1, 1], [], []>} : vector<512x128xbf16>, vector<128x128xbf16>, vector<512x128xf32> -> vector<512x128xf32>
    %7 = arith.addf %3, %6 : vector<512x128xf32>
    %c0_6 = arith.constant 0 : index
    %c0_7 = arith.constant 0 : index
    %8 = vector.load %arg6[%c0_6, %c0_7] : memref<512x128xf32, #tpu.memory_space<vmem>>, vector<512x128xf32>
    tpu.vector_store %arg6[%c0_6, %c0_7], %7 {strides = array<i32>} : memref<512x128xf32, #tpu.memory_space<vmem>>, vector<512x128xf32>,
    %c0_i32_8 = arith.constant 0 : i32
    %9 = arith.cmpi eq, %arg1, %c0_i32_8 : i32
    %10 = arith.extui %9 : i1 to i32
    %c0_i32_9 = arith.constant 0 : i32
    %11 = arith.cmpi ne, %10, %c0_i32_9 : i32
    scf.if %11 {
      %c0_10 = arith.constant 0 : index
      %c0_11 = arith.constant 0 : index
      %12 = vector.load %arg6[%c0_10, %c0_11] : memref<512x128xf32, #tpu.memory_space<vmem>>, vector<512x128xf32>
      %c0_12 = arith.constant 0 : index
      %c0_13 = arith.constant 0 : index
      %13 = vector.load %arg4[%c0_12, %c0_13] : memref<512x128xf32, #tpu.memory_space<vmem>>, vector<512x128xf32>
      tpu.vector_store %arg4[%c0_12, %c0_13], %12 {strides = array<i32>} : memref<512x128xf32, #tpu.memory_space<vmem>>, vector<512x128xf32>,
      %cst_14 = arith.constant dense<0.000000e+00> : vector<128xf32>
      %14 = vector.multi_reduction <add>, %12, %cst_14 [0] : vector<512x128xf32> to vector<128xf32>
      %15 = vector.shape_cast %14 : vector<128xf32> to vector<1x128xf32>
      %16 = arith.mulf %12, %12 : vector<512x128xf32>
      %cst_15 = arith.constant dense<0.000000e+00> : vector<128xf32>
      %17 = vector.multi_reduction <add>, %16, %cst_15 [0] : vector<512x128xf32> to vector<128xf32>
      %18 = vector.shape_cast %17 : vector<128xf32> to vector<1x128xf32>
      %19 = tpu.iota {dimensions = array<i32: 0>} : vector<8x128xi32>
      %c0_i32_16 = arith.constant 0 : i32
      %20 = vector.broadcast %c0_i32_16 : i32 to vector<8x128xi32>
      %21 = arith.cmpi eq, %19, %20 : vector<8x128xi32>
      %c1_i32 = arith.constant 1 : i32
      %22 = vector.broadcast %c1_i32 : i32 to vector<8x128xi32>
      %23 = arith.cmpi eq, %19, %22 : vector<8x128xi32>
      %cst_17 = arith.constant 0.000000e+00 : f32
      %24 = vector.shape_cast %18 : vector<1x128xf32> to vector<1x128xf32>
      %25 = vector.broadcast %24 : vector<1x128xf32> to vector<8x128xf32>
      %26 = vector.broadcast %cst_17 : f32 to vector<8x128xf32>
      %27 = arith.select %23, %25, %26 : vector<8x128xi1>, vector<8x128xf32>
      %28 = vector.shape_cast %15 : vector<1x128xf32> to vector<1x128xf32>
      %29 = vector.broadcast %28 : vector<1x128xf32> to vector<8x128xf32>
      %30 = arith.select %21, %29, %27 : vector<8x128xi1>, vector<8x128xf32>
      %c0_18 = arith.constant 0 : index
      %c0_19 = arith.constant 0 : index
      %31 = vector.load %arg5[%c0_18, %c0_19] : memref<8x128xf32, #tpu.memory_space<vmem>>, vector<8x128xf32>
      tpu.vector_store %arg5[%c0_18, %c0_19], %30 {strides = array<i32>} : memref<8x128xf32, #tpu.memory_space<vmem>>, vector<8x128xf32>,
    } else {
    }
    return
  }
  func.func @transform_0(%arg0: i32, %arg1: i32) -> (i32, i32) {
    %c0_i32 = arith.constant 0 : i32
    return %arg0, %arg1 : i32, i32
  }
  func.func @transform_1(%arg0: i32, %arg1: i32) -> (i32, i32) {
    %c0_i32 = arith.constant 0 : i32
    %c0_i32_0 = arith.constant 0 : i32
    return %arg1, %c0_i32 : i32, i32
  }
  func.func @transform_2(%arg0: i32, %arg1: i32) -> (i32, i32) {
    %c0_i32 = arith.constant 0 : i32
    %c0_i32_0 = arith.constant 0 : i32
    return %arg0, %c0_i32 : i32, i32
  }
  func.func @transform_3(%arg0: i32, %arg1: i32) -> (i32, i32) {
    %c0_i32 = arith.constant 0 : i32
    %c0_i32_0 = arith.constant 0 : i32
    return %arg0, %c0_i32 : i32, i32
  }
}

module attributes {stable_mosaic.version = 11 : i64} {
  func.func @_scale_shift_act_kernel(%arg0: i32, %arg1: memref<512x128xf32, #tpu.memory_space<vmem>>, %arg2: memref<1x128xf32, #tpu.memory_space<vmem>>, %arg3: memref<1x128xf32, #tpu.memory_space<vmem>>, %arg4: memref<512x128xbf16, #tpu.memory_space<vmem>>) attributes {dimension_semantics = [#tpu.dimension_semantics<parallel>], iteration_bounds = array<i64: 1>, scalar_prefetch = 0 : i64, scratch_operands = 0 : i64, tpu.core_type = #tpu.core_type<tc>, window_params = [{transform_indices = @transform_0, window_bounds = array<i64: 512, 128>}, {pipeline_mode = #tpu.pipeline_mode<synchronous>, transform_indices = @transform_1, window_bounds = array<i64: 1, 128>}, {pipeline_mode = #tpu.pipeline_mode<synchronous>, transform_indices = @transform_2, window_bounds = array<i64: 1, 128>}, {transform_indices = @transform_3, window_bounds = array<i64: 512, 128>}]} {
    %c0 = arith.constant 0 : index
    %c0_0 = arith.constant 0 : index
    %0 = vector.load %arg1[%c0, %c0_0] : memref<512x128xf32, #tpu.memory_space<vmem>>, vector<512x128xf32>
    %c0_1 = arith.constant 0 : index
    %c0_2 = arith.constant 0 : index
    %1 = vector.load %arg2[%c0_1, %c0_2] : memref<1x128xf32, #tpu.memory_space<vmem>>, vector<1x128xf32>
    %2 = vector.broadcast %1 : vector<1x128xf32> to vector<512x128xf32>
    %3 = arith.mulf %0, %2 : vector<512x128xf32>
    %c0_3 = arith.constant 0 : index
    %c0_4 = arith.constant 0 : index
    %4 = vector.load %arg3[%c0_3, %c0_4] : memref<1x128xf32, #tpu.memory_space<vmem>>, vector<1x128xf32>
    %5 = vector.broadcast %4 : vector<1x128xf32> to vector<512x128xf32>
    %6 = arith.addf %3, %5 : vector<512x128xf32>
    %cst = arith.constant 0.000000e+00 : f32
    %7 = vector.broadcast %cst : f32 to vector<512x128xf32>
    %8 = arith.cmpf oge, %6, %7 : vector<512x128xf32>
    %cst_5 = arith.constant 2.000000e-01 : f32
    %9 = vector.broadcast %cst_5 : f32 to vector<512x128xf32>
    %10 = arith.mulf %9, %6 : vector<512x128xf32>
    %11 = arith.select %8, %6, %10 : vector<512x128xi1>, vector<512x128xf32>
    %12 = arith.truncf %11 : vector<512x128xf32> to vector<512x128xbf16>
    %c0_6 = arith.constant 0 : index
    %c0_7 = arith.constant 0 : index
    %13 = vector.load %arg4[%c0_6, %c0_7] : memref<512x128xbf16, #tpu.memory_space<vmem>>, vector<512x128xbf16>
    tpu.vector_store %arg4[%c0_6, %c0_7], %12 {strides = array<i32>} : memref<512x128xbf16, #tpu.memory_space<vmem>>, vector<512x128xbf16>,
    return
  }
  func.func @transform_0(%arg0: i32) -> (i32, i32) {
    %c0_i32 = arith.constant 0 : i32
    %c0_i32_0 = arith.constant 0 : i32
    return %arg0, %c0_i32 : i32, i32
  }
  func.func @transform_1(%arg0: i32) -> (i32, i32) {
    %c0_i32 = arith.constant 0 : i32
    %c0_i32_0 = arith.constant 0 : i32
    %c0_i32_1 = arith.constant 0 : i32
    return %c0_i32, %c0_i32_0 : i32, i32
  }
  func.func @transform_2(%arg0: i32) -> (i32, i32) {
    %c0_i32 = arith.constant 0 : i32
    %c0_i32_0 = arith.constant 0 : i32
    %c0_i32_1 = arith.constant 0 : i32
    return %c0_i32, %c0_i32_0 : i32, i32
  }
  func.func @transform_3(%arg0: i32) -> (i32, i32) {
    %c0_i32 = arith.constant 0 : i32
    %c0_i32_0 = arith.constant 0 : i32
    return %arg0, %c0_i32 : i32, i32
  }
}

module attributes {stable_mosaic.version = 11 : i64} {
  func.func @_matmul_stats_kernel(%arg0: i32, %arg1: i32, %arg2: memref<128x256xbf16, #tpu.memory_space<vmem>>, %arg3: memref<256x128xbf16, #tpu.memory_space<vmem>>, %arg4: memref<128x128xf32, #tpu.memory_space<vmem>>, %arg5: memref<8x128xf32, #tpu.memory_space<vmem>>, %arg6: memref<128x128xf32, #tpu.memory_space<vmem>>) attributes {dimension_semantics = [#tpu.dimension_semantics<parallel>, #tpu.dimension_semantics<arbitrary>], iteration_bounds = array<i64: 1, 1>, scalar_prefetch = 0 : i64, scratch_operands = 1 : i64, tpu.core_type = #tpu.core_type<tc>, window_params = [{transform_indices = @transform_0, window_bounds = array<i64: 128, 256>}, {transform_indices = @transform_1, window_bounds = array<i64: 256, 128>}, {transform_indices = @transform_2, window_bounds = array<i64: 128, 128>}, {transform_indices = @transform_3, window_bounds = array<i64: 8, 128>}]} {
    %c0_i32 = arith.constant 0 : i32
    %0 = arith.cmpi eq, %arg1, %c0_i32 : i32
    %1 = arith.extui %0 : i1 to i32
    %c0_i32_0 = arith.constant 0 : i32
    %2 = arith.cmpi ne, %1, %c0_i32_0 : i32
    scf.if %2 {
      %cst_10 = arith.constant 0.000000e+00 : f32
      %12 = vector.broadcast %cst_10 : f32 to vector<128x128xf32>
      %c0_11 = arith.constant 0 : index
      %c0_12 = arith.constant 0 : index
      %13 = vector.load %arg6[%c0_11, %c0_12] : memref<128x128xf32, #tpu.memory_space<vmem>>, vector<128x128xf32>
      tpu.vector_store %arg6[%c0_11, %c0_12], %12 {strides = array<i32>} : memref<128x128xf32, #tpu.memory_space<vmem>>, vector<128x128xf32>,
    } else {
    }
    %c0 = arith.constant 0 : index
    %c0_1 = arith.constant 0 : index
    %3 = vector.load %arg6[%c0, %c0_1] : memref<128x128xf32, #tpu.memory_space<vmem>>, vector<128x128xf32>
    %c0_2 = arith.constant 0 : index
    %c0_3 = arith.constant 0 : index
    %4 = vector.load %arg2[%c0_2, %c0_3] : memref<128x256xbf16, #tpu.memory_space<vmem>>, vector<128x256xbf16>
    %c0_4 = arith.constant 0 : index
    %c0_5 = arith.constant 0 : index
    %5 = vector.load %arg3[%c0_4, %c0_5] : memref<256x128xbf16, #tpu.memory_space<vmem>>, vector<256x128xbf16>
    %cst = arith.constant dense<0.000000e+00> : vector<128x128xf32>
    %6 = tpu.matmul %4, %5, %cst {dimension_numbers = #tpu.dot_dimension_numbers<[1], [0], [0], [1], [0, 0, 1, 1], [], []>} : vector<128x256xbf16>, vector<256x128xbf16>, vector<128x128xf32> -> vector<128x128xf32>
    %7 = arith.addf %3, %6 : vector<128x128xf32>
    %c0_6 = arith.constant 0 : index
    %c0_7 = arith.constant 0 : index
    %8 = vector.load %arg6[%c0_6, %c0_7] : memref<128x128xf32, #tpu.memory_space<vmem>>, vector<128x128xf32>
    tpu.vector_store %arg6[%c0_6, %c0_7], %7 {strides = array<i32>} : memref<128x128xf32, #tpu.memory_space<vmem>>, vector<128x128xf32>,
    %c0_i32_8 = arith.constant 0 : i32
    %9 = arith.cmpi eq, %arg1, %c0_i32_8 : i32
    %10 = arith.extui %9 : i1 to i32
    %c0_i32_9 = arith.constant 0 : i32
    %11 = arith.cmpi ne, %10, %c0_i32_9 : i32
    scf.if %11 {
      %c0_10 = arith.constant 0 : index
      %c0_11 = arith.constant 0 : index
      %12 = vector.load %arg6[%c0_10, %c0_11] : memref<128x128xf32, #tpu.memory_space<vmem>>, vector<128x128xf32>
      %c0_12 = arith.constant 0 : index
      %c0_13 = arith.constant 0 : index
      %13 = vector.load %arg4[%c0_12, %c0_13] : memref<128x128xf32, #tpu.memory_space<vmem>>, vector<128x128xf32>
      tpu.vector_store %arg4[%c0_12, %c0_13], %12 {strides = array<i32>} : memref<128x128xf32, #tpu.memory_space<vmem>>, vector<128x128xf32>,
      %cst_14 = arith.constant dense<0.000000e+00> : vector<128xf32>
      %14 = vector.multi_reduction <add>, %12, %cst_14 [0] : vector<128x128xf32> to vector<128xf32>
      %15 = vector.shape_cast %14 : vector<128xf32> to vector<1x128xf32>
      %16 = arith.mulf %12, %12 : vector<128x128xf32>
      %cst_15 = arith.constant dense<0.000000e+00> : vector<128xf32>
      %17 = vector.multi_reduction <add>, %16, %cst_15 [0] : vector<128x128xf32> to vector<128xf32>
      %18 = vector.shape_cast %17 : vector<128xf32> to vector<1x128xf32>
      %19 = tpu.iota {dimensions = array<i32: 0>} : vector<8x128xi32>
      %c0_i32_16 = arith.constant 0 : i32
      %20 = vector.broadcast %c0_i32_16 : i32 to vector<8x128xi32>
      %21 = arith.cmpi eq, %19, %20 : vector<8x128xi32>
      %c1_i32 = arith.constant 1 : i32
      %22 = vector.broadcast %c1_i32 : i32 to vector<8x128xi32>
      %23 = arith.cmpi eq, %19, %22 : vector<8x128xi32>
      %cst_17 = arith.constant 0.000000e+00 : f32
      %24 = vector.shape_cast %18 : vector<1x128xf32> to vector<1x128xf32>
      %25 = vector.broadcast %24 : vector<1x128xf32> to vector<8x128xf32>
      %26 = vector.broadcast %cst_17 : f32 to vector<8x128xf32>
      %27 = arith.select %23, %25, %26 : vector<8x128xi1>, vector<8x128xf32>
      %28 = vector.shape_cast %15 : vector<1x128xf32> to vector<1x128xf32>
      %29 = vector.broadcast %28 : vector<1x128xf32> to vector<8x128xf32>
      %30 = arith.select %21, %29, %27 : vector<8x128xi1>, vector<8x128xf32>
      %c0_18 = arith.constant 0 : index
      %c0_19 = arith.constant 0 : index
      %31 = vector.load %arg5[%c0_18, %c0_19] : memref<8x128xf32, #tpu.memory_space<vmem>>, vector<8x128xf32>
      tpu.vector_store %arg5[%c0_18, %c0_19], %30 {strides = array<i32>} : memref<8x128xf32, #tpu.memory_space<vmem>>, vector<8x128xf32>,
    } else {
    }
    return
  }
  func.func @transform_0(%arg0: i32, %arg1: i32) -> (i32, i32) {
    %c0_i32 = arith.constant 0 : i32
    return %arg0, %arg1 : i32, i32
  }
  func.func @transform_1(%arg0: i32, %arg1: i32) -> (i32, i32) {
    %c0_i32 = arith.constant 0 : i32
    %c0_i32_0 = arith.constant 0 : i32
    return %arg1, %c0_i32 : i32, i32
  }
  func.func @transform_2(%arg0: i32, %arg1: i32) -> (i32, i32) {
    %c0_i32 = arith.constant 0 : i32
    %c0_i32_0 = arith.constant 0 : i32
    return %arg0, %c0_i32 : i32, i32
  }
  func.func @transform_3(%arg0: i32, %arg1: i32) -> (i32, i32) {
    %c0_i32 = arith.constant 0 : i32
    %c0_i32_0 = arith.constant 0 : i32
    return %arg0, %c0_i32 : i32, i32
  }
}

module attributes {stable_mosaic.version = 11 : i64} {
  func.func @_scale_shift_act_kernel(%arg0: i32, %arg1: memref<128x128xf32, #tpu.memory_space<vmem>>, %arg2: memref<1x128xf32, #tpu.memory_space<vmem>>, %arg3: memref<1x128xf32, #tpu.memory_space<vmem>>, %arg4: memref<128x128xbf16, #tpu.memory_space<vmem>>) attributes {dimension_semantics = [#tpu.dimension_semantics<parallel>], iteration_bounds = array<i64: 1>, scalar_prefetch = 0 : i64, scratch_operands = 0 : i64, tpu.core_type = #tpu.core_type<tc>, window_params = [{transform_indices = @transform_0, window_bounds = array<i64: 128, 128>}, {pipeline_mode = #tpu.pipeline_mode<synchronous>, transform_indices = @transform_1, window_bounds = array<i64: 1, 128>}, {pipeline_mode = #tpu.pipeline_mode<synchronous>, transform_indices = @transform_2, window_bounds = array<i64: 1, 128>}, {transform_indices = @transform_3, window_bounds = array<i64: 128, 128>}]} {
    %c0 = arith.constant 0 : index
    %c0_0 = arith.constant 0 : index
    %0 = vector.load %arg1[%c0, %c0_0] : memref<128x128xf32, #tpu.memory_space<vmem>>, vector<128x128xf32>
    %c0_1 = arith.constant 0 : index
    %c0_2 = arith.constant 0 : index
    %1 = vector.load %arg2[%c0_1, %c0_2] : memref<1x128xf32, #tpu.memory_space<vmem>>, vector<1x128xf32>
    %2 = vector.broadcast %1 : vector<1x128xf32> to vector<128x128xf32>
    %3 = arith.mulf %0, %2 : vector<128x128xf32>
    %c0_3 = arith.constant 0 : index
    %c0_4 = arith.constant 0 : index
    %4 = vector.load %arg3[%c0_3, %c0_4] : memref<1x128xf32, #tpu.memory_space<vmem>>, vector<1x128xf32>
    %5 = vector.broadcast %4 : vector<1x128xf32> to vector<128x128xf32>
    %6 = arith.addf %3, %5 : vector<128x128xf32>
    %cst = arith.constant 0.000000e+00 : f32
    %7 = vector.broadcast %cst : f32 to vector<128x128xf32>
    %8 = arith.cmpf oge, %6, %7 : vector<128x128xf32>
    %cst_5 = arith.constant 2.000000e-01 : f32
    %9 = vector.broadcast %cst_5 : f32 to vector<128x128xf32>
    %10 = arith.mulf %9, %6 : vector<128x128xf32>
    %11 = arith.select %8, %6, %10 : vector<128x128xi1>, vector<128x128xf32>
    %12 = arith.truncf %11 : vector<128x128xf32> to vector<128x128xbf16>
    %c0_6 = arith.constant 0 : index
    %c0_7 = arith.constant 0 : index
    %13 = vector.load %arg4[%c0_6, %c0_7] : memref<128x128xbf16, #tpu.memory_space<vmem>>, vector<128x128xbf16>
    tpu.vector_store %arg4[%c0_6, %c0_7], %12 {strides = array<i32>} : memref<128x128xbf16, #tpu.memory_space<vmem>>, vector<128x128xbf16>,
    return
  }
  func.func @transform_0(%arg0: i32) -> (i32, i32) {
    %c0_i32 = arith.constant 0 : i32
    %c0_i32_0 = arith.constant 0 : i32
    return %arg0, %c0_i32 : i32, i32
  }
  func.func @transform_1(%arg0: i32) -> (i32, i32) {
    %c0_i32 = arith.constant 0 : i32
    %c0_i32_0 = arith.constant 0 : i32
    %c0_i32_1 = arith.constant 0 : i32
    return %c0_i32, %c0_i32_0 : i32, i32
  }
  func.func @transform_2(%arg0: i32) -> (i32, i32) {
    %c0_i32 = arith.constant 0 : i32
    %c0_i32_0 = arith.constant 0 : i32
    %c0_i32_1 = arith.constant 0 : i32
    return %c0_i32, %c0_i32_0 : i32, i32
  }
  func.func @transform_3(%arg0: i32) -> (i32, i32) {
    %c0_i32 = arith.constant 0 : i32
    %c0_i32_0 = arith.constant 0 : i32
    return %arg0, %c0_i32 : i32, i32
  }
}

module attributes {stable_mosaic.version = 11 : i64} {
  func.func @_matmul_stats_kernel(%arg0: i32, %arg1: i32, %arg2: memref<32x512xbf16, #tpu.memory_space<vmem>>, %arg3: memref<512x128xbf16, #tpu.memory_space<vmem>>, %arg4: memref<32x128xf32, #tpu.memory_space<vmem>>, %arg5: memref<8x128xf32, #tpu.memory_space<vmem>>, %arg6: memref<32x128xf32, #tpu.memory_space<vmem>>) attributes {dimension_semantics = [#tpu.dimension_semantics<parallel>, #tpu.dimension_semantics<arbitrary>], iteration_bounds = array<i64: 1, 1>, scalar_prefetch = 0 : i64, scratch_operands = 1 : i64, tpu.core_type = #tpu.core_type<tc>, window_params = [{transform_indices = @transform_0, window_bounds = array<i64: 32, 512>}, {transform_indices = @transform_1, window_bounds = array<i64: 512, 128>}, {transform_indices = @transform_2, window_bounds = array<i64: 32, 128>}, {transform_indices = @transform_3, window_bounds = array<i64: 8, 128>}]} {
    %c0_i32 = arith.constant 0 : i32
    %0 = arith.cmpi eq, %arg1, %c0_i32 : i32
    %1 = arith.extui %0 : i1 to i32
    %c0_i32_0 = arith.constant 0 : i32
    %2 = arith.cmpi ne, %1, %c0_i32_0 : i32
    scf.if %2 {
      %cst_10 = arith.constant 0.000000e+00 : f32
      %12 = vector.broadcast %cst_10 : f32 to vector<32x128xf32>
      %c0_11 = arith.constant 0 : index
      %c0_12 = arith.constant 0 : index
      %13 = vector.load %arg6[%c0_11, %c0_12] : memref<32x128xf32, #tpu.memory_space<vmem>>, vector<32x128xf32>
      tpu.vector_store %arg6[%c0_11, %c0_12], %12 {strides = array<i32>} : memref<32x128xf32, #tpu.memory_space<vmem>>, vector<32x128xf32>,
    } else {
    }
    %c0 = arith.constant 0 : index
    %c0_1 = arith.constant 0 : index
    %3 = vector.load %arg6[%c0, %c0_1] : memref<32x128xf32, #tpu.memory_space<vmem>>, vector<32x128xf32>
    %c0_2 = arith.constant 0 : index
    %c0_3 = arith.constant 0 : index
    %4 = vector.load %arg2[%c0_2, %c0_3] : memref<32x512xbf16, #tpu.memory_space<vmem>>, vector<32x512xbf16>
    %c0_4 = arith.constant 0 : index
    %c0_5 = arith.constant 0 : index
    %5 = vector.load %arg3[%c0_4, %c0_5] : memref<512x128xbf16, #tpu.memory_space<vmem>>, vector<512x128xbf16>
    %cst = arith.constant dense<0.000000e+00> : vector<32x128xf32>
    %6 = tpu.matmul %4, %5, %cst {dimension_numbers = #tpu.dot_dimension_numbers<[1], [0], [0], [1], [0, 0, 1, 1], [], []>} : vector<32x512xbf16>, vector<512x128xbf16>, vector<32x128xf32> -> vector<32x128xf32>
    %7 = arith.addf %3, %6 : vector<32x128xf32>
    %c0_6 = arith.constant 0 : index
    %c0_7 = arith.constant 0 : index
    %8 = vector.load %arg6[%c0_6, %c0_7] : memref<32x128xf32, #tpu.memory_space<vmem>>, vector<32x128xf32>
    tpu.vector_store %arg6[%c0_6, %c0_7], %7 {strides = array<i32>} : memref<32x128xf32, #tpu.memory_space<vmem>>, vector<32x128xf32>,
    %c0_i32_8 = arith.constant 0 : i32
    %9 = arith.cmpi eq, %arg1, %c0_i32_8 : i32
    %10 = arith.extui %9 : i1 to i32
    %c0_i32_9 = arith.constant 0 : i32
    %11 = arith.cmpi ne, %10, %c0_i32_9 : i32
    scf.if %11 {
      %c0_10 = arith.constant 0 : index
      %c0_11 = arith.constant 0 : index
      %12 = vector.load %arg6[%c0_10, %c0_11] : memref<32x128xf32, #tpu.memory_space<vmem>>, vector<32x128xf32>
      %c0_12 = arith.constant 0 : index
      %c0_13 = arith.constant 0 : index
      %13 = vector.load %arg4[%c0_12, %c0_13] : memref<32x128xf32, #tpu.memory_space<vmem>>, vector<32x128xf32>
      tpu.vector_store %arg4[%c0_12, %c0_13], %12 {strides = array<i32>} : memref<32x128xf32, #tpu.memory_space<vmem>>, vector<32x128xf32>,
      %cst_14 = arith.constant dense<0.000000e+00> : vector<128xf32>
      %14 = vector.multi_reduction <add>, %12, %cst_14 [0] : vector<32x128xf32> to vector<128xf32>
      %15 = vector.shape_cast %14 : vector<128xf32> to vector<1x128xf32>
      %16 = arith.mulf %12, %12 : vector<32x128xf32>
      %cst_15 = arith.constant dense<0.000000e+00> : vector<128xf32>
      %17 = vector.multi_reduction <add>, %16, %cst_15 [0] : vector<32x128xf32> to vector<128xf32>
      %18 = vector.shape_cast %17 : vector<128xf32> to vector<1x128xf32>
      %19 = tpu.iota {dimensions = array<i32: 0>} : vector<8x128xi32>
      %c0_i32_16 = arith.constant 0 : i32
      %20 = vector.broadcast %c0_i32_16 : i32 to vector<8x128xi32>
      %21 = arith.cmpi eq, %19, %20 : vector<8x128xi32>
      %c1_i32 = arith.constant 1 : i32
      %22 = vector.broadcast %c1_i32 : i32 to vector<8x128xi32>
      %23 = arith.cmpi eq, %19, %22 : vector<8x128xi32>
      %cst_17 = arith.constant 0.000000e+00 : f32
      %24 = vector.shape_cast %18 : vector<1x128xf32> to vector<1x128xf32>
      %25 = vector.broadcast %24 : vector<1x128xf32> to vector<8x128xf32>
      %26 = vector.broadcast %cst_17 : f32 to vector<8x128xf32>
      %27 = arith.select %23, %25, %26 : vector<8x128xi1>, vector<8x128xf32>
      %28 = vector.shape_cast %15 : vector<1x128xf32> to vector<1x128xf32>
      %29 = vector.broadcast %28 : vector<1x128xf32> to vector<8x128xf32>
      %30 = arith.select %21, %29, %27 : vector<8x128xi1>, vector<8x128xf32>
      %c0_18 = arith.constant 0 : index
      %c0_19 = arith.constant 0 : index
      %31 = vector.load %arg5[%c0_18, %c0_19] : memref<8x128xf32, #tpu.memory_space<vmem>>, vector<8x128xf32>
      tpu.vector_store %arg5[%c0_18, %c0_19], %30 {strides = array<i32>} : memref<8x128xf32, #tpu.memory_space<vmem>>, vector<8x128xf32>,
    } else {
    }
    return
  }
  func.func @transform_0(%arg0: i32, %arg1: i32) -> (i32, i32) {
    %c0_i32 = arith.constant 0 : i32
    return %arg0, %arg1 : i32, i32
  }
  func.func @transform_1(%arg0: i32, %arg1: i32) -> (i32, i32) {
    %c0_i32 = arith.constant 0 : i32
    %c0_i32_0 = arith.constant 0 : i32
    return %arg1, %c0_i32 : i32, i32
  }
  func.func @transform_2(%arg0: i32, %arg1: i32) -> (i32, i32) {
    %c0_i32 = arith.constant 0 : i32
    %c0_i32_0 = arith.constant 0 : i32
    return %arg0, %c0_i32 : i32, i32
  }
  func.func @transform_3(%arg0: i32, %arg1: i32) -> (i32, i32) {
    %c0_i32 = arith.constant 0 : i32
    %c0_i32_0 = arith.constant 0 : i32
    return %arg0, %c0_i32 : i32, i32
  }
}

module attributes {stable_mosaic.version = 11 : i64} {
  func.func @_scale_shift_act_kernel(%arg0: i32, %arg1: memref<32x128xf32, #tpu.memory_space<vmem>>, %arg2: memref<1x128xf32, #tpu.memory_space<vmem>>, %arg3: memref<1x128xf32, #tpu.memory_space<vmem>>, %arg4: memref<32x128xbf16, #tpu.memory_space<vmem>>) attributes {dimension_semantics = [#tpu.dimension_semantics<parallel>], iteration_bounds = array<i64: 1>, scalar_prefetch = 0 : i64, scratch_operands = 0 : i64, tpu.core_type = #tpu.core_type<tc>, window_params = [{transform_indices = @transform_0, window_bounds = array<i64: 32, 128>}, {pipeline_mode = #tpu.pipeline_mode<synchronous>, transform_indices = @transform_1, window_bounds = array<i64: 1, 128>}, {pipeline_mode = #tpu.pipeline_mode<synchronous>, transform_indices = @transform_2, window_bounds = array<i64: 1, 128>}, {transform_indices = @transform_3, window_bounds = array<i64: 32, 128>}]} {
    %c0 = arith.constant 0 : index
    %c0_0 = arith.constant 0 : index
    %0 = vector.load %arg1[%c0, %c0_0] : memref<32x128xf32, #tpu.memory_space<vmem>>, vector<32x128xf32>
    %c0_1 = arith.constant 0 : index
    %c0_2 = arith.constant 0 : index
    %1 = vector.load %arg2[%c0_1, %c0_2] : memref<1x128xf32, #tpu.memory_space<vmem>>, vector<1x128xf32>
    %2 = vector.broadcast %1 : vector<1x128xf32> to vector<32x128xf32>
    %3 = arith.mulf %0, %2 : vector<32x128xf32>
    %c0_3 = arith.constant 0 : index
    %c0_4 = arith.constant 0 : index
    %4 = vector.load %arg3[%c0_3, %c0_4] : memref<1x128xf32, #tpu.memory_space<vmem>>, vector<1x128xf32>
    %5 = vector.broadcast %4 : vector<1x128xf32> to vector<32x128xf32>
    %6 = arith.addf %3, %5 : vector<32x128xf32>
    %cst = arith.constant 0.000000e+00 : f32
    %7 = vector.broadcast %cst : f32 to vector<32x128xf32>
    %8 = arith.cmpf oge, %6, %7 : vector<32x128xf32>
    %cst_5 = arith.constant 2.000000e-01 : f32
    %9 = vector.broadcast %cst_5 : f32 to vector<32x128xf32>
    %10 = arith.mulf %9, %6 : vector<32x128xf32>
    %11 = arith.select %8, %6, %10 : vector<32x128xi1>, vector<32x128xf32>
    %12 = arith.truncf %11 : vector<32x128xf32> to vector<32x128xbf16>
    %c0_6 = arith.constant 0 : index
    %c0_7 = arith.constant 0 : index
    %13 = vector.load %arg4[%c0_6, %c0_7] : memref<32x128xbf16, #tpu.memory_space<vmem>>, vector<32x128xbf16>
    tpu.vector_store %arg4[%c0_6, %c0_7], %12 {strides = array<i32>} : memref<32x128xbf16, #tpu.memory_space<vmem>>, vector<32x128xbf16>,
    return
  }
  func.func @transform_0(%arg0: i32) -> (i32, i32) {
    %c0_i32 = arith.constant 0 : i32
    %c0_i32_0 = arith.constant 0 : i32
    return %arg0, %c0_i32 : i32, i32
  }
  func.func @transform_1(%arg0: i32) -> (i32, i32) {
    %c0_i32 = arith.constant 0 : i32
    %c0_i32_0 = arith.constant 0 : i32
    %c0_i32_1 = arith.constant 0 : i32
    return %c0_i32, %c0_i32_0 : i32, i32
  }
  func.func @transform_2(%arg0: i32) -> (i32, i32) {
    %c0_i32 = arith.constant 0 : i32
    %c0_i32_0 = arith.constant 0 : i32
    %c0_i32_1 = arith.constant 0 : i32
    return %c0_i32, %c0_i32_0 : i32, i32
  }
  func.func @transform_3(%arg0: i32) -> (i32, i32) {
    %c0_i32 = arith.constant 0 : i32
    %c0_i32_0 = arith.constant 0 : i32
    return %arg0, %c0_i32 : i32, i32
  }
}

module attributes {stable_mosaic.version = 11 : i64} {
  func.func @_matmul_bias_act_kernel(%arg0: i32, %arg1: i32, %arg2: memref<16x1024xbf16, #tpu.memory_space<vmem>>, %arg3: memref<1024x128xbf16, #tpu.memory_space<vmem>>, %arg4: memref<1x128xf32, #tpu.memory_space<vmem>>, %arg5: memref<16x128xf32, #tpu.memory_space<vmem>>, %arg6: memref<16x128xf32, #tpu.memory_space<vmem>>) attributes {dimension_semantics = [#tpu.dimension_semantics<parallel>, #tpu.dimension_semantics<arbitrary>], iteration_bounds = array<i64: 1, 1>, scalar_prefetch = 0 : i64, scratch_operands = 1 : i64, tpu.core_type = #tpu.core_type<tc>, window_params = [{transform_indices = @transform_0, window_bounds = array<i64: 16, 1024>}, {transform_indices = @transform_1, window_bounds = array<i64: 1024, 128>}, {pipeline_mode = #tpu.pipeline_mode<synchronous>, transform_indices = @transform_2, window_bounds = array<i64: 1, 128>}, {transform_indices = @transform_3, window_bounds = array<i64: 16, 128>}]} {
    %c0_i32 = arith.constant 0 : i32
    %0 = arith.cmpi eq, %arg1, %c0_i32 : i32
    %1 = arith.extui %0 : i1 to i32
    %c0_i32_0 = arith.constant 0 : i32
    %2 = arith.cmpi ne, %1, %c0_i32_0 : i32
    scf.if %2 {
      %cst_10 = arith.constant 0.000000e+00 : f32
      %12 = vector.broadcast %cst_10 : f32 to vector<16x128xf32>
      %c0_11 = arith.constant 0 : index
      %c0_12 = arith.constant 0 : index
      %13 = vector.load %arg6[%c0_11, %c0_12] : memref<16x128xf32, #tpu.memory_space<vmem>>, vector<16x128xf32>
      tpu.vector_store %arg6[%c0_11, %c0_12], %12 {strides = array<i32>} : memref<16x128xf32, #tpu.memory_space<vmem>>, vector<16x128xf32>,
    } else {
    }
    %c0 = arith.constant 0 : index
    %c0_1 = arith.constant 0 : index
    %3 = vector.load %arg6[%c0, %c0_1] : memref<16x128xf32, #tpu.memory_space<vmem>>, vector<16x128xf32>
    %c0_2 = arith.constant 0 : index
    %c0_3 = arith.constant 0 : index
    %4 = vector.load %arg2[%c0_2, %c0_3] : memref<16x1024xbf16, #tpu.memory_space<vmem>>, vector<16x1024xbf16>
    %c0_4 = arith.constant 0 : index
    %c0_5 = arith.constant 0 : index
    %5 = vector.load %arg3[%c0_4, %c0_5] : memref<1024x128xbf16, #tpu.memory_space<vmem>>, vector<1024x128xbf16>
    %cst = arith.constant dense<0.000000e+00> : vector<16x128xf32>
    %6 = tpu.matmul %4, %5, %cst {dimension_numbers = #tpu.dot_dimension_numbers<[1], [0], [0], [1], [0, 0, 1, 1], [], []>} : vector<16x1024xbf16>, vector<1024x128xbf16>, vector<16x128xf32> -> vector<16x128xf32>
    %7 = arith.addf %3, %6 : vector<16x128xf32>
    %c0_6 = arith.constant 0 : index
    %c0_7 = arith.constant 0 : index
    %8 = vector.load %arg6[%c0_6, %c0_7] : memref<16x128xf32, #tpu.memory_space<vmem>>, vector<16x128xf32>
    tpu.vector_store %arg6[%c0_6, %c0_7], %7 {strides = array<i32>} : memref<16x128xf32, #tpu.memory_space<vmem>>, vector<16x128xf32>,
    %c0_i32_8 = arith.constant 0 : i32
    %9 = arith.cmpi eq, %arg1, %c0_i32_8 : i32
    %10 = arith.extui %9 : i1 to i32
    %c0_i32_9 = arith.constant 0 : i32
    %11 = arith.cmpi ne, %10, %c0_i32_9 : i32
    scf.if %11 {
      %c0_10 = arith.constant 0 : index
      %c0_11 = arith.constant 0 : index
      %12 = vector.load %arg6[%c0_10, %c0_11] : memref<16x128xf32, #tpu.memory_space<vmem>>, vector<16x128xf32>
      %c0_12 = arith.constant 0 : index
      %c0_13 = arith.constant 0 : index
      %13 = vector.load %arg4[%c0_12, %c0_13] : memref<1x128xf32, #tpu.memory_space<vmem>>, vector<1x128xf32>
      %14 = vector.broadcast %13 : vector<1x128xf32> to vector<16x128xf32>
      %15 = arith.addf %12, %14 : vector<16x128xf32>
      %cst_14 = arith.constant 0.000000e+00 : f32
      %16 = vector.broadcast %cst_14 : f32 to vector<16x128xf32>
      %17 = arith.subf %16, %15 : vector<16x128xf32>
      %18 = math.exp %17 : vector<16x128xf32>
      %cst_15 = arith.constant 1.000000e+00 : f32
      %19 = vector.broadcast %cst_15 : f32 to vector<16x128xf32>
      %20 = arith.addf %19, %18 : vector<16x128xf32>
      %cst_16 = arith.constant 1.000000e+00 : f32
      %21 = vector.broadcast %cst_16 : f32 to vector<16x128xf32>
      %22 = arith.divf %21, %20 : vector<16x128xf32>
      %c0_17 = arith.constant 0 : index
      %c0_18 = arith.constant 0 : index
      %23 = vector.load %arg5[%c0_17, %c0_18] : memref<16x128xf32, #tpu.memory_space<vmem>>, vector<16x128xf32>
      tpu.vector_store %arg5[%c0_17, %c0_18], %22 {strides = array<i32>} : memref<16x128xf32, #tpu.memory_space<vmem>>, vector<16x128xf32>,
    } else {
    }
    return
  }
  func.func @transform_0(%arg0: i32, %arg1: i32) -> (i32, i32) {
    %c0_i32 = arith.constant 0 : i32
    return %arg0, %arg1 : i32, i32
  }
  func.func @transform_1(%arg0: i32, %arg1: i32) -> (i32, i32) {
    %c0_i32 = arith.constant 0 : i32
    %c0_i32_0 = arith.constant 0 : i32
    return %arg1, %c0_i32 : i32, i32
  }
  func.func @transform_2(%arg0: i32, %arg1: i32) -> (i32, i32) {
    %c0_i32 = arith.constant 0 : i32
    %c0_i32_0 = arith.constant 0 : i32
    %c0_i32_1 = arith.constant 0 : i32
    return %c0_i32, %c0_i32_0 : i32, i32
  }
  func.func @transform_3(%arg0: i32, %arg1: i32) -> (i32, i32) {
    %c0_i32 = arith.constant 0 : i32
    %c0_i32_0 = arith.constant 0 : i32
    return %arg0, %c0_i32 : i32, i32
  }
}

</mosaic_0001>

<llo_original>
// kernel: discriminator_forward.8
$region0: #{discriminator_forward.8}
  #allocation0 [shape = 'u32[]', space=smem, size = 0x4, offset = 0x4, fixed_abs, tag = 'smem constant byte address 0x4 - core index']
  #allocation1 [shape = 'u32[144,128]{1,0:T(1,128)}', space=vmem, size = 0x12000, scoped, tag = 'internal scratch']
  #allocation2 [shape = 'f32[512,128]{1,0:T(8,128)}', space=vmem, size = 0x40000, scoped, tag = 'scratch operand']
  %s0 = inlined_call_operand.vmem [shape: bf16[2048,48], index: 0, kind: input, shape index: {}]
  %s1 = inlined_call_operand.vmem [shape: bf16[48,128], index: 1, kind: input, shape index: {}]
  %s2 = inlined_call_operand.vmem [shape: f32[1,128], index: 2, kind: input, shape index: {}]
  %s3 = inlined_call_operand.vmem [shape: bf16[2048,128], index: 3, kind: output, shape index: {}]
  %s4 = sld [smem:[#allocation0]]
  $region53: #{discriminator_forward.8} parent=0
    _
  %s6 = ssub.s32 1, %s4
  %s7 = scalar_select 0, %s6, %s4
  loop: start=0, step=1, limit=6
  $region2: #{discriminator_forward.8} parent=0 // loop_pre_header
    _
  $region3: #{discriminator_forward.8} parent=0 // loop_header
    %s9 = sphi 0, %s13
    %p10 = scmp.ge.s32.totalorder %s9, 6
    %s16 = sphi 0, %s28
    %s17 = sphi 0, %s24
    %s18 = sphi 0, %s16
    %s19 = sphi 0, %s17
    %s20 = sphi 0, %s18
    %s21 = sphi 0, %s19
    %s33 = sphi 0, %s35
    %s36 = sphi 0, %s33
    %s37 = sphi 0, %s36
    %s53 = sphi 0, %s37
    %s59 = sphi 0, %s61
    %s62 = sphi 0, %s59
    %s63 = sphi 0, %s62
    %s79 = sphi 0, %s63
    %s83 = sphi 0, %s83
    %s85 = sphi 0, %s83
    %s86 = sphi 0, %s85
    %s100 = sphi 0, %s86
    %s106 = sphi 0, %s108
    %s109 = sphi 0, %s106
    %s110 = sphi 0, %s109
    %s126 = sphi 0, %s110
  $region4: #{discriminator_forward.8} parent=0 // loop_header_branch
    %12 = sbr.rel (%p10) target = $region8
  $region5: #{discriminator_forward.8} parent=0 // loop_body
    %s14 = ssub.s32 %s9, 1
    %s15 = ssub.s32 %s9, 2
    %s22 = sadd.s32 1, %s17
    %p23 = scmp.ge.s32.totalorder %s22, 1
    %s24 = scalar_select %p23, 0, %s22
    %s25 = sadd.s32 1, %s16
    %s26 = scalar_select %p23, %s25, %s16
    %p27 = scmp.ge.s32.totalorder %s26, 4
    %s28 = scalar_select %p27, 0, %s26
    %s29 = ssub.s32 %s16, %s28
    %s30 = ssub.s32 %s17, %s24
    %s31 = sor.u32 %s29, %s30
    %p32 = scmp.eq.s32.totalorder %s31, 0
    %s34 = sadd.s32 %s33, 1
    %s35 = scalar_select %p32, %s33, %s34
    %p38 = pneg %p32
    %p39 = scmp.eq.s32.totalorder %s9, 3
    %p40 = por %p38, %p39
    %p41 = scmp.ne.s32.totalorder %s33, %s36
    %p42 = scmp.eq.s32.totalorder %s9, 0
    %p43 = por %p41, %p42
    %p44 = scmp.ne.s32.totalorder %s33, %s36
    %p45 = scmp.eq.s32.totalorder %s14, 3
    %p46 = por %p44, %p45
    %p47 = scmp.ne.s32.totalorder %s36, %s37
    %p48 = scmp.eq.s32.totalorder %s14, 0
    %p49 = por %p47, %p48
    %p50 = scmp.ne.s32.totalorder %s36, %s37
    %p51 = scmp.eq.s32.totalorder %s15, 3
    %p52 = por %p50, %p51
    %p54 = scmp.ne.s32.totalorder %s37, %s53
    %p55 = scmp.eq.s32.totalorder %s15, 0
    %p56 = por %p54, %p55
    %s57 = ssub.s32 %s17, %s24
    %p58 = scmp.eq.s32.totalorder %s57, 0
    %s60 = sadd.s32 %s59, 1
    %s61 = scalar_select %p58, %s59, %s60
    %p64 = pneg %p58
    %p65 = scmp.eq.s32.totalorder %s9, 3
    %p66 = por %p64, %p65
    %p67 = scmp.ne.s32.totalorder %s59, %s62
    %p68 = scmp.eq.s32.totalorder %s9, 0
    %p69 = por %p67, %p68
    %p70 = scmp.ne.s32.totalorder %s59, %s62
    %p71 = scmp.eq.s32.totalorder %s14, 3
    %p72 = por %p70, %p71
    %p73 = scmp.ne.s32.totalorder %s62, %s63
    %p74 = scmp.eq.s32.totalorder %s14, 0
    %p75 = por %p73, %p74
    %p76 = scmp.ne.s32.totalorder %s62, %s63
    %p77 = scmp.eq.s32.totalorder %s15, 3
    %p78 = por %p76, %p77
    %p80 = scmp.ne.s32.totalorder %s63, %s79
    %p81 = scmp.eq.s32.totalorder %s15, 0
    %p82 = por %p80, %p81
    %s84 = sadd.s32 %s83, 1
    %p87 = scmp.eq.s32.totalorder %s9, 3
    %p88 = scmp.ne.s32.totalorder %s83, %s85
    %p89 = scmp.eq.s32.totalorder %s9, 0
    %p90 = por %p88, %p89
    %p91 = scmp.ne.s32.totalorder %s83, %s85
    %p92 = scmp.eq.s32.totalorder %s14, 3
    %p93 = por %p91, %p92
    %p94 = scmp.ne.s32.totalorder %s85, %s86
    %p95 = scmp.eq.s32.totalorder %s14, 0
    %p96 = por %p94, %p95
    %p97 = scmp.ne.s32.totalorder %s85, %s86
    %p98 = scmp.eq.s32.totalorder %s15, 3
    %p99 = por %p97, %p98
    %p101 = scmp.ne.s32.totalorder %s86, %s100
    %p102 = scmp.eq.s32.totalorder %s15, 0
    %p103 = por %p101, %p102
    %s104 = ssub.s32 %s16, %s28
    %p105 = scmp.eq.s32.totalorder %s104, 0
    %s107 = sadd.s32 %s106, 1
    %s108 = scalar_select %p105, %s106, %s107
    %p111 = pneg %p105
    %p112 = scmp.eq.s32.totalorder %s9, 3
    %p113 = por %p111, %p112
    %p114 = scmp.ne.s32.totalorder %s106, %s109
    %p115 = scmp.eq.s32.totalorder %s9, 0
    %p116 = por %p114, %p115
    %p117 = scmp.ne.s32.totalorder %s106, %s109
    %p118 = scmp.eq.s32.totalorder %s14, 3
    %p119 = por %p117, %p118
    %p120 = scmp.ne.s32.totalorder %s109, %s110
    %p121 = scmp.eq.s32.totalorder %s14, 0
    %p122 = por %p120, %p121
    %p123 = scmp.ne.s32.totalorder %s109, %s110
    %p124 = scmp.eq.s32.totalorder %s15, 3
    %p125 = por %p123, %p124
    %p127 = scmp.ne.s32.totalorder %s110, %s126
    %p128 = scmp.eq.s32.totalorder %s15, 0
    %p129 = por %p127, %p128
    %p130 = scmp.le.s32.totalorder 1, %s9
    %p131 = scmp.lt.s32.totalorder %s9, 5
    %p132 = pnand %p130, %p131
    %p133 = pneg %p132
    // Predicated region
    $region9: #{discriminator_forward.8} parent=5 // pred_check
      _
    $region10: #{discriminator_forward.8} parent=5 // pred_check_branch
      %135 = sbr.rel (%p132) target = $region12
    $region11: #{discriminator_forward.8} parent=5 // pred_region
      %s136 = ssub.s32 %s9, 1
      // Predicated region
      $region13: #{discriminator_forward.8} parent=11 // pred_check
        %p137 = pneg %p75
      $region14: #{discriminator_forward.8} parent=11 // pred_check_branch
        %139 = sbr.rel (%p137) target = $region16
      $region15: #{discriminator_forward.8} parent=11 // pred_region
        %s140 = smul.u32 6, %s19
        %p141 = scmp.lt.s32.totalorder %s140, 5
        %s142 = scalar_select %p141, %s140, 5
        %s143 = smul.addr %s142, 4
        %s144 = scalar_lea.vmem %s1, %s143
        %s145 = smul.u32 6, %s19
      $region16: #{discriminator_forward.8} parent=11 // pred_fallthru
        _
      // Predicated region
      $region17: #{discriminator_forward.8} parent=11 // pred_check
        %p146 = pneg %p96
      $region18: #{discriminator_forward.8} parent=11 // pred_check_branch
        %148 = sbr.rel (%p146) target = $region20
      $region19: #{discriminator_forward.8} parent=11 // pred_region
        _
      $region20: #{discriminator_forward.8} parent=11 // pred_fallthru
        _
    $region12: #{discriminator_forward.8} parent=5 // pred_fallthru
      _
    %p149 = scmp.lt.s32.totalorder %s9, 4
    // Predicated region
    $region21: #{discriminator_forward.8} parent=5 // pred_check
      %p150 = pneg %p149
    $region22: #{discriminator_forward.8} parent=5 // pred_check_branch
      %152 = sbr.rel (%p150) target = $region24
    $region23: #{discriminator_forward.8} parent=5 // pred_region
      // Predicated region
      $region25: #{discriminator_forward.8} parent=23 // pred_check
        %p153 = pneg %p43
      $region26: #{discriminator_forward.8} parent=23 // pred_check_branch
        %155 = sbr.rel (%p153) target = $region28
      $region27: #{discriminator_forward.8} parent=23 // pred_region
        %s156 = smul.u32 64, %s16
        %p157 = scmp.lt.s32.totalorder %s156, 255
        %s158 = scalar_select %p157, %s156, 255
        %p159 = scmp.lt.s32.totalorder %s17, 0
        %s160 = scalar_select %p159, %s17, 0
        %s161 = sadd.s32 %s160, %s158
        %s162 = smul.addr %s161, 4
        %s163 = scalar_lea.vmem %s0, %s162
        %s164 = smul.u32 64, %s16
      $region28: #{discriminator_forward.8} parent=23 // pred_fallthru
        _
    $region24: #{discriminator_forward.8} parent=5 // pred_fallthru
      _
    %p165 = scmp.le.s32.totalorder 1, %s9
    %p166 = scmp.lt.s32.totalorder %s9, 5
    %p167 = pnand %p165, %p166
    %p168 = pneg %p167
    // Predicated region
    $region29: #{discriminator_forward.8} parent=5 // pred_check
      _
    $region30: #{discriminator_forward.8} parent=5 // pred_check_branch
      %170 = sbr.rel (%p167) target = $region32
    $region31: #{discriminator_forward.8} parent=5 // pred_region
      %s171 = ssub.s32 %s9, 1
      %s172 = smul.u32 64, %s18
      %p173 = scmp.lt.s32.totalorder %s172, 255
      %s174 = scalar_select %p173, %s172, 255
      %p175 = scmp.lt.s32.totalorder %s19, 0
      %s176 = scalar_select %p175, %s19, 0
      %s177 = sadd.s32 %s176, %s174
      %s178 = smul.addr %s177, 4
      %s179 = scalar_lea.vmem %s0, %s178
      %p180 = pneg %p49
      %p181 = pneg %p46
      %s182 = smul.u32 6, %s19
      %p183 = scmp.lt.s32.totalorder %s182, 5
      %s184 = scalar_select %p183, %s182, 5
      %s185 = smul.addr %s184, 4
      %s186 = scalar_lea.vmem %s1, %s185
      %p187 = pneg %p75
      %p188 = pneg %p72
      %p189 = pneg %p96
      %p190 = pneg %p93
      %p191 = pneg %p122
      %p192 = pneg %p119
      %s193 = smul.u32 64, %s18
      %p194 = scmp.lt.s32.totalorder %s193, 255
      %s195 = scalar_select %p194, %s193, 255
      %s196 = smul.addr %s195, 4
      %s197 = scalar_lea.vmem %s3, %s196
      %s198 = smul.u32 64, %s18
      %p199 = scmp.lt.s32.totalorder %s198, 255
      %s200 = scalar_select %p199, %s198, 255
      %p201 = scmp.lt.s32.totalorder %s19, 0
      %s202 = scalar_select %p201, %s19, 0
      %s203 = sadd.s32 %s202, %s200
      %s204 = smul.addr %s203, 4
      %s205 = scalar_lea.vmem %s0, %s204
      %s206 = smul.u32 64, %s18
      %s207 = smul.u32 6, %s19
      %p208 = scmp.lt.s32.totalorder %s207, 5
      %s209 = scalar_select %p208, %s207, 5
      %s210 = smul.addr %s209, 4
      %s211 = scalar_lea.vmem %s1, %s210
      %s212 = smul.u32 6, %s19
      %s213 = smul.u32 64, %s18
      %p214 = scmp.lt.s32.totalorder %s213, 255
      %s215 = scalar_select %p214, %s213, 255
      %s216 = smul.addr %s215, 4
      %s217 = scalar_lea.vmem %s3, %s216
      %s218 = smul.u32 64, %s18
      %p220 = scmp.eq.s32.totalorder %s19, 0
      // Predicated region
      $region33: #{discriminator_forward.8} parent=31 // pred_check
        %p221 = pneg %p220
      $region34: #{discriminator_forward.8} parent=31 // pred_check_branch
        %223 = sbr.rel (%p221) target = $region36
      $region35: #{discriminator_forward.8} parent=31 // pred_region
        %224 = vst [vmem:[#allocation2] sm:$0xff] 0.0
        %225 = vst [vmem:[#allocation2 + $0x8] sm:$0xff] 0.0
        %226 = vst [vmem:[#allocation2 + $0x10] sm:$0xff] 0.0
        %227 = vst [vmem:[#allocation2 + $0x18] sm:$0xff] 0.0
        %228 = vst [vmem:[#allocation2 + $0x20] sm:$0xff] 0.0
        %229 = vst [vmem:[#allocation2 + $0x28] sm:$0xff] 0.0
        %230 = vst [vmem:[#allocation2 + $0x30] sm:$0xff] 0.0
        %231 = vst [vmem:[#allocation2 + $0x38] sm:$0xff] 0.0
        %232 = vst [vmem:[#allocation2 + $0x40] sm:$0xff] 0.0
        %233 = vst [vmem:[#allocation2 + $0x48] sm:$0xff] 0.0
        %234 = vst [vmem:[#allocation2 + $0x50] sm:$0xff] 0.0
        %235 = vst [vmem:[#allocation2 + $0x58] sm:$0xff] 0.0
        %236 = vst [vmem:[#allocation2 + $0x60] sm:$0xff] 0.0
        %237 = vst [vmem:[#allocation2 + $0x68] sm:$0xff] 0.0
        %238 = vst [vmem:[#allocation2 + $0x70] sm:$0xff] 0.0
        %239 = vst [vmem:[#allocation2 + $0x78] sm:$0xff] 0.0
        %240 = vst [vmem:[#allocation2 + $0x80] sm:$0xff] 0.0
        %241 = vst [vmem:[#allocation2 + $0x88] sm:$0xff] 0.0
        %242 = vst [vmem:[#allocation2 + $0x90] sm:$0xff] 0.0
        %243 = vst [vmem:[#allocation2 + $0x98] sm:$0xff] 0.0
        %244 = vst [vmem:[#allocation2 + $0xa0] sm:$0xff] 0.0
        %245 = vst [vmem:[#allocation2 + $0xa8] sm:$0xff] 0.0
        %246 = vst [vmem:[#allocation2 + $0xb0] sm:$0xff] 0.0
        %247 = vst [vmem:[#allocation2 + $0xb8] sm:$0xff] 0.0
        %248 = vst [vmem:[#allocation2 + $0xc0] sm:$0xff] 0.0
        %249 = vst [vmem:[#allocation2 + $0xc8] sm:$0xff] 0.0
        %250 = vst [vmem:[#allocation2 + $0xd0] sm:$0xff] 0.0
        %251 = vst [vmem:[#allocation2 + $0xd8] sm:$0xff] 0.0
        %252 = vst [vmem:[#allocation2 + $0xe0] sm:$0xff] 0.0
        %253 = vst [vmem:[#allocation2 + $0xe8] sm:$0xff] 0.0
        %254 = vst [vmem:[#allocation2 + $0xf0] sm:$0xff] 0.0
        %255 = vst [vmem:[#allocation2 + $0xf8] sm:$0xff] 0.0
        %256 = vst [vmem:[#allocation2 + $0x100] sm:$0xff] 0.0
        %257 = vst [vmem:[#allocation2 + $0x108] sm:$0xff] 0.0
        %258 = vst [vmem:[#allocation2 + $0x110] sm:$0xff] 0.0
        %259 = vst [vmem:[#allocation2 + $0x118] sm:$0xff] 0.0
        %260 = vst [vmem:[#allocation2 + $0x120] sm:$0xff] 0.0
        %261 = vst [vmem:[#allocation2 + $0x128] sm:$0xff] 0.0
        %262 = vst [vmem:[#allocation2 + $0x130] sm:$0xff] 0.0
        %263 = vst [vmem:[#allocation2 + $0x138] sm:$0xff] 0.0
        %264 = vst [vmem:[#allocation2 + $0x140] sm:$0xff] 0.0
        %265 = vst [vmem:[#allocation2 + $0x148] sm:$0xff] 0.0
        %266 = vst [vmem:[#allocation2 + $0x150] sm:$0xff] 0.0
        %267 = vst [vmem:[#allocation2 + $0x158] sm:$0xff] 0.0
        %268 = vst [vmem:[#allocation2 + $0x160] sm:$0xff] 0.0
        %269 = vst [vmem:[#allocation2 + $0x168] sm:$0xff] 0.0
        %270 = vst [vmem:[#allocation2 + $0x170] sm:$0xff] 0.0
        %271 = vst [vmem:[#allocation2 + $0x178] sm:$0xff] 0.0
        %272 = vst [vmem:[#allocation2 + $0x180] sm:$0xff] 0.0
        %273 = vst [vmem:[#allocation2 + $0x188] sm:$0xff] 0.0
        %274 = vst [vmem:[#allocation2 + $0x190] sm:$0xff] 0.0
        %275 = vst [vmem:[#allocation2 + $0x198] sm:$0xff] 0.0
        %276 = vst [vmem:[#allocation2 + $0x1a0] sm:$0xff] 0.0
        %277 = vst [vmem:[#allocation2 + $0x1a8] sm:$0xff] 0.0
        %278 = vst [vmem:[#allocation2 + $0x1b0] sm:$0xff] 0.0
        %279 = vst [vmem:[#allocation2 + $0x1b8] sm:$0xff] 0.0
        %280 = vst [vmem:[#allocation2 + $0x1c0] sm:$0xff] 0.0
        %281 = vst [vmem:[#allocation2 + $0x1c8] sm:$0xff] 0.0
        %282 = vst [vmem:[#allocation2 + $0x1d0] sm:$0xff] 0.0
        %283 = vst [vmem:[#allocation2 + $0x1d8] sm:$0xff] 0.0
        %284 = vst [vmem:[#allocation2 + $0x1e0] sm:$0xff] 0.0
        %285 = vst [vmem:[#allocation2 + $0x1e8] sm:$0xff] 0.0
        %286 = vst [vmem:[#allocation2 + $0x1f0] sm:$0xff] 0.0
        %287 = vst [vmem:[#allocation2 + $0x1f8] sm:$0xff] 0.0
      $region36: #{discriminator_forward.8} parent=31 // pred_fallthru
        _
      %v288 = vld [vmem:[#allocation2] sm:$0xff]
      %v289 = vld [vmem:[#allocation2 + $0x8] sm:$0xff]
      %v290 = vld [vmem:[#allocation2 + $0x10] sm:$0xff]
      %v291 = vld [vmem:[#allocation2 + $0x18] sm:$0xff]
      %v292 = vld [vmem:[#allocation2 + $0x20] sm:$0xff]
      %v293 = vld [vmem:[#allocation2 + $0x28] sm:$0xff]
      %v294 = vld [vmem:[#allocation2 + $0x30] sm:$0xff]
      %v295 = vld [vmem:[#allocation2 + $0x38] sm:$0xff]
      %v296 = vld [vmem:[#allocation2 + $0x40] sm:$0xff]
      %v297 = vld [vmem:[#allocation2 + $0x48] sm:$0xff]
      %v298 = vld [vmem:[#allocation2 + $0x50] sm:$0xff]
      %v299 = vld [vmem:[#allocation2 + $0x58] sm:$0xff]
      %v300 = vld [vmem:[#allocation2 + $0x60] sm:$0xff]
      %v301 = vld [vmem:[#allocation2 + $0x68] sm:$0xff]
      %v302 = vld [vmem:[#allocation2 + $0x70] sm:$0xff]
      %v303 = vld [vmem:[#allocation2 + $0x78] sm:$0xff]
      %v304 = vld [vmem:[#allocation2 + $0x80] sm:$0xff]
      %v305 = vld [vmem:[#allocation2 + $0x88] sm:$0xff]
      %v306 = vld [vmem:[#allocation2 + $0x90] sm:$0xff]
      %v307 = vld [vmem:[#allocation2 + $0x98] sm:$0xff]
      %v308 = vld [vmem:[#allocation2 + $0xa0] sm:$0xff]
      %v309 = vld [vmem:[#allocation2 + $0xa8] sm:$0xff]
      %v310 = vld [vmem:[#allocation2 + $0xb0] sm:$0xff]
      %v311 = vld [vmem:[#allocation2 + $0xb8] sm:$0xff]
      %v312 = vld [vmem:[#allocation2 + $0xc0] sm:$0xff]
      %v313 = vld [vmem:[#allocation2 + $0xc8] sm:$0xff]
      %v314 = vld [vmem:[#allocation2 + $0xd0] sm:$0xff]
      %v315 = vld [vmem:[#allocation2 + $0xd8] sm:$0xff]
      %v316 = vld [vmem:[#allocation2 + $0xe0] sm:$0xff]
      %v317 = vld [vmem:[#allocation2 + $0xe8] sm:$0xff]
      %v318 = vld [vmem:[#allocation2 + $0xf0] sm:$0xff]
      %v319 = vld [vmem:[#allocation2 + $0xf8] sm:$0xff]
      %v320 = vld [vmem:[#allocation2 + $0x100] sm:$0xff]
      %v321 = vld [vmem:[#allocation2 + $0x108] sm:$0xff]
      %v322 = vld [vmem:[#allocation2 + $0x110] sm:$0xff]
      %v323 = vld [vmem:[#allocation2 + $0x118] sm:$0xff]
      %v324 = vld [vmem:[#allocation2 + $0x120] sm:$0xff]
      %v325 = vld [vmem:[#allocation2 + $0x128] sm:$0xff]
      %v326 = vld [vmem:[#allocation2 + $0x130] sm:$0xff]
      %v327 = vld [vmem:[#allocation2 + $0x138] sm:$0xff]
      %v328 = vld [vmem:[#allocation2 + $0x140] sm:$0xff]
      %v329 = vld [vmem:[#allocation2 + $0x148] sm:$0xff]
      %v330 = vld [vmem:[#allocation2 + $0x150] sm:$0xff]
      %v331 = vld [vmem:[#allocation2 + $0x158] sm:$0xff]
      %v332 = vld [vmem:[#allocation2 + $0x160] sm:$0xff]
      %v333 = vld [vmem:[#allocation2 + $0x168] sm:$0xff]
      %v334 = vld [vmem:[#allocation2 + $0x170] sm:$0xff]
      %v335 = vld [vmem:[#allocation2 + $0x178] sm:$0xff]
      %v336 = vld [vmem:[#allocation2 + $0x180] sm:$0xff]
      %v337 = vld [vmem:[#allocation2 + $0x188] sm:$0xff]
      %v338 = vld [vmem:[#allocation2 + $0x190] sm:$0xff]
      %v339 = vld [vmem:[#allocation2 + $0x198] sm:$0xff]
      %v340 = vld [vmem:[#allocation2 + $0x1a0] sm:$0xff]
      %v341 = vld [vmem:[#allocation2 + $0x1a8] sm:$0xff]
      %v342 = vld [vmem:[#allocation2 + $0x1b0] sm:$0xff]
      %v343 = vld [vmem:[#allocation2 + $0x1b8] sm:$0xff]
      %v344 = vld [vmem:[#allocation2 + $0x1c0] sm:$0xff]
      %v345 = vld [vmem:[#allocation2 + $0x1c8] sm:$0xff]
      %v346 = vld [vmem:[#allocation2 + $0x1d0] sm:$0xff]
      %v347 = vld [vmem:[#allocation2 + $0x1d8] sm:$0xff]
      %v348 = vld [vmem:[#allocation2 + $0x1e0] sm:$0xff]
      %v349 = vld [vmem:[#allocation2 + $0x1e8] sm:$0xff]
      %v350 = vld [vmem:[#allocation2 + $0x1f0] sm:$0xff]
      %v351 = vld [vmem:[#allocation2 + $0x1f8] sm:$0xff]
      %v352 = vld [vmem:[%s205] sm:$0xf]
      %v353 = vld [vmem:[%s205 + $0x4] sm:$0xf]
      %v354 = vld [vmem:[%s205 + $0x8] sm:$0xf]
      %v355 = vld [vmem:[%s205 + $0xc] sm:$0xf]
      %v356 = vld [vmem:[%s205 + $0x10] sm:$0xf]
      %v357 = vld [vmem:[%s205 + $0x14] sm:$0xf]
      %v358 = vld [vmem:[%s205 + $0x18] sm:$0xf]
      %v359 = vld [vmem:[%s205 + $0x1c] sm:$0xf]
      %v360 = vld [vmem:[%s205 + $0x20] sm:$0xf]
      %v361 = vld [vmem:[%s205 + $0x24] sm:$0xf]
      %v362 = vld [vmem:[%s205 + $0x28] sm:$0xf]
      %v363 = vld [vmem:[%s205 + $0x2c] sm:$0xf]
      %v364 = vld [vmem:[%s205 + $0x30] sm:$0xf]
      %v365 = vld [vmem:[%s205 + $0x34] sm:$0xf]
      %v366 = vld [vmem:[%s205 + $0x38] sm:$0xf]
      %v367 = vld [vmem:[%s205 + $0x3c] sm:$0xf]
      %v368 = vld [vmem:[%s205 + $0x40] sm:$0xf]
      %v369 = vld [vmem:[%s205 + $0x44] sm:$0xf]
      %v370 = vld [vmem:[%s205 + $0x48] sm:$0xf]
      %v371 = vld [vmem:[%s205 + $0x4c] sm:$0xf]
      %v372 = vld [vmem:[%s205 + $0x50] sm:$0xf]
      %v373 = vld [vmem:[%s205 + $0x54] sm:$0xf]
      %v374 = vld [vmem:[%s205 + $0x58] sm:$0xf]
      %v375 = vld [vmem:[%s205 + $0x5c] sm:$0xf]
      %v376 = vld [vmem:[%s205 + $0x60] sm:$0xf]
      %v377 = vld [vmem:[%s205 + $0x64] sm:$0xf]
      %v378 = vld [vmem:[%s205 + $0x68] sm:$0xf]
      %v379 = vld [vmem:[%s205 + $0x6c] sm:$0xf]
      %v380 = vld [vmem:[%s205 + $0x70] sm:$0xf]
      %v381 = vld [vmem:[%s205 + $0x74] sm:$0xf]
      %v382 = vld [vmem:[%s205 + $0x78] sm:$0xf]
      %v383 = vld [vmem:[%s205 + $0x7c] sm:$0xf]
      %v384 = vld [vmem:[%s205 + $0x80] sm:$0xf]
      %v385 = vld [vmem:[%s205 + $0x84] sm:$0xf]
      %v386 = vld [vmem:[%s205 + $0x88] sm:$0xf]
      %v387 = vld [vmem:[%s205 + $0x8c] sm:$0xf]
      %v388 = vld [vmem:[%s205 + $0x90] sm:$0xf]
      %v389 = vld [vmem:[%s205 + $0x94] sm:$0xf]
      %v390 = vld [vmem:[%s205 + $0x98] sm:$0xf]
      %v391 = vld [vmem:[%s205 + $0x9c] sm:$0xf]
      %v392 = vld [vmem:[%s205 + $0xa0] sm:$0xf]
      %v393 = vld [vmem:[%s205 + $0xa4] sm:$0xf]
      %v394 = vld [vmem:[%s205 + $0xa8] sm:$0xf]
      %v395 = vld [vmem:[%s205 + $0xac] sm:$0xf]
      %v396 = vld [vmem:[%s205 + $0xb0] sm:$0xf]
      %v397 = vld [vmem:[%s205 + $0xb4] sm:$0xf]
      %v398 = vld [vmem:[%s205 + $0xb8] sm:$0xf]
      %v399 = vld [vmem:[%s205 + $0xbc] sm:$0xf]
      %v400 = vld [vmem:[%s205 + $0xc0] sm:$0xf]
      %v401 = vld [vmem:[%s205 + $0xc4] sm:$0xf]
      %v402 = vld [vmem:[%s205 + $0xc8] sm:$0xf]
      %v403 = vld [vmem:[%s205 + $0xcc] sm:$0xf]
      %v404 = vld [vmem:[%s205 + $0xd0] sm:$0xf]
      %v405 = vld [vmem:[%s205 + $0xd4] sm:$0xf]
      %v406 = vld [vmem:[%s205 + $0xd8] sm:$0xf]
      %v407 = vld [vmem:[%s205 + $0xdc] sm:$0xf]
      %v408 = vld [vmem:[%s205 + $0xe0] sm:$0xf]
      %v409 = vld [vmem:[%s205 + $0xe4] sm:$0xf]
      %v410 = vld [vmem:[%s205 + $0xe8] sm:$0xf]
      %v411 = vld [vmem:[%s205 + $0xec] sm:$0xf]
      %v412 = vld [vmem:[%s205 + $0xf0] sm:$0xf]
      %v413 = vld [vmem:[%s205 + $0xf4] sm:$0xf]
      %v414 = vld [vmem:[%s205 + $0xf8] sm:$0xf]
      %v415 = vld [vmem:[%s205 + $0xfc] sm:$0xf]
      %v416 = vld [vmem:[%s211] sm:$0xf]
      %v417 = vld [vmem:[%s211 + $0x4] sm:$0xf]
      %v418 = vld [vmem:[%s211 + $0x8] sm:$0xf]
      %v419 = vld [vmem:[%s211 + $0xc] sm:$0xf]
      %v420 = vld [vmem:[%s211 + $0x10] sm:$0xf]
      %v421 = vld [vmem:[%s211 + $0x14] sm:$0xf]
      %v486 = vunpack.c.l.b16 %v352
      %v487 = vunpack.c.l.b16 %v353
      %v488 = vunpack.c.l.b16 %v354
      %v489 = vunpack.c.l.b16 %v355
      %v490 = vunpack.c.l.b16 %v356
      %v491 = vunpack.c.l.b16 %v357
      %v492 = vunpack.c.l.b16 %v358
      %v493 = vunpack.c.l.b16 %v359
      %v494 = vunpack.c.l.b16 %v360
      %v495 = vunpack.c.l.b16 %v361
      %v496 = vunpack.c.l.b16 %v362
      %v497 = vunpack.c.l.b16 %v363
      %v498 = vunpack.c.l.b16 %v364
      %v499 = vunpack.c.l.b16 %v365
      %v500 = vunpack.c.l.b16 %v366
      %v501 = vunpack.c.l.b16 %v367
      %v502 = vunpack.c.l.b16 %v368
      %v503 = vunpack.c.l.b16 %v369
      %v504 = vunpack.c.l.b16 %v370
      %v505 = vunpack.c.l.b16 %v371
      %v506 = vunpack.c.l.b16 %v372
      %v507 = vunpack.c.l.b16 %v373
      %v508 = vunpack.c.l.b16 %v374
      %v509 = vunpack.c.l.b16 %v375
      %v510 = vunpack.c.l.b16 %v376
      %v511 = vunpack.c.l.b16 %v377
      %v512 = vunpack.c.l.b16 %v378
      %v513 = vunpack.c.l.b16 %v379
      %v514 = vunpack.c.l.b16 %v380
      %v515 = vunpack.c.l.b16 %v381
      %v516 = vunpack.c.l.b16 %v382
      %v517 = vunpack.c.l.b16 %v383
      %v518 = vunpack.c.l.b16 %v384
      %v519 = vunpack.c.l.b16 %v385
      %v520 = vunpack.c.l.b16 %v386
      %v521 = vunpack.c.l.b16 %v387
      %v522 = vunpack.c.l.b16 %v388
      %v523 = vunpack.c.l.b16 %v389
      %v524 = vunpack.c.l.b16 %v390
      %v525 = vunpack.c.l.b16 %v391
      %v526 = vunpack.c.l.b16 %v392
      %v527 = vunpack.c.l.b16 %v393
      %v528 = vunpack.c.l.b16 %v394
      %v529 = vunpack.c.l.b16 %v395
      %v530 = vunpack.c.l.b16 %v396
      %v531 = vunpack.c.l.b16 %v397
      %v532 = vunpack.c.l.b16 %v398
      %v533 = vunpack.c.l.b16 %v399
      %v534 = vunpack.c.l.b16 %v400
      %v535 = vunpack.c.l.b16 %v401
      %v536 = vunpack.c.l.b16 %v402
      %v537 = vunpack.c.l.b16 %v403
      %v538 = vunpack.c.l.b16 %v404
      %v539 = vunpack.c.l.b16 %v405
      %v540 = vunpack.c.l.b16 %v406
      %v541 = vunpack.c.l.b16 %v407
      %v542 = vunpack.c.l.b16 %v408
      %v543 = vunpack.c.l.b16 %v409
      %v544 = vunpack.c.l.b16 %v410
      %v545 = vunpack.c.l.b16 %v411
      %v546 = vunpack.c.l.b16 %v412
      %v547 = vunpack.c.l.b16 %v413
      %v548 = vunpack.c.l.b16 %v414
      %v549 = vunpack.c.l.b16 %v415
      %v550 = vpack.c.b16 %v487, %v486
      %v551 = vpack.c.b16 %v489, %v488
      %v552 = vpack.c.b16 %v491, %v490
      %v553 = vpack.c.b16 %v493, %v492
      %v554 = vpack.c.b16 %v495, %v494
      %v555 = vpack.c.b16 %v497, %v496
      %v556 = vpack.c.b16 %v499, %v498
      %v557 = vpack.c.b16 %v501, %v500
      %v558 = vpack.c.b16 %v503, %v502
      %v559 = vpack.c.b16 %v505, %v504
      %v560 = vpack.c.b16 %v507, %v506
      %v561 = vpack.c.b16 %v509, %v508
      %v562 = vpack.c.b16 %v511, %v510
      %v563 = vpack.c.b16 %v513, %v512
      %v564 = vpack.c.b16 %v515, %v514
      %v565 = vpack.c.b16 %v517, %v516
      %v566 = vpack.c.b16 %v519, %v518
      %v567 = vpack.c.b16 %v521, %v520
      %v568 = vpack.c.b16 %v523, %v522
      %v569 = vpack.c.b16 %v525, %v524
      %v570 = vpack.c.b16 %v527, %v526
      %v571 = vpack.c.b16 %v529, %v528
      %v572 = vpack.c.b16 %v531, %v530
      %v573 = vpack.c.b16 %v533, %v532
      %v574 = vpack.c.b16 %v535, %v534
      %v575 = vpack.c.b16 %v537, %v536
      %v576 = vpack.c.b16 %v539, %v538
      %v577 = vpack.c.b16 %v541, %v540
      %v578 = vpack.c.b16 %v543, %v542
      %v579 = vpack.c.b16 %v545, %v544
      %v580 = vpack.c.b16 %v547, %v546
      %v581 = vpack.c.b16 %v549, %v548
      %v588 = vunpack.c.l.b16 %v416
      %v589 = vunpack.c.l.b16 %v417
      %v590 = vunpack.c.l.b16 %v418
      %v591 = vunpack.c.l.b16 %v419
      %v592 = vunpack.c.l.b16 %v420
      %v593 = vunpack.c.l.b16 %v421
      %v594 = vpack.c.b16 %v589, %v588
      %v595 = vpack.c.b16 %v591, %v590
      %v596 = vpack.c.b16 %v593, %v592
      %vm600 = vcmask 392192
      %v602 = vsel %vm600, %v550, 0
      %v605 = vsel %vm600, %v551, 0
      %v608 = vsel %vm600, %v552, 0
      %v611 = vsel %vm600, %v553, 0
      %v614 = vsel %vm600, %v554, 0
      %v617 = vsel %vm600, %v555, 0
      %v620 = vsel %vm600, %v556, 0
      %v623 = vsel %vm600, %v557, 0
      %v626 = vsel %vm600, %v558, 0
      %v629 = vsel %vm600, %v559, 0
      %v632 = vsel %vm600, %v560, 0
      %v635 = vsel %vm600, %v561, 0
      %v638 = vsel %vm600, %v562, 0
      %v641 = vsel %vm600, %v563, 0
      %v644 = vsel %vm600, %v564, 0
      %v647 = vsel %vm600, %v565, 0
      %v650 = vsel %vm600, %v566, 0
      %v653 = vsel %vm600, %v567, 0
      %v656 = vsel %vm600, %v568, 0
      %v659 = vsel %vm600, %v569, 0
      %v662 = vsel %vm600, %v570, 0
      %v665 = vsel %vm600, %v571, 0
      %v668 = vsel %vm600, %v572, 0
      %v671 = vsel %vm600, %v573, 0
      %v674 = vsel %vm600, %v574, 0
      %v677 = vsel %vm600, %v575, 0
      %v680 = vsel %vm600, %v576, 0
      %v683 = vsel %vm600, %v577, 0
      %v686 = vsel %vm600, %v578, 0
      %v689 = vsel %vm600, %v579, 0
      %v692 = vsel %vm600, %v580, 0
      %v695 = vsel %vm600, %v581, 0
      %697 = vmatprep.subr.bf16.mxu0 0
      %698 = vmatpush1.bf16.msra.mxu0 %v594
      %699 = vmatprep.subr.bf16.mxu0 0
      %700 = vmatpush1.bf16.msra.mxu0 %v595
      %701 = vmatprep.subr.bf16.mxu0 0
      %702 = vmatpush1.bf16.msra.mxu0 %v596
      %703 = vmatprep.subr.bf16.mxu0 0
      %704 = vmatpush1.bf16.msra.mxu0 0
      %705 = vmatprep.subr.bf16.mxu0 0
      %706 = vmatpush1.bf16.msra.mxu0 0
      %707 = vmatprep.subr.bf16.mxu0 0
      %708 = vmatpush1.bf16.msra.mxu0 0
      %709 = vmatprep.subr.bf16.mxu0 0
      %710 = vmatpush1.bf16.msra.mxu0 0
      %711 = vmatprep.subr.bf16.mxu0 0
      %712 = vmatpush1.bf16.msra.mxu0 0
      %713 = vmatprep.subr.bf16.mxu0 0
      %714 = vmatpush1.bf16.msra.mxu0 0
      %715 = vmatprep.subr.bf16.mxu0 0
      %716 = vmatpush1.bf16.msra.mxu0 0
      %717 = vmatprep.subr.bf16.mxu0 0
      %718 = vmatpush1.bf16.msra.mxu0 0
      %719 = vmatprep.subr.bf16.mxu0 0
      %720 = vmatpush1.bf16.msra.mxu0 0
      %721 = vmatprep.subr.bf16.mxu0 0
      %722 = vmatpush1.bf16.msra.mxu0 0
      %723 = vmatprep.subr.bf16.mxu0 0
      %724 = vmatpush1.bf16.msra.mxu0 0
      %725 = vmatprep.subr.bf16.mxu0 0
      %726 = vmatpush1.bf16.msra.mxu0 0
      %727 = vmatprep.subr.bf16.mxu0 0
      %728 = vmatpush1.bf16.msra.mxu0 0
      %729 = vmatprep.mubr.bf16.mxu0 0
      %730 = vmatmul.mubr.bf16.gmra.mrb[0].mxu0 %v602
      %v731 = vpop.f32.mrb[0].mxu0
      %v732 = vadd.f32 0.0, %v731
      %v733 = vpop.f32.mrb[0].mxu0
      %v734 = vpop.f32.mrb[0].mxu0
      %v735 = vadd.f32 0.0, %v734
      %v736 = vpop.f32.mrb[0].mxu0
      %737 = vmatprep.mubr.bf16.mxu0 0
      %738 = vmatmul.mubr.bf16.gmra.mrb[0].mxu0 %v605
      %v739 = vpop.f32.mrb[0].mxu0
      %v740 = vadd.f32 0.0, %v739
      %v741 = vpop.f32.mrb[0].mxu0
      %v742 = vpop.f32.mrb[0].mxu0
      %v743 = vadd.f32 0.0, %v742
      %v744 = vpop.f32.mrb[0].mxu0
      %745 = vmatprep.mubr.bf16.mxu0 0
      %746 = vmatmul.mubr.bf16.gmra.mrb[0].mxu0 %v608
      %v747 = vpop.f32.mrb[0].mxu0
      %v748 = vadd.f32 0.0, %v747
      %v749 = vpop.f32.mrb[0].mxu0
      %v750 = vpop.f32.mrb[0].mxu0
      %v751 = vadd.f32 0.0, %v750
      %v752 = vpop.f32.mrb[0].mxu0
      %753 = vmatprep.mubr.bf16.mxu0 0
      %754 = vmatmul.mubr.bf16.gmra.mrb[0].mxu0 %v611
      %v755 = vpop.f32.mrb[0].mxu0
      %v756 = vadd.f32 0.0, %v755
      %v757 = vpop.f32.mrb[0].mxu0
      %v758 = vpop.f32.mrb[0].mxu0
      %v759 = vadd.f32 0.0, %v758
      %v760 = vpop.f32.mrb[0].mxu0
      %761 = vmatprep.mubr.bf16.mxu0 0
      %762 = vmatmul.mubr.bf16.gmra.mrb[0].mxu0 %v614
      %v763 = vpop.f32.mrb[0].mxu0
      %v764 = vadd.f32 0.0, %v763
      %v765 = vpop.f32.mrb[0].mxu0
      %v766 = vpop.f32.mrb[0].mxu0
      %v767 = vadd.f32 0.0, %v766
      %v768 = vpop.f32.mrb[0].mxu0
      %769 = vmatprep.mubr.bf16.mxu0 0
      %770 = vmatmul.mubr.bf16.gmra.mrb[0].mxu0 %v617
      %v771 = vpop.f32.mrb[0].mxu0
      %v772 = vadd.f32 0.0, %v771
      %v773 = vpop.f32.mrb[0].mxu0
      %v774 = vpop.f32.mrb[0].mxu0
      %v775 = vadd.f32 0.0, %v774
      %v776 = vpop.f32.mrb[0].mxu0
      %777 = vmatprep.mubr.bf16.mxu0 0
      %778 = vmatmul.mubr.bf16.gmra.mrb[0].mxu0 %v620
      %v779 = vpop.f32.mrb[0].mxu0
      %v780 = vadd.f32 0.0, %v779
      %v781 = vpop.f32.mrb[0].mxu0
      %v782 = vpop.f32.mrb[0].mxu0
      %v783 = vadd.f32 0.0, %v782
      %v784 = vpop.f32.mrb[0].mxu0
      %785 = vmatprep.mubr.bf16.mxu0 0
      %786 = vmatmul.mubr.bf16.gmra.mrb[0].mxu0 %v623
      %v787 = vpop.f32.mrb[0].mxu0
      %v788 = vadd.f32 0.0, %v787
      %v789 = vpop.f32.mrb[0].mxu0
      %v790 = vpop.f32.mrb[0].mxu0
      %v791 = vadd.f32 0.0, %v790
      %v792 = vpop.f32.mrb[0].mxu0
      %793 = vmatprep.mubr.bf16.mxu0 0
      %794 = vmatmul.mubr.bf16.gmra.mrb[0].mxu0 %v626
      %v795 = vpop.f32.mrb[0].mxu0
      %v796 = vadd.f32 0.0, %v795
      %v797 = vpop.f32.mrb[0].mxu0
      %v798 = vpop.f32.mrb[0].mxu0
      %v799 = vadd.f32 0.0, %v798
      %v800 = vpop.f32.mrb[0].mxu0
      %801 = vmatprep.mubr.bf16.mxu0 0
      %802 = vmatmul.mubr.bf16.gmra.mrb[0].mxu0 %v629
      %v803 = vpop.f32.mrb[0].mxu0
      %v804 = vadd.f32 0.0, %v803
      %v805 = vpop.f32.mrb[0].mxu0
      %v806 = vpop.f32.mrb[0].mxu0
      %v807 = vadd.f32 0.0, %v806
      %v808 = vpop.f32.mrb[0].mxu0
      %809 = vmatprep.mubr.bf16.mxu0 0
      %810 = vmatmul.mubr.bf16.gmra.mrb[0].mxu0 %v632
      %v811 = vpop.f32.mrb[0].mxu0
      %v812 = vadd.f32 0.0, %v811
      %v813 = vpop.f32.mrb[0].mxu0
      %v814 = vpop.f32.mrb[0].mxu0
      %v815 = vadd.f32 0.0, %v814
      %v816 = vpop.f32.mrb[0].mxu0
      %817 = vmatprep.mubr.bf16.mxu0 0
      %818 = vmatmul.mubr.bf16.gmra.mrb[0].mxu0 %v635
      %v819 = vpop.f32.mrb[0].mxu0
      %v820 = vadd.f32 0.0, %v819
      %v821 = vpop.f32.mrb[0].mxu0
      %v822 = vpop.f32.mrb[0].mxu0
      %v823 = vadd.f32 0.0, %v822
      %v824 = vpop.f32.mrb[0].mxu0
      %825 = vmatprep.mubr.bf16.mxu0 0
      %826 = vmatmul.mubr.bf16.gmra.mrb[0].mxu0 %v638
      %v827 = vpop.f32.mrb[0].mxu0
      %v828 = vadd.f32 0.0, %v827
      %v829 = vpop.f32.mrb[0].mxu0
      %v830 = vpop.f32.mrb[0].mxu0
      %v831 = vadd.f32 0.0, %v830
      %v832 = vpop.f32.mrb[0].mxu0
      %833 = vmatprep.mubr.bf16.mxu0 0
      %834 = vmatmul.mubr.bf16.gmra.mrb[0].mxu0 %v641
      %v835 = vpop.f32.mrb[0].mxu0
      %v836 = vadd.f32 0.0, %v835
      %v837 = vpop.f32.mrb[0].mxu0
      %v838 = vpop.f32.mrb[0].mxu0
      %v839 = vadd.f32 0.0, %v838
      %v840 = vpop.f32.mrb[0].mxu0
      %841 = vmatprep.mubr.bf16.mxu0 0
      %842 = vmatmul.mubr.bf16.gmra.mrb[0].mxu0 %v644
      %v843 = vpop.f32.mrb[0].mxu0
      %v844 = vadd.f32 0.0, %v843
      %v845 = vpop.f32.mrb[0].mxu0
      %v846 = vpop.f32.mrb[0].mxu0
      %v847 = vadd.f32 0.0, %v846
      %v848 = vpop.f32.mrb[0].mxu0
      %849 = vmatprep.mubr.bf16.mxu0 0
      %850 = vmatmul.mubr.bf16.gmra.mrb[0].mxu0 %v647
      %v851 = vpop.f32.mrb[0].mxu0
      %v852 = vadd.f32 0.0, %v851
      %v853 = vpop.f32.mrb[0].mxu0
      %v854 = vpop.f32.mrb[0].mxu0
      %v855 = vadd.f32 0.0, %v854
      %v856 = vpop.f32.mrb[0].mxu0
      %857 = vmatprep.mubr.bf16.mxu0 0
      %858 = vmatmul.mubr.bf16.gmra.mrb[0].mxu0 %v650
      %v859 = vpop.f32.mrb[0].mxu0
      %v860 = vadd.f32 0.0, %v859
      %v861 = vpop.f32.mrb[0].mxu0
      %v862 = vpop.f32.mrb[0].mxu0
      %v863 = vadd.f32 0.0, %v862
      %v864 = vpop.f32.mrb[0].mxu0
      %865 = vmatprep.mubr.bf16.mxu0 0
      %866 = vmatmul.mubr.bf16.gmra.mrb[0].mxu0 %v653
      %v867 = vpop.f32.mrb[0].mxu0
      %v868 = vadd.f32 0.0, %v867
      %v869 = vpop.f32.mrb[0].mxu0
      %v870 = vpop.f32.mrb[0].mxu0
      %v871 = vadd.f32 0.0, %v870
      %v872 = vpop.f32.mrb[0].mxu0
      %873 = vmatprep.mubr.bf16.mxu0 0
      %874 = vmatmul.mubr.bf16.gmra.mrb[0].mxu0 %v656
      %v875 = vpop.f32.mrb[0].mxu0
      %v876 = vadd.f32 0.0, %v875
      %v877 = vpop.f32.mrb[0].mxu0
      %v878 = vpop.f32.mrb[0].mxu0
      %v879 = vadd.f32 0.0, %v878
      %v880 = vpop.f32.mrb[0].mxu0
      %881 = vmatprep.mubr.bf16.mxu0 0
      %882 = vmatmul.mubr.bf16.gmra.mrb[0].mxu0 %v659
      %v883 = vpop.f32.mrb[0].mxu0
      %v884 = vadd.f32 0.0, %v883
      %v885 = vpop.f32.mrb[0].mxu0
      %v886 = vpop.f32.mrb[0].mxu0
      %v887 = vadd.f32 0.0, %v886
      %v888 = vpop.f32.mrb[0].mxu0
      %889 = vmatprep.mubr.bf16.mxu0 0
      %890 = vmatmul.mubr.bf16.gmra.mrb[0].mxu0 %v662
      %v891 = vpop.f32.mrb[0].mxu0
      %v892 = vadd.f32 0.0, %v891
      %v893 = vpop.f32.mrb[0].mxu0
      %v894 = vpop.f32.mrb[0].mxu0
      %v895 = vadd.f32 0.0, %v894
      %v896 = vpop.f32.mrb[0].mxu0
      %897 = vmatprep.mubr.bf16.mxu0 0
      %898 = vmatmul.mubr.bf16.gmra.mrb[0].mxu0 %v665
      %v899 = vpop.f32.mrb[0].mxu0
      %v900 = vadd.f32 0.0, %v899
      %v901 = vpop.f32.mrb[0].mxu0
      %v902 = vpop.f32.mrb[0].mxu0
      %v903 = vadd.f32 0.0, %v902
      %v904 = vpop.f32.mrb[0].mxu0
      %905 = vmatprep.mubr.bf16.mxu0 0
      %906 = vmatmul.mubr.bf16.gmra.mrb[0].mxu0 %v668
      %v907 = vpop.f32.mrb[0].mxu0
      %v908 = vadd.f32 0.0, %v907
      %v909 = vpop.f32.mrb[0].mxu0
      %v910 = vpop.f32.mrb[0].mxu0
      %v911 = vadd.f32 0.0, %v910
      %v912 = vpop.f32.mrb[0].mxu0
      %913 = vmatprep.mubr.bf16.mxu0 0
      %914 = vmatmul.mubr.bf16.gmra.mrb[0].mxu0 %v671
      %v915 = vpop.f32.mrb[0].mxu0
      %v916 = vadd.f32 0.0, %v915
      %v917 = vpop.f32.mrb[0].mxu0
      %v918 = vpop.f32.mrb[0].mxu0
      %v919 = vadd.f32 0.0, %v918
      %v920 = vpop.f32.mrb[0].mxu0
      %921 = vmatprep.mubr.bf16.mxu0 0
      %922 = vmatmul.mubr.bf16.gmra.mrb[0].mxu0 %v674
      %v923 = vpop.f32.mrb[0].mxu0
      %v924 = vadd.f32 0.0, %v923
      %v925 = vpop.f32.mrb[0].mxu0
      %v926 = vpop.f32.mrb[0].mxu0
      %v927 = vadd.f32 0.0, %v926
      %v928 = vpop.f32.mrb[0].mxu0
      %929 = vmatprep.mubr.bf16.mxu0 0
      %930 = vmatmul.mubr.bf16.gmra.mrb[0].mxu0 %v677
      %v931 = vpop.f32.mrb[0].mxu0
      %v932 = vadd.f32 0.0, %v931
      %v933 = vpop.f32.mrb[0].mxu0
      %v934 = vpop.f32.mrb[0].mxu0
      %v935 = vadd.f32 0.0, %v934
      %v936 = vpop.f32.mrb[0].mxu0
      %937 = vmatprep.mubr.bf16.mxu0 0
      %938 = vmatmul.mubr.bf16.gmra.mrb[0].mxu0 %v680
      %v939 = vpop.f32.mrb[0].mxu0
      %v940 = vadd.f32 0.0, %v939
      %v941 = vpop.f32.mrb[0].mxu0
      %v942 = vpop.f32.mrb[0].mxu0
      %v943 = vadd.f32 0.0, %v942
      %v944 = vpop.f32.mrb[0].mxu0
      %945 = vmatprep.mubr.bf16.mxu0 0
      %946 = vmatmul.mubr.bf16.gmra.mrb[0].mxu0 %v683
      %v947 = vpop.f32.mrb[0].mxu0
      %v948 = vadd.f32 0.0, %v947
      %v949 = vpop.f32.mrb[0].mxu0
      %v950 = vpop.f32.mrb[0].mxu0
      %v951 = vadd.f32 0.0, %v950
      %v952 = vpop.f32.mrb[0].mxu0
      %953 = vmatprep.mubr.bf16.mxu0 0
      %954 = vmatmul.mubr.bf16.gmra.mrb[0].mxu0 %v686
      %v955 = vpop.f32.mrb[0].mxu0
      %v956 = vadd.f32 0.0, %v955
      %v957 = vpop.f32.mrb[0].mxu0
      %v958 = vpop.f32.mrb[0].mxu0
      %v959 = vadd.f32 0.0, %v958
      %v960 = vpop.f32.mrb[0].mxu0
      %961 = vmatprep.mubr.bf16.mxu0 0
      %962 = vmatmul.mubr.bf16.gmra.mrb[0].mxu0 %v689
      %v963 = vpop.f32.mrb[0].mxu0
      %v964 = vadd.f32 0.0, %v963
      %v965 = vpop.f32.mrb[0].mxu0
      %v966 = vpop.f32.mrb[0].mxu0
      %v967 = vadd.f32 0.0, %v966
      %v968 = vpop.f32.mrb[0].mxu0
      %969 = vmatprep.mubr.bf16.mxu0 0
      %970 = vmatmul.mubr.bf16.gmra.mrb[0].mxu0 %v692
      %v971 = vpop.f32.mrb[0].mxu0
      %v972 = vadd.f32 0.0, %v971
      %v973 = vpop.f32.mrb[0].mxu0
      %v974 = vpop.f32.mrb[0].mxu0
      %v975 = vadd.f32 0.0, %v974
      %v976 = vpop.f32.mrb[0].mxu0
      %977 = vmatprep.mubr.bf16.mxu0 0
      %978 = vmatmul.mubr.bf16.gmra.mrb[0].mxu0 %v695
      %v979 = vpop.f32.mrb[0].mxu0
      %v980 = vadd.f32 0.0, %v979
      %v981 = vpop.f32.mrb[0].mxu0
      %v982 = vpop.f32.mrb[0].mxu0
      %v983 = vadd.f32 0.0, %v982
      %v984 = vpop.f32.mrb[0].mxu0
      %985 = vdwg.mxu0
      %v986 = vadd.f32 %v288, %v732
      %v987 = vadd.f32 %v289, %v735
      %v988 = vadd.f32 %v290, %v740
      %v989 = vadd.f32 %v291, %v743
      %v990 = vadd.f32 %v292, %v748
      %v991 = vadd.f32 %v293, %v751
      %v992 = vadd.f32 %v294, %v756
      %v993 = vadd.f32 %v295, %v759
      %v994 = vadd.f32 %v296, %v764
      %v995 = vadd.f32 %v297, %v767
      %v996 = vadd.f32 %v298, %v772
      %v997 = vadd.f32 %v299, %v775
      %v998 = vadd.f32 %v300, %v780
      %v999 = vadd.f32 %v301, %v783
      %v1000 = vadd.f32 %v302, %v788
      %v1001 = vadd.f32 %v303, %v791
      %v1002 = vadd.f32 %v304, %v796
      %v1003 = vadd.f32 %v305, %v799
      %v1004 = vadd.f32 %v306, %v804
      %v1005 = vadd.f32 %v307, %v807
      %v1006 = vadd.f32 %v308, %v812
      %v1007 = vadd.f32 %v309, %v815
      %v1008 = vadd.f32 %v310, %v820
      %v1009 = vadd.f32 %v311, %v823
      %v1010 = vadd.f32 %v312, %v828
      %v1011 = vadd.f32 %v313, %v831
      %v1012 = vadd.f32 %v314, %v836
      %v1013 = vadd.f32 %v315, %v839
      %v1014 = vadd.f32 %v316, %v844
      %v1015 = vadd.f32 %v317, %v847
      %v1016 = vadd.f32 %v318, %v852
      %v1017 = vadd.f32 %v319, %v855
      %v1018 = vadd.f32 %v320, %v860
      %v1019 = vadd.f32 %v321, %v863
      %v1020 = vadd.f32 %v322, %v868
      %v1021 = vadd.f32 %v323, %v871
      %v1022 = vadd.f32 %v324, %v876
      %v1023 = vadd.f32 %v325, %v879
      %v1024 = vadd.f32 %v326, %v884
      %v1025 = vadd.f32 %v327, %v887
      %v1026 = vadd.f32 %v328, %v892
      %v1027 = vadd.f32 %v329, %v895
      %v1028 = vadd.f32 %v330, %v900
      %v1029 = vadd.f32 %v331, %v903
      %v1030 = vadd.f32 %v332, %v908
      %v1031 = vadd.f32 %v333, %v911
      %v1032 = vadd.f32 %v334, %v916
      %v1033 = vadd.f32 %v335, %v919
      %v1034 = vadd.f32 %v336, %v924
      %v1035 = vadd.f32 %v337, %v927
      %v1036 = vadd.f32 %v338, %v932
      %v1037 = vadd.f32 %v339, %v935
      %v1038 = vadd.f32 %v340, %v940
      %v1039 = vadd.f32 %v341, %v943
      %v1040 = vadd.f32 %v342, %v948
      %v1041 = vadd.f32 %v343, %v951
      %v1042 = vadd.f32 %v344, %v956
      %v1043 = vadd.f32 %v345, %v959
      %v1044 = vadd.f32 %v346, %v964
      %v1045 = vadd.f32 %v347, %v967
      %v1046 = vadd.f32 %v348, %v972
      %v1047 = vadd.f32 %v349, %v975
      %v1048 = vadd.f32 %v350, %v980
      %v1049 = vadd.f32 %v351, %v983
      %1050 = vst [vmem:[#allocation2] sm:$0xff] %v986
      %1051 = vst [vmem:[#allocation2 + $0x8] sm:$0xff] %v987
      %1052 = vst [vmem:[#allocation2 + $0x10] sm:$0xff] %v988
      %1053 = vst [vmem:[#allocation2 + $0x18] sm:$0xff] %v989
      %1054 = vst [vmem:[#allocation2 + $0x20] sm:$0xff] %v990
      %1055 = vst [vmem:[#allocation2 + $0x28] sm:$0xff] %v991
      %1056 = vst [vmem:[#allocation2 + $0x30] sm:$0xff] %v992
      %1057 = vst [vmem:[#allocation2 + $0x38] sm:$0xff] %v993
      %1058 = vst [vmem:[#allocation2 + $0x40] sm:$0xff] %v994
      %1059 = vst [vmem:[#allocation2 + $0x48] sm:$0xff] %v995
      %1060 = vst [vmem:[#allocation2 + $0x50] sm:$0xff] %v996
      %1061 = vst [vmem:[#allocation2 + $0x58] sm:$0xff] %v997
      %1062 = vst [vmem:[#allocation2 + $0x60] sm:$0xff] %v998
      %1063 = vst [vmem:[#allocation2 + $0x68] sm:$0xff] %v999
      %1064 = vst [vmem:[#allocation2 + $0x70] sm:$0xff] %v1000
      %1065 = vst [vmem:[#allocation2 + $0x78] sm:$0xff] %v1001
      %1066 = vst [vmem:[#allocation2 + $0x80] sm:$0xff] %v1002
      %1067 = vst [vmem:[#allocation2 + $0x88] sm:$0xff] %v1003
      %1068 = vst [vmem:[#allocation2 + $0x90] sm:$0xff] %v1004
      %1069 = vst [vmem:[#allocation2 + $0x98] sm:$0xff] %v1005
      %1070 = vst [vmem:[#allocation2 + $0xa0] sm:$0xff] %v1006
      %1071 = vst [vmem:[#allocation2 + $0xa8] sm:$0xff] %v1007
      %1072 = vst [vmem:[#allocation2 + $0xb0] sm:$0xff] %v1008
      %1073 = vst [vmem:[#allocation2 + $0xb8] sm:$0xff] %v1009
      %1074 = vst [vmem:[#allocation2 + $0xc0] sm:$0xff] %v1010
      %1075 = vst [vmem:[#allocation2 + $0xc8] sm:$0xff] %v1011
      %1076 = vst [vmem:[#allocation2 + $0xd0] sm:$0xff] %v1012
      %1077 = vst [vmem:[#allocation2 + $0xd8] sm:$0xff] %v1013
      %1078 = vst [vmem:[#allocation2 + $0xe0] sm:$0xff] %v1014
      %1079 = vst [vmem:[#allocation2 + $0xe8] sm:$0xff] %v1015
      %1080 = vst [vmem:[#allocation2 + $0xf0] sm:$0xff] %v1016
      %1081 = vst [vmem:[#allocation2 + $0xf8] sm:$0xff] %v1017
      %1082 = vst [vmem:[#allocation2 + $0x100] sm:$0xff] %v1018
      %1083 = vst [vmem:[#allocation2 + $0x108] sm:$0xff] %v1019
      %1084 = vst [vmem:[#allocation2 + $0x110] sm:$0xff] %v1020
      %1085 = vst [vmem:[#allocation2 + $0x118] sm:$0xff] %v1021
      %1086 = vst [vmem:[#allocation2 + $0x120] sm:$0xff] %v1022
      %1087 = vst [vmem:[#allocation2 + $0x128] sm:$0xff] %v1023
      %1088 = vst [vmem:[#allocation2 + $0x130] sm:$0xff] %v1024
      %1089 = vst [vmem:[#allocation2 + $0x138] sm:$0xff] %v1025
      %1090 = vst [vmem:[#allocation2 + $0x140] sm:$0xff] %v1026
      %1091 = vst [vmem:[#allocation2 + $0x148] sm:$0xff] %v1027
      %1092 = vst [vmem:[#allocation2 + $0x150] sm:$0xff] %v1028
      %1093 = vst [vmem:[#allocation2 + $0x158] sm:$0xff] %v1029
      %1094 = vst [vmem:[#allocation2 + $0x160] sm:$0xff] %v1030
      %1095 = vst [vmem:[#allocation2 + $0x168] sm:$0xff] %v1031
      %1096 = vst [vmem:[#allocation2 + $0x170] sm:$0xff] %v1032
      %1097 = vst [vmem:[#allocation2 + $0x178] sm:$0xff] %v1033
      %1098 = vst [vmem:[#allocation2 + $0x180] sm:$0xff] %v1034
      %1099 = vst [vmem:[#allocation2 + $0x188] sm:$0xff] %v1035
      %1100 = vst [vmem:[#allocation2 + $0x190] sm:$0xff] %v1036
      %1101 = vst [vmem:[#allocation2 + $0x198] sm:$0xff] %v1037
      %1102 = vst [vmem:[#allocation2 + $0x1a0] sm:$0xff] %v1038
      %1103 = vst [vmem:[#allocation2 + $0x1a8] sm:$0xff] %v1039
      %1104 = vst [vmem:[#allocation2 + $0x1b0] sm:$0xff] %v1040
      %1105 = vst [vmem:[#allocation2 + $0x1b8] sm:$0xff] %v1041
      %1106 = vst [vmem:[#allocation2 + $0x1c0] sm:$0xff] %v1042
      %1107 = vst [vmem:[#allocation2 + $0x1c8] sm:$0xff] %v1043
      %1108 = vst [vmem:[#allocation2 + $0x1d0] sm:$0xff] %v1044
      %1109 = vst [vmem:[#allocation2 + $0x1d8] sm:$0xff] %v1045
      %1110 = vst [vmem:[#allocation2 + $0x1e0] sm:$0xff] %v1046
      %1111 = vst [vmem:[#allocation2 + $0x1e8] sm:$0xff] %v1047
      %1112 = vst [vmem:[#allocation2 + $0x1f0] sm:$0xff] %v1048
      %1113 = vst [vmem:[#allocation2 + $0x1f8] sm:$0xff] %v1049
      // Predicated region
      $region37: #{discriminator_forward.8} parent=31 // pred_check
        %p1114 = pneg %p220
      $region38: #{discriminator_forward.8} parent=31 // pred_check_branch
        %1116 = sbr.rel (%p1114) target = $region40
      $region39: #{discriminator_forward.8} parent=31 // pred_region
        %v1117 = vld [vmem:[#allocation2] sm:$0xff]
        %v1118 = vld [vmem:[#allocation2 + $0x8] sm:$0xff]
        %v1119 = vld [vmem:[#allocation2 + $0x10] sm:$0xff]
        %v1120 = vld [vmem:[#allocation2 + $0x18] sm:$0xff]
        %v1121 = vld [vmem:[#allocation2 + $0x20] sm:$0xff]
        %v1122 = vld [vmem:[#allocation2 + $0x28] sm:$0xff]
        %v1123 = vld [vmem:[#allocation2 + $0x30] sm:$0xff]
        %v1124 = vld [vmem:[#allocation2 + $0x38] sm:$0xff]
        %v1125 = vld [vmem:[#allocation2 + $0x40] sm:$0xff]
        %v1126 = vld [vmem:[#allocation2 + $0x48] sm:$0xff]
        %v1127 = vld [vmem:[#allocation2 + $0x50] sm:$0xff]
        %v1128 = vld [vmem:[#allocation2 + $0x58] sm:$0xff]
        %v1129 = vld [vmem:[#allocation2 + $0x60] sm:$0xff]
        %v1130 = vld [vmem:[#allocation2 + $0x68] sm:$0xff]
        %v1131 = vld [vmem:[#allocation2 + $0x70] sm:$0xff]
        %v1132 = vld [vmem:[#allocation2 + $0x78] sm:$0xff]
        %v1133 = vld [vmem:[#allocation2 + $0x80] sm:$0xff]
        %v1134 = vld [vmem:[#allocation2 + $0x88] sm:$0xff]
        %v1135 = vld [vmem:[#allocation2 + $0x90] sm:$0xff]
        %v1136 = vld [vmem:[#allocation2 + $0x98] sm:$0xff]
        %v1137 = vld [vmem:[#allocation2 + $0xa0] sm:$0xff]
        %v1138 = vld [vmem:[#allocation2 + $0xa8] sm:$0xff]
        %v1139 = vld [vmem:[#allocation2 + $0xb0] sm:$0xff]
        %v1140 = vld [vmem:[#allocation2 + $0xb8] sm:$0xff]
        %v1141 = vld [vmem:[#allocation2 + $0xc0] sm:$0xff]
        %v1142 = vld [vmem:[#allocation2 + $0xc8] sm:$0xff]
        %v1143 = vld [vmem:[#allocation2 + $0xd0] sm:$0xff]
        %v1144 = vld [vmem:[#allocation2 + $0xd8] sm:$0xff]
        %v1145 = vld [vmem:[#allocation2 + $0xe0] sm:$0xff]
        %v1146 = vld [vmem:[#allocation2 + $0xe8] sm:$0xff]
        %v1147 = vld [vmem:[#allocation2 + $0xf0] sm:$0xff]
        %v1148 = vld [vmem:[#allocation2 + $0xf8] sm:$0xff]
        %v1149 = vld [vmem:[#allocation2 + $0x100] sm:$0xff]
        %v1150 = vld [vmem:[#allocation2 + $0x108] sm:$0xff]
        %v1151 = vld [vmem:[#allocation2 + $0x110] sm:$0xff]
        %v1152 = vld [vmem:[#allocation2 + $0x118] sm:$0xff]
        %v1153 = vld [vmem:[#allocation2 + $0x120] sm:$0xff]
        %v1154 = vld [vmem:[#allocation2 + $0x128] sm:$0xff]
        %v1155 = vld [vmem:[#allocation2 + $0x130] sm:$0xff]
        %v1156 = vld [vmem:[#allocation2 + $0x138] sm:$0xff]
        %v1157 = vld [vmem:[#allocation2 + $0x140] sm:$0xff]
        %v1158 = vld [vmem:[#allocation2 + $0x148] sm:$0xff]
        %v1159 = vld [vmem:[#allocation2 + $0x150] sm:$0xff]
        %v1160 = vld [vmem:[#allocation2 + $0x158] sm:$0xff]
        %v1161 = vld [vmem:[#allocation2 + $0x160] sm:$0xff]
        %v1162 = vld [vmem:[#allocation2 + $0x168] sm:$0xff]
        %v1163 = vld [vmem:[#allocation2 + $0x170] sm:$0xff]
        %v1164 = vld [vmem:[#allocation2 + $0x178] sm:$0xff]
        %v1165 = vld [vmem:[#allocation2 + $0x180] sm:$0xff]
        %v1166 = vld [vmem:[#allocation2 + $0x188] sm:$0xff]
        %v1167 = vld [vmem:[#allocation2 + $0x190] sm:$0xff]
        %v1168 = vld [vmem:[#allocation2 + $0x198] sm:$0xff]
        %v1169 = vld [vmem:[#allocation2 + $0x1a0] sm:$0xff]
        %v1170 = vld [vmem:[#allocation2 + $0x1a8] sm:$0xff]
        %v1171 = vld [vmem:[#allocation2 + $0x1b0] sm:$0xff]
        %v1172 = vld [vmem:[#allocation2 + $0x1b8] sm:$0xff]
        %v1173 = vld [vmem:[#allocation2 + $0x1c0] sm:$0xff]
        %v1174 = vld [vmem:[#allocation2 + $0x1c8] sm:$0xff]
        %v1175 = vld [vmem:[#allocation2 + $0x1d0] sm:$0xff]
        %v1176 = vld [vmem:[#allocation2 + $0x1d8] sm:$0xff]
        %v1177 = vld [vmem:[#allocation2 + $0x1e0] sm:$0xff]
        %v1178 = vld [vmem:[#allocation2 + $0x1e8] sm:$0xff]
        %v1179 = vld [vmem:[#allocation2 + $0x1f0] sm:$0xff]
        %v1180 = vld [vmem:[#allocation2 + $0x1f8] sm:$0xff]
        %v1181 = vld [vmem:[%s2] sm:$0x1]
        %v1183 = vlaneseq
        %v1184 = vshrl.u32 %v1183, 7
        %v1185 = vsub.s32 0, %v1184
        %v1186 = vrot.slane %v1181, %v1185
        %v1188 = vadd.f32 %v1117, %v1186
        %v1189 = vadd.f32 %v1118, %v1186
        %v1190 = vadd.f32 %v1119, %v1186
        %v1191 = vadd.f32 %v1120, %v1186
        %v1192 = vadd.f32 %v1121, %v1186
        %v1193 = vadd.f32 %v1122, %v1186
        %v1194 = vadd.f32 %v1123, %v1186
        %v1195 = vadd.f32 %v1124, %v1186
        %v1196 = vadd.f32 %v1125, %v1186
        %v1197 = vadd.f32 %v1126, %v1186
        %v1198 = vadd.f32 %v1127, %v1186
        %v1199 = vadd.f32 %v1128, %v1186
        %v1200 = vadd.f32 %v1129, %v1186
        %v1201 = vadd.f32 %v1130, %v1186
        %v1202 = vadd.f32 %v1131, %v1186
        %v1203 = vadd.f32 %v1132, %v1186
        %v1204 = vadd.f32 %v1133, %v1186
        %v1205 = vadd.f32 %v1134, %v1186
        %v1206 = vadd.f32 %v1135, %v1186
        %v1207 = vadd.f32 %v1136, %v1186
        %v1208 = vadd.f32 %v1137, %v1186
        %v1209 = vadd.f32 %v1138, %v1186
        %v1210 = vadd.f32 %v1139, %v1186
        %v1211 = vadd.f32 %v1140, %v1186
        %v1212 = vadd.f32 %v1141, %v1186
        %v1213 = vadd.f32 %v1142, %v1186
        %v1214 = vadd.f32 %v1143, %v1186
        %v1215 = vadd.f32 %v1144, %v1186
        %v1216 = vadd.f32 %v1145, %v1186
        %v1217 = vadd.f32 %v1146, %v1186
        %v1218 = vadd.f32 %v1147, %v1186
        %v1219 = vadd.f32 %v1148, %v1186
        %v1220 = vadd.f32 %v1149, %v1186
        %v1221 = vadd.f32 %v1150, %v1186
        %v1222 = vadd.f32 %v1151, %v1186
        %v1223 = vadd.f32 %v1152, %v1186
        %v1224 = vadd.f32 %v1153, %v1186
        %v1225 = vadd.f32 %v1154, %v1186
        %v1226 = vadd.f32 %v1155, %v1186
        %v1227 = vadd.f32 %v1156, %v1186
        %v1228 = vadd.f32 %v1157, %v1186
        %v1229 = vadd.f32 %v1158, %v1186
        %v1230 = vadd.f32 %v1159, %v1186
        %v1231 = vadd.f32 %v1160, %v1186
        %v1232 = vadd.f32 %v1161, %v1186
        %v1233 = vadd.f32 %v1162, %v1186
        %v1234 = vadd.f32 %v1163, %v1186
        %v1235 = vadd.f32 %v1164, %v1186
        %v1236 = vadd.f32 %v1165, %v1186
        %v1237 = vadd.f32 %v1166, %v1186
        %v1238 = vadd.f32 %v1167, %v1186
        %v1239 = vadd.f32 %v1168, %v1186
        %v1240 = vadd.f32 %v1169, %v1186
        %v1241 = vadd.f32 %v1170, %v1186
        %v1242 = vadd.f32 %v1171, %v1186
        %v1243 = vadd.f32 %v1172, %v1186
        %v1244 = vadd.f32 %v1173, %v1186
        %v1245 = vadd.f32 %v1174, %v1186
        %v1246 = vadd.f32 %v1175, %v1186
        %v1247 = vadd.f32 %v1176, %v1186
        %v1248 = vadd.f32 %v1177, %v1186
        %v1249 = vadd.f32 %v1178, %v1186
        %v1250 = vadd.f32 %v1179, %v1186
        %v1251 = vadd.f32 %v1180, %v1186
        %vm1252 = vcmp.ge.f32.partialorder %v1188, 0.0
        %vm1253 = vcmp.ge.f32.partialorder %v1189, 0.0
        %vm1254 = vcmp.ge.f32.partialorder %v1190, 0.0
        %vm1255 = vcmp.ge.f32.partialorder %v1191, 0.0
        %vm1256 = vcmp.ge.f32.partialorder %v1192, 0.0
        %vm1257 = vcmp.ge.f32.partialorder %v1193, 0.0
        %vm1258 = vcmp.ge.f32.partialorder %v1194, 0.0
        %vm1259 = vcmp.ge.f32.partialorder %v1195, 0.0
        %vm1260 = vcmp.ge.f32.partialorder %v1196, 0.0
        %vm1261 = vcmp.ge.f32.partialorder %v1197, 0.0
        %vm1262 = vcmp.ge.f32.partialorder %v1198, 0.0
        %vm1263 = vcmp.ge.f32.partialorder %v1199, 0.0
        %vm1264 = vcmp.ge.f32.partialorder %v1200, 0.0
        %vm1265 = vcmp.ge.f32.partialorder %v1201, 0.0
        %vm1266 = vcmp.ge.f32.partialorder %v1202, 0.0
        %vm1267 = vcmp.ge.f32.partialorder %v1203, 0.0
        %vm1268 = vcmp.ge.f32.partialorder %v1204, 0.0
        %vm1269 = vcmp.ge.f32.partialorder %v1205, 0.0
        %vm1270 = vcmp.ge.f32.partialorder %v1206, 0.0
        %vm1271 = vcmp.ge.f32.partialorder %v1207, 0.0
        %vm1272 = vcmp.ge.f32.partialorder %v1208, 0.0
        %vm1273 = vcmp.ge.f32.partialorder %v1209, 0.0
        %vm1274 = vcmp.ge.f32.partialorder %v1210, 0.0
        %vm1275 = vcmp.ge.f32.partialorder %v1211, 0.0
        %vm1276 = vcmp.ge.f32.partialorder %v1212, 0.0
        %vm1277 = vcmp.ge.f32.partialorder %v1213, 0.0
        %vm1278 = vcmp.ge.f32.partialorder %v1214, 0.0
        %vm1279 = vcmp.ge.f32.partialorder %v1215, 0.0
        %vm1280 = vcmp.ge.f32.partialorder %v1216, 0.0
        %vm1281 = vcmp.ge.f32.partialorder %v1217, 0.0
        %vm1282 = vcmp.ge.f32.partialorder %v1218, 0.0
        %vm1283 = vcmp.ge.f32.partialorder %v1219, 0.0
        %vm1284 = vcmp.ge.f32.partialorder %v1220, 0.0
        %vm1285 = vcmp.ge.f32.partialorder %v1221, 0.0
        %vm1286 = vcmp.ge.f32.partialorder %v1222, 0.0
        %vm1287 = vcmp.ge.f32.partialorder %v1223, 0.0
        %vm1288 = vcmp.ge.f32.partialorder %v1224, 0.0
        %vm1289 = vcmp.ge.f32.partialorder %v1225, 0.0
        %vm1290 = vcmp.ge.f32.partialorder %v1226, 0.0
        %vm1291 = vcmp.ge.f32.partialorder %v1227, 0.0
        %vm1292 = vcmp.ge.f32.partialorder %v1228, 0.0
        %vm1293 = vcmp.ge.f32.partialorder %v1229, 0.0
        %vm1294 = vcmp.ge.f32.partialorder %v1230, 0.0
        %vm1295 = vcmp.ge.f32.partialorder %v1231, 0.0
        %vm1296 = vcmp.ge.f32.partialorder %v1232, 0.0
        %vm1297 = vcmp.ge.f32.partialorder %v1233, 0.0
        %vm1298 = vcmp.ge.f32.partialorder %v1234, 0.0
        %vm1299 = vcmp.ge.f32.partialorder %v1235, 0.0
        %vm1300 = vcmp.ge.f32.partialorder %v1236, 0.0
        %vm1301 = vcmp.ge.f32.partialorder %v1237, 0.0
        %vm1302 = vcmp.ge.f32.partialorder %v1238, 0.0
        %vm1303 = vcmp.ge.f32.partialorder %v1239, 0.0
        %vm1304 = vcmp.ge.f32.partialorder %v1240, 0.0
        %vm1305 = vcmp.ge.f32.partialorder %v1241, 0.0
        %vm1306 = vcmp.ge.f32.partialorder %v1242, 0.0
        %vm1307 = vcmp.ge.f32.partialorder %v1243, 0.0
        %vm1308 = vcmp.ge.f32.partialorder %v1244, 0.0
        %vm1309 = vcmp.ge.f32.partialorder %v1245, 0.0
        %vm1310 = vcmp.ge.f32.partialorder %v1246, 0.0
        %vm1311 = vcmp.ge.f32.partialorder %v1247, 0.0
        %vm1312 = vcmp.ge.f32.partialorder %v1248, 0.0
        %vm1313 = vcmp.ge.f32.partialorder %v1249, 0.0
        %vm1314 = vcmp.ge.f32.partialorder %v1250, 0.0
        %vm1315 = vcmp.ge.f32.partialorder %v1251, 0.0
        %v1316 = vmul.f32 %v1188, 0.2
        %v1317 = vmul.f32 %v1189, 0.2
        %v1318 = vmul.f32 %v1190, 0.2
        %v1319 = vmul.f32 %v1191, 0.2
        %v1320 = vmul.f32 %v1192, 0.2
        %v1321 = vmul.f32 %v1193, 0.2
        %v1322 = vmul.f32 %v1194, 0.2
        %v1323 = vmul.f32 %v1195, 0.2
        %v1324 = vmul.f32 %v1196, 0.2
        %v1325 = vmul.f32 %v1197, 0.2
        %v1326 = vmul.f32 %v1198, 0.2
        %v1327 = vmul.f32 %v1199, 0.2
        %v1328 = vmul.f32 %v1200, 0.2
        %v1329 = vmul.f32 %v1201, 0.2
        %v1330 = vmul.f32 %v1202, 0.2
        %v1331 = vmul.f32 %v1203, 0.2
        %v1332 = vmul.f32 %v1204, 0.2
        %v1333 = vmul.f32 %v1205, 0.2
        %v1334 = vmul.f32 %v1206, 0.2
        %v1335 = vmul.f32 %v1207, 0.2
        %v1336 = vmul.f32 %v1208, 0.2
        %v1337 = vmul.f32 %v1209, 0.2
        %v1338 = vmul.f32 %v1210, 0.2
        %v1339 = vmul.f32 %v1211, 0.2
        %v1340 = vmul.f32 %v1212, 0.2
        %v1341 = vmul.f32 %v1213, 0.2
        %v1342 = vmul.f32 %v1214, 0.2
        %v1343 = vmul.f32 %v1215, 0.2
        %v1344 = vmul.f32 %v1216, 0.2
        %v1345 = vmul.f32 %v1217, 0.2
        %v1346 = vmul.f32 %v1218, 0.2
        %v1347 = vmul.f32 %v1219, 0.2
        %v1348 = vmul.f32 %v1220, 0.2
        %v1349 = vmul.f32 %v1221, 0.2
        %v1350 = vmul.f32 %v1222, 0.2
        %v1351 = vmul.f32 %v1223, 0.2
        %v1352 = vmul.f32 %v1224, 0.2
        %v1353 = vmul.f32 %v1225, 0.2
        %v1354 = vmul.f32 %v1226, 0.2
        %v1355 = vmul.f32 %v1227, 0.2
        %v1356 = vmul.f32 %v1228, 0.2
        %v1357 = vmul.f32 %v1229, 0.2
        %v1358 = vmul.f32 %v1230, 0.2
        %v1359 = vmul.f32 %v1231, 0.2
        %v1360 = vmul.f32 %v1232, 0.2
        %v1361 = vmul.f32 %v1233, 0.2
        %v1362 = vmul.f32 %v1234, 0.2
        %v1363 = vmul.f32 %v1235, 0.2
        %v1364 = vmul.f32 %v1236, 0.2
        %v1365 = vmul.f32 %v1237, 0.2
        %v1366 = vmul.f32 %v1238, 0.2
        %v1367 = vmul.f32 %v1239, 0.2
        %v1368 = vmul.f32 %v1240, 0.2
        %v1369 = vmul.f32 %v1241, 0.2
        %v1370 = vmul.f32 %v1242, 0.2
        %v1371 = vmul.f32 %v1243, 0.2
        %v1372 = vmul.f32 %v1244, 0.2
        %v1373 = vmul.f32 %v1245, 0.2
        %v1374 = vmul.f32 %v1246, 0.2
        %v1375 = vmul.f32 %v1247, 0.2
        %v1376 = vmul.f32 %v1248, 0.2
        %v1377 = vmul.f32 %v1249, 0.2
        %v1378 = vmul.f32 %v1250, 0.2
        %v1379 = vmul.f32 %v1251, 0.2
        %v1380 = vsel %vm1252, %v1188, %v1316
        %v1381 = vsel %vm1253, %v1189, %v1317
        %v1382 = vsel %vm1254, %v1190, %v1318
        %v1383 = vsel %vm1255, %v1191, %v1319
        %v1384 = vsel %vm1256, %v1192, %v1320
        %v1385 = vsel %vm1257, %v1193, %v1321
        %v1386 = vsel %vm1258, %v1194, %v1322
        %v1387 = vsel %vm1259, %v1195, %v1323
        %v1388 = vsel %vm1260, %v1196, %v1324
        %v1389 = vsel %vm1261, %v1197, %v1325
        %v1390 = vsel %vm1262, %v1198, %v1326
        %v1391 = vsel %vm1263, %v1199, %v1327
        %v1392 = vsel %vm1264, %v1200, %v1328
        %v1393 = vsel %vm1265, %v1201, %v1329
        %v1394 = vsel %vm1266, %v1202, %v1330
        %v1395 = vsel %vm1267, %v1203, %v1331
        %v1396 = vsel %vm1268, %v1204, %v1332
        %v1397 = vsel %vm1269, %v1205, %v1333
        %v1398 = vsel %vm1270, %v1206, %v1334
        %v1399 = vsel %vm1271, %v1207, %v1335
        %v1400 = vsel %vm1272, %v1208, %v1336
        %v1401 = vsel %vm1273, %v1209, %v1337
        %v1402 = vsel %vm1274, %v1210, %v1338
        %v1403 = vsel %vm1275, %v1211, %v1339
        %v1404 = vsel %vm1276, %v1212, %v1340
        %v1405 = vsel %vm1277, %v1213, %v1341
        %v1406 = vsel %vm1278, %v1214, %v1342
        %v1407 = vsel %vm1279, %v1215, %v1343
        %v1408 = vsel %vm1280, %v1216, %v1344
        %v1409 = vsel %vm1281, %v1217, %v1345
        %v1410 = vsel %vm1282, %v1218, %v1346
        %v1411 = vsel %vm1283, %v1219, %v1347
        %v1412 = vsel %vm1284, %v1220, %v1348
        %v1413 = vsel %vm1285, %v1221, %v1349
        %v1414 = vsel %vm1286, %v1222, %v1350
        %v1415 = vsel %vm1287, %v1223, %v1351
        %v1416 = vsel %vm1288, %v1224, %v1352
        %v1417 = vsel %vm1289, %v1225, %v1353
        %v1418 = vsel %vm1290, %v1226, %v1354
        %v1419 = vsel %vm1291, %v1227, %v1355
        %v1420 = vsel %vm1292, %v1228, %v1356
        %v1421 = vsel %vm1293, %v1229, %v1357
        %v1422 = vsel %vm1294, %v1230, %v1358
        %v1423 = vsel %vm1295, %v1231, %v1359
        %v1424 = vsel %vm1296, %v1232, %v1360
        %v1425 = vsel %vm1297, %v1233, %v1361
        %v1426 = vsel %vm1298, %v1234, %v1362
        %v1427 = vsel %vm1299, %v1235, %v1363
        %v1428 = vsel %vm1300, %v1236, %v1364
        %v1429 = vsel %vm1301, %v1237, %v1365
        %v1430 = vsel %vm1302, %v1238, %v1366
        %v1431 = vsel %vm1303, %v1239, %v1367
        %v1432 = vsel %vm1304, %v1240, %v1368
        %v1433 = vsel %vm1305, %v1241, %v1369
        %v1434 = vsel %vm1306, %v1242, %v1370
        %v1435 = vsel %vm1307, %v1243, %v1371
        %v1436 = vsel %vm1308, %v1244, %v1372
        %v1437 = vsel %vm1309, %v1245, %v1373
        %v1438 = vsel %vm1310, %v1246, %v1374
        %v1439 = vsel %vm1311, %v1247, %v1375
        %v1440 = vsel %vm1312, %v1248, %v1376
        %v1441 = vsel %vm1313, %v1249, %v1377
        %v1442 = vsel %vm1314, %v1250, %v1378
        %v1443 = vsel %vm1315, %v1251, %v1379
        %v1444 = vpack.c.bf16 %v1381, %v1380
        %v1445 = vpack.c.bf16 %v1383, %v1382
        %v1446 = vpack.c.bf16 %v1385, %v1384
        %v1447 = vpack.c.bf16 %v1387, %v1386
        %v1448 = vpack.c.bf16 %v1389, %v1388
        %v1449 = vpack.c.bf16 %v1391, %v1390
        %v1450 = vpack.c.bf16 %v1393, %v1392
        %v1451 = vpack.c.bf16 %v1395, %v1394
        %v1452 = vpack.c.bf16 %v1397, %v1396
        %v1453 = vpack.c.bf16 %v1399, %v1398
        %v1454 = vpack.c.bf16 %v1401, %v1400
        %v1455 = vpack.c.bf16 %v1403, %v1402
        %v1456 = vpack.c.bf16 %v1405, %v1404
        %v1457 = vpack.c.bf16 %v1407, %v1406
        %v1458 = vpack.c.bf16 %v1409, %v1408
        %v1459 = vpack.c.bf16 %v1411, %v1410
        %v1460 = vpack.c.bf16 %v1413, %v1412
        %v1461 = vpack.c.bf16 %v1415, %v1414
        %v1462 = vpack.c.bf16 %v1417, %v1416
        %v1463 = vpack.c.bf16 %v1419, %v1418
        %v1464 = vpack.c.bf16 %v1421, %v1420
        %v1465 = vpack.c.bf16 %v1423, %v1422
        %v1466 = vpack.c.bf16 %v1425, %v1424
        %v1467 = vpack.c.bf16 %v1427, %v1426
        %v1468 = vpack.c.bf16 %v1429, %v1428
        %v1469 = vpack.c.bf16 %v1431, %v1430
        %v1470 = vpack.c.bf16 %v1433, %v1432
        %v1471 = vpack.c.bf16 %v1435, %v1434
        %v1472 = vpack.c.bf16 %v1437, %v1436
        %v1473 = vpack.c.bf16 %v1439, %v1438
        %v1474 = vpack.c.bf16 %v1441, %v1440
        %v1475 = vpack.c.bf16 %v1443, %v1442
        %v1508 = vunpack.c.l.b16 %v1444
        %v1509 = vunpack.c.h.b16 %v1444
        %v1510 = vunpack.c.l.b16 %v1445
        %v1511 = vunpack.c.h.b16 %v1445
        %v1512 = vunpack.c.l.b16 %v1446
        %v1513 = vunpack.c.h.b16 %v1446
        %v1514 = vunpack.c.l.b16 %v1447
        %v1515 = vunpack.c.h.b16 %v1447
        %v1516 = vunpack.c.l.b16 %v1448
        %v1517 = vunpack.c.h.b16 %v1448
        %v1518 = vunpack.c.l.b16 %v1449
        %v1519 = vunpack.c.h.b16 %v1449
        %v1520 = vunpack.c.l.b16 %v1450
        %v1521 = vunpack.c.h.b16 %v1450
        %v1522 = vunpack.c.l.b16 %v1451
        %v1523 = vunpack.c.h.b16 %v1451
        %v1524 = vunpack.c.l.b16 %v1452
        %v1525 = vunpack.c.h.b16 %v1452
        %v1526 = vunpack.c.l.b16 %v1453
        %v1527 = vunpack.c.h.b16 %v1453
        %v1528 = vunpack.c.l.b16 %v1454
        %v1529 = vunpack.c.h.b16 %v1454
        %v1530 = vunpack.c.l.b16 %v1455
        %v1531 = vunpack.c.h.b16 %v1455
        %v1532 = vunpack.c.l.b16 %v1456
        %v1533 = vunpack.c.h.b16 %v1456
        %v1534 = vunpack.c.l.b16 %v1457
        %v1535 = vunpack.c.h.b16 %v1457
        %v1536 = vunpack.c.l.b16 %v1458
        %v1537 = vunpack.c.h.b16 %v1458
        %v1538 = vunpack.c.l.b16 %v1459
        %v1539 = vunpack.c.h.b16 %v1459
        %v1540 = vunpack.c.l.b16 %v1460
        %v1541 = vunpack.c.h.b16 %v1460
        %v1542 = vunpack.c.l.b16 %v1461
        %v1543 = vunpack.c.h.b16 %v1461
        %v1544 = vunpack.c.l.b16 %v1462
        %v1545 = vunpack.c.h.b16 %v1462
        %v1546 = vunpack.c.l.b16 %v1463
        %v1547 = vunpack.c.h.b16 %v1463
        %v1548 = vunpack.c.l.b16 %v1464
        %v1549 = vunpack.c.h.b16 %v1464
        %v1550 = vunpack.c.l.b16 %v1465
        %v1551 = vunpack.c.h.b16 %v1465
        %v1552 = vunpack.c.l.b16 %v1466
        %v1553 = vunpack.c.h.b16 %v1466
        %v1554 = vunpack.c.l.b16 %v1467
        %v1555 = vunpack.c.h.b16 %v1467
        %v1556 = vunpack.c.l.b16 %v1468
        %v1557 = vunpack.c.h.b16 %v1468
        %v1558 = vunpack.c.l.b16 %v1469
        %v1559 = vunpack.c.h.b16 %v1469
        %v1560 = vunpack.c.l.b16 %v1470
        %v1561 = vunpack.c.h.b16 %v1470
        %v1562 = vunpack.c.l.b16 %v1471
        %v1563 = vunpack.c.h.b16 %v1471
        %v1564 = vunpack.c.l.b16 %v1472
        %v1565 = vunpack.c.h.b16 %v1472
        %v1566 = vunpack.c.l.b16 %v1473
        %v1567 = vunpack.c.h.b16 %v1473
        %v1568 = vunpack.c.l.b16 %v1474
        %v1569 = vunpack.c.h.b16 %v1474
        %v1570 = vunpack.c.l.b16 %v1475
        %v1571 = vunpack.c.h.b16 %v1475
        %v1572 = vpack.c.b16 %v1508, %v1508
        %v1573 = vpack.c.b16 %v1509, %v1509
        %v1574 = vpack.c.b16 %v1510, %v1510
        %v1575 = vpack.c.b16 %v1511, %v1511
        %v1576 = vpack.c.b16 %v1512, %v1512
        %v1577 = vpack.c.b16 %v1513, %v1513
        %v1578 = vpack.c.b16 %v1514, %v1514
        %v1579 = vpack.c.b16 %v1515, %v1515
        %v1580 = vpack.c.b16 %v1516, %v1516
        %v1581 = vpack.c.b16 %v1517, %v1517
        %v1582 = vpack.c.b16 %v1518, %v1518
        %v1583 = vpack.c.b16 %v1519, %v1519
        %v1584 = vpack.c.b16 %v1520, %v1520
        %v1585 = vpack.c.b16 %v1521, %v1521
        %v1586 = vpack.c.b16 %v1522, %v1522
        %v1587 = vpack.c.b16 %v1523, %v1523
        %v1588 = vpack.c.b16 %v1524, %v1524
        %v1589 = vpack.c.b16 %v1525, %v1525
        %v1590 = vpack.c.b16 %v1526, %v1526
        %v1591 = vpack.c.b16 %v1527, %v1527
        %v1592 = vpack.c.b16 %v1528, %v1528
        %v1593 = vpack.c.b16 %v1529, %v1529
        %v1594 = vpack.c.b16 %v1530, %v1530
        %v1595 = vpack.c.b16 %v1531, %v1531
        %v1596 = vpack.c.b16 %v1532, %v1532
        %v1597 = vpack.c.b16 %v1533, %v1533
        %v1598 = vpack.c.b16 %v1534, %v1534
        %v1599 = vpack.c.b16 %v1535, %v1535
        %v1600 = vpack.c.b16 %v1536, %v1536
        %v1601 = vpack.c.b16 %v1537, %v1537
        %v1602 = vpack.c.b16 %v1538, %v1538
        %v1603 = vpack.c.b16 %v1539, %v1539
        %v1604 = vpack.c.b16 %v1540, %v1540
        %v1605 = vpack.c.b16 %v1541, %v1541
        %v1606 = vpack.c.b16 %v1542, %v1542
        %v1607 = vpack.c.b16 %v1543, %v1543
        %v1608 = vpack.c.b16 %v1544, %v1544
        %v1609 = vpack.c.b16 %v1545, %v1545
        %v1610 = vpack.c.b16 %v1546, %v1546
        %v1611 = vpack.c.b16 %v1547, %v1547
        %v1612 = vpack.c.b16 %v1548, %v1548
        %v1613 = vpack.c.b16 %v1549, %v1549
        %v1614 = vpack.c.b16 %v1550, %v1550
        %v1615 = vpack.c.b16 %v1551, %v1551
        %v1616 = vpack.c.b16 %v1552, %v1552
        %v1617 = vpack.c.b16 %v1553, %v1553
        %v1618 = vpack.c.b16 %v1554, %v1554
        %v1619 = vpack.c.b16 %v1555, %v1555
        %v1620 = vpack.c.b16 %v1556, %v1556
        %v1621 = vpack.c.b16 %v1557, %v1557
        %v1622 = vpack.c.b16 %v1558, %v1558
        %v1623 = vpack.c.b16 %v1559, %v1559
        %v1624 = vpack.c.b16 %v1560, %v1560
        %v1625 = vpack.c.b16 %v1561, %v1561
        %v1626 = vpack.c.b16 %v1562, %v1562
        %v1627 = vpack.c.b16 %v1563, %v1563
        %v1628 = vpack.c.b16 %v1564, %v1564
        %v1629 = vpack.c.b16 %v1565, %v1565
        %v1630 = vpack.c.b16 %v1566, %v1566
        %v1631 = vpack.c.b16 %v1567, %v1567
        %v1632 = vpack.c.b16 %v1568, %v1568
        %v1633 = vpack.c.b16 %v1569, %v1569
        %v1634 = vpack.c.b16 %v1570, %v1570
        %v1635 = vpack.c.b16 %v1571, %v1571
        %1700 = vst [vmem:[%s217] sm:$0xf] %v1572
        %1701 = vst [vmem:[%s217 + $0x4] sm:$0xf] %v1573
        %1702 = vst [vmem:[%s217 + $0x8] sm:$0xf] %v1574
        %1703 = vst [vmem:[%s217 + $0xc] sm:$0xf] %v1575
        %1704 = vst [vmem:[%s217 + $0x10] sm:$0xf] %v1576
        %1705 = vst [vmem:[%s217 + $0x14] sm:$0xf] %v1577
        %1706 = vst [vmem:[%s217 + $0x18] sm:$0xf] %v1578
        %1707 = vst [vmem:[%s217 + $0x1c] sm:$0xf] %v1579
        %1708 = vst [vmem:[%s217 + $0x20] sm:$0xf] %v1580
        %1709 = vst [vmem:[%s217 + $0x24] sm:$0xf] %v1581
        %1710 = vst [vmem:[%s217 + $0x28] sm:$0xf] %v1582
        %1711 = vst [vmem:[%s217 + $0x2c] sm:$0xf] %v1583
        %1712 = vst [vmem:[%s217 + $0x30] sm:$0xf] %v1584
        %1713 = vst [vmem:[%s217 + $0x34] sm:$0xf] %v1585
        %1714 = vst [vmem:[%s217 + $0x38] sm:$0xf] %v1586
        %1715 = vst [vmem:[%s217 + $0x3c] sm:$0xf] %v1587
        %1716 = vst [vmem:[%s217 + $0x40] sm:$0xf] %v1588
        %1717 = vst [vmem:[%s217 + $0x44] sm:$0xf] %v1589
        %1718 = vst [vmem:[%s217 + $0x48] sm:$0xf] %v1590
        %1719 = vst [vmem:[%s217 + $0x4c] sm:$0xf] %v1591
        %1720 = vst [vmem:[%s217 + $0x50] sm:$0xf] %v1592
        %1721 = vst [vmem:[%s217 + $0x54] sm:$0xf] %v1593
        %1722 = vst [vmem:[%s217 + $0x58] sm:$0xf] %v1594
        %1723 = vst [vmem:[%s217 + $0x5c] sm:$0xf] %v1595
        %1724 = vst [vmem:[%s217 + $0x60] sm:$0xf] %v1596
        %1725 = vst [vmem:[%s217 + $0x64] sm:$0xf] %v1597
        %1726 = vst [vmem:[%s217 + $0x68] sm:$0xf] %v1598
        %1727 = vst [vmem:[%s217 + $0x6c] sm:$0xf] %v1599
        %1728 = vst [vmem:[%s217 + $0x70] sm:$0xf] %v1600
        %1729 = vst [vmem:[%s217 + $0x74] sm:$0xf] %v1601
        %1730 = vst [vmem:[%s217 + $0x78] sm:$0xf] %v1602
        %1731 = vst [vmem:[%s217 + $0x7c] sm:$0xf] %v1603
        %1732 = vst [vmem:[%s217 + $0x80] sm:$0xf] %v1604
        %1733 = vst [vmem:[%s217 + $0x84] sm:$0xf] %v1605
        %1734 = vst [vmem:[%s217 + $0x88] sm:$0xf] %v1606
        %1735 = vst [vmem:[%s217 + $0x8c] sm:$0xf] %v1607
        %1736 = vst [vmem:[%s217 + $0x90] sm:$0xf] %v1608
        %1737 = vst [vmem:[%s217 + $0x94] sm:$0xf] %v1609
        %1738 = vst [vmem:[%s217 + $0x98] sm:$0xf] %v1610
        %1739 = vst [vmem:[%s217 + $0x9c] sm:$0xf] %v1611
        %1740 = vst [vmem:[%s217 + $0xa0] sm:$0xf] %v1612
        %1741 = vst [vmem:[%s217 + $0xa4] sm:$0xf] %v1613
        %1742 = vst [vmem:[%s217 + $0xa8] sm:$0xf] %v1614
        %1743 = vst [vmem:[%s217 + $0xac] sm:$0xf] %v1615
        %1744 = vst [vmem:[%s217 + $0xb0] sm:$0xf] %v1616
        %1745 = vst [vmem:[%s217 + $0xb4] sm:$0xf] %v1617
        %1746 = vst [vmem:[%s217 + $0xb8] sm:$0xf] %v1618
        %1747 = vst [vmem:[%s217 + $0xbc] sm:$0xf] %v1619
        %1748 = vst [vmem:[%s217 + $0xc0] sm:$0xf] %v1620
        %1749 = vst [vmem:[%s217 + $0xc4] sm:$0xf] %v1621
        %1750 = vst [vmem:[%s217 + $0xc8] sm:$0xf] %v1622
        %1751 = vst [vmem:[%s217 + $0xcc] sm:$0xf] %v1623
        %1752 = vst [vmem:[%s217 + $0xd0] sm:$0xf] %v1624
        %1753 = vst [vmem:[%s217 + $0xd4] sm:$0xf] %v1625
        %1754 = vst [vmem:[%s217 + $0xd8] sm:$0xf] %v1626
        %1755 = vst [vmem:[%s217 + $0xdc] sm:$0xf] %v1627
        %1756 = vst [vmem:[%s217 + $0xe0] sm:$0xf] %v1628
        %1757 = vst [vmem:[%s217 + $0xe4] sm:$0xf] %v1629
        %1758 = vst [vmem:[%s217 + $0xe8] sm:$0xf] %v1630
        %1759 = vst [vmem:[%s217 + $0xec] sm:$0xf] %v1631
        %1760 = vst [vmem:[%s217 + $0xf0] sm:$0xf] %v1632
        %1761 = vst [vmem:[%s217 + $0xf4] sm:$0xf] %v1633
        %1762 = vst [vmem:[%s217 + $0xf8] sm:$0xf] %v1634
        %1763 = vst [vmem:[%s217 + $0xfc] sm:$0xf] %v1635
      $region40: #{discriminator_forward.8} parent=31 // pred_fallthru
        _
      %s1764 = smul.u32 64, %s18
      %p1765 = scmp.lt.s32.totalorder %s1764, 255
      %s1766 = scalar_select %p1765, %s1764, 255
      %s1767 = smul.addr %s1766, 4
      %s1768 = scalar_lea.vmem %s3, %s1767
      // Predicated region
      $region41: #{discriminator_forward.8} parent=31 // pred_check
        %p1769 = pneg %p119
      $region42: #{discriminator_forward.8} parent=31 // pred_check_branch
        %1771 = sbr.rel (%p1769) target = $region44
      $region43: #{discriminator_forward.8} parent=31 // pred_region
        %s1772 = smul.u32 64, %s18
      $region44: #{discriminator_forward.8} parent=31 // pred_fallthru
        _
    $region32: #{discriminator_forward.8} parent=5 // pred_fallthru
      _
    %p1773 = scmp.le.s32.totalorder 2, %s9
    // Predicated region
    $region45: #{discriminator_forward.8} parent=5 // pred_check
      %p1774 = pneg %p1773
    $region46: #{discriminator_forward.8} parent=5 // pred_check_branch
      %1776 = sbr.rel (%p1774) target = $region48
    $region47: #{discriminator_forward.8} parent=5 // pred_region
      %s1777 = ssub.s32 %s9, 2
      // Predicated region
      $region49: #{discriminator_forward.8} parent=47 // pred_check
        %p1778 = pneg %p125
      $region50: #{discriminator_forward.8} parent=47 // pred_check_branch
        %1780 = sbr.rel (%p1778) target = $region52
      $region51: #{discriminator_forward.8} parent=47 // pred_region
        %s1781 = smul.u32 64, %s20
        %p1782 = scmp.lt.s32.totalorder %s1781, 255
        %s1783 = scalar_select %p1782, %s1781, 255
        %s1784 = smul.addr %s1783, 4
        %s1785 = scalar_lea.vmem %s3, %s1784
      $region52: #{discriminator_forward.8} parent=47 // pred_fallthru
        _
    $region48: #{discriminator_forward.8} parent=5 // pred_fallthru
      _
  $region6: #{discriminator_forward.8} parent=0 // loop_footer
    %s13 = sadd.s32 1, %s9
  $region7: #{discriminator_forward.8} parent=0 // loop_footer_branch
    %8 = sbr.rel target = $region3
  $region8: #{discriminator_forward.8} parent=0 // loop_exit
    _

// kernel: discriminator_forward.9
$region0: #{discriminator_forward.9}
  #allocation0 [shape = 'u32[]', space=smem, size = 0x4, offset = 0x4, fixed_abs, tag = 'smem constant byte address 0x4 - core index']
  #allocation1 [shape = 'u32[144,128]{1,0:T(1,128)}', space=vmem, size = 0x12000, scoped, tag = 'internal scratch']
  #allocation2 [shape = 'f32[512,128]{1,0:T(8,128)}', space=vmem, size = 0x40000, scoped, tag = 'scratch operand']
  %s0 = inlined_call_operand.vmem [shape: bf16[512,128], index: 0, kind: input, shape index: {}]
  %s1 = inlined_call_operand.vmem [shape: bf16[128,128], index: 1, kind: input, shape index: {}]
  %s2 = inlined_call_operand.vmem [shape: f32[512,128], index: 2, kind: output, shape index: {0}]
  %s3 = inlined_call_operand.vmem [shape: f32[8,128], index: 3, kind: output, shape index: {1}]
  %4 = xla_tuple %s2, %s3
  %s5 = sld [smem:[#allocation0]]
  $region34: #{discriminator_forward.9} parent=0
    _
  %s7 = ssub.s32 1, %s5
  %s8 = scalar_select 0, %s7, %s5
  // Predicated region
  $region2: #{discriminator_forward.9} parent=0 // pred_check
    _
  $region3: #{discriminator_forward.9} parent=0 // pred_check_branch
    %10 = sbr.rel (0) target = $region5
  $region4: #{discriminator_forward.9} parent=0 // pred_region
    _
  $region5: #{discriminator_forward.9} parent=0 // pred_fallthru
    _
  // Predicated region
  $region6: #{discriminator_forward.9} parent=0 // pred_check
    _
  $region7: #{discriminator_forward.9} parent=0 // pred_check_branch
    %12 = sbr.rel (0) target = $region9
  $region8: #{discriminator_forward.9} parent=0 // pred_region
    _
  $region9: #{discriminator_forward.9} parent=0 // pred_fallthru
    _
  %p14 = scmp.eq.s32.totalorder 0, 0
  // Predicated region
  $region10: #{discriminator_forward.9} parent=0 // pred_check
    %p15 = pneg %p14
  $region11: #{discriminator_forward.9} parent=0 // pred_check_branch
    %17 = sbr.rel (%p15) target = $region13
  $region12: #{discriminator_forward.9} parent=0 // pred_region
    %18 = vst [vmem:[#allocation2] sm:$0xff] 0.0
    %19 = vst [vmem:[#allocation2 + $0x8] sm:$0xff] 0.0
    %20 = vst [vmem:[#allocation2 + $0x10] sm:$0xff] 0.0
    %21 = vst [vmem:[#allocation2 + $0x18] sm:$0xff] 0.0
    %22 = vst [vmem:[#allocation2 + $0x20] sm:$0xff] 0.0
    %23 = vst [vmem:[#allocation2 + $0x28] sm:$0xff] 0.0
    %24 = vst [vmem:[#allocation2 + $0x30] sm:$0xff] 0.0
    %25 = vst [vmem:[#allocation2 + $0x38] sm:$0xff] 0.0
    %26 = vst [vmem:[#allocation2 + $0x40] sm:$0xff] 0.0
    %27 = vst [vmem:[#allocation2 + $0x48] sm:$0xff] 0.0
    %28 = vst [vmem:[#allocation2 + $0x50] sm:$0xff] 0.0
    %29 = vst [vmem:[#allocation2 + $0x58] sm:$0xff] 0.0
    %30 = vst [vmem:[#allocation2 + $0x60] sm:$0xff] 0.0
    %31 = vst [vmem:[#allocation2 + $0x68] sm:$0xff] 0.0
    %32 = vst [vmem:[#allocation2 + $0x70] sm:$0xff] 0.0
    %33 = vst [vmem:[#allocation2 + $0x78] sm:$0xff] 0.0
    %34 = vst [vmem:[#allocation2 + $0x80] sm:$0xff] 0.0
    %35 = vst [vmem:[#allocation2 + $0x88] sm:$0xff] 0.0
    %36 = vst [vmem:[#allocation2 + $0x90] sm:$0xff] 0.0
    %37 = vst [vmem:[#allocation2 + $0x98] sm:$0xff] 0.0
    %38 = vst [vmem:[#allocation2 + $0xa0] sm:$0xff] 0.0
    %39 = vst [vmem:[#allocation2 + $0xa8] sm:$0xff] 0.0
    %40 = vst [vmem:[#allocation2 + $0xb0] sm:$0xff] 0.0
    %41 = vst [vmem:[#allocation2 + $0xb8] sm:$0xff] 0.0
    %42 = vst [vmem:[#allocation2 + $0xc0] sm:$0xff] 0.0
    %43 = vst [vmem:[#allocation2 + $0xc8] sm:$0xff] 0.0
    %44 = vst [vmem:[#allocation2 + $0xd0] sm:$0xff] 0.0
    %45 = vst [vmem:[#allocation2 + $0xd8] sm:$0xff] 0.0
    %46 = vst [vmem:[#allocation2 + $0xe0] sm:$0xff] 0.0
    %47 = vst [vmem:[#allocation2 + $0xe8] sm:$0xff] 0.0
    %48 = vst [vmem:[#allocation2 + $0xf0] sm:$0xff] 0.0
    %49 = vst [vmem:[#allocation2 + $0xf8] sm:$0xff] 0.0
    %50 = vst [vmem:[#allocation2 + $0x100] sm:$0xff] 0.0
    %51 = vst [vmem:[#allocation2 + $0x108] sm:$0xff] 0.0
    %52 = vst [vmem:[#allocation2 + $0x110] sm:$0xff] 0.0
    %53 = vst [vmem:[#allocation2 + $0x118] sm:$0xff] 0.0
    %54 = vst [vmem:[#allocation2 + $0x120] sm:$0xff] 0.0
    %55 = vst [vmem:[#allocation2 + $0x128] sm:$0xff] 0.0
    %56 = vst [vmem:[#allocation2 + $0x130] sm:$0xff] 0.0
    %57 = vst [vmem:[#allocation2 + $0x138] sm:$0xff] 0.0
    %58 = vst [vmem:[#allocation2 + $0x140] sm:$0xff] 0.0
    %59 = vst [vmem:[#allocation2 + $0x148] sm:$0xff] 0.0
    %60 = vst [vmem:[#allocation2 + $0x150] sm:$0xff] 0.0
    %61 = vst [vmem:[#allocation2 + $0x158] sm:$0xff] 0.0
    %62 = vst [vmem:[#allocation2 + $0x160] sm:$0xff] 0.0
    %63 = vst [vmem:[#allocation2 + $0x168] sm:$0xff] 0.0
    %64 = vst [vmem:[#allocation2 + $0x170] sm:$0xff] 0.0
    %65 = vst [vmem:[#allocation2 + $0x178] sm:$0xff] 0.0
    %66 = vst [vmem:[#allocation2 + $0x180] sm:$0xff] 0.0
    %67 = vst [vmem:[#allocation2 + $0x188] sm:$0xff] 0.0
    %68 = vst [vmem:[#allocation2 + $0x190] sm:$0xff] 0.0
    %69 = vst [vmem:[#allocation2 + $0x198] sm:$0xff] 0.0
    %70 = vst [vmem:[#allocation2 + $0x1a0] sm:$0xff] 0.0
    %71 = vst [vmem:[#allocation2 + $0x1a8] sm:$0xff] 0.0
    %72 = vst [vmem:[#allocation2 + $0x1b0] sm:$0xff] 0.0
    %73 = vst [vmem:[#allocation2 + $0x1b8] sm:$0xff] 0.0
    %74 = vst [vmem:[#allocation2 + $0x1c0] sm:$0xff] 0.0
    %75 = vst [vmem:[#allocation2 + $0x1c8] sm:$0xff] 0.0
    %76 = vst [vmem:[#allocation2 + $0x1d0] sm:$0xff] 0.0
    %77 = vst [vmem:[#allocation2 + $0x1d8] sm:$0xff] 0.0
    %78 = vst [vmem:[#allocation2 + $0x1e0] sm:$0xff] 0.0
    %79 = vst [vmem:[#allocation2 + $0x1e8] sm:$0xff] 0.0
    %80 = vst [vmem:[#allocation2 + $0x1f0] sm:$0xff] 0.0
    %81 = vst [vmem:[#allocation2 + $0x1f8] sm:$0xff] 0.0
  $region13: #{discriminator_forward.9} parent=0 // pred_fallthru
    _
  %v82 = vld [vmem:[#allocation2] sm:$0xff]
  %v83 = vld [vmem:[#allocation2 + $0x8] sm:$0xff]
  %v84 = vld [vmem:[#allocation2 + $0x10] sm:$0xff]
  %v85 = vld [vmem:[#allocation2 + $0x18] sm:$0xff]
  %v86 = vld [vmem:[#allocation2 + $0x20] sm:$0xff]
  %v87 = vld [vmem:[#allocation2 + $0x28] sm:$0xff]
  %v88 = vld [vmem:[#allocation2 + $0x30] sm:$0xff]
  %v89 = vld [vmem:[#allocation2 + $0x38] sm:$0xff]
  %v90 = vld [vmem:[#allocation2 + $0x40] sm:$0xff]
  %v91 = vld [vmem:[#allocation2 + $0x48] sm:$0xff]
  %v92 = vld [vmem:[#allocation2 + $0x50] sm:$0xff]
  %v93 = vld [vmem:[#allocation2 + $0x58] sm:$0xff]
  %v94 = vld [vmem:[#allocation2 + $0x60] sm:$0xff]
  %v95 = vld [vmem:[#allocation2 + $0x68] sm:$0xff]
  %v96 = vld [vmem:[#allocation2 + $0x70] sm:$0xff]
  %v97 = vld [vmem:[#allocation2 + $0x78] sm:$0xff]
  %v98 = vld [vmem:[#allocation2 + $0x80] sm:$0xff]
  %v99 = vld [vmem:[#allocation2 + $0x88] sm:$0xff]
  %v100 = vld [vmem:[#allocation2 + $0x90] sm:$0xff]
  %v101 = vld [vmem:[#allocation2 + $0x98] sm:$0xff]
  %v102 = vld [vmem:[#allocation2 + $0xa0] sm:$0xff]
  %v103 = vld [vmem:[#allocation2 + $0xa8] sm:$0xff]
  %v104 = vld [vmem:[#allocation2 + $0xb0] sm:$0xff]
  %v105 = vld [vmem:[#allocation2 + $0xb8] sm:$0xff]
  %v106 = vld [vmem:[#allocation2 + $0xc0] sm:$0xff]
  %v107 = vld [vmem:[#allocation2 + $0xc8] sm:$0xff]
  %v108 = vld [vmem:[#allocation2 + $0xd0] sm:$0xff]
  %v109 = vld [vmem:[#allocation2 + $0xd8] sm:$0xff]
  %v110 = vld [vmem:[#allocation2 + $0xe0] sm:$0xff]
  %v111 = vld [vmem:[#allocation2 + $0xe8] sm:$0xff]
  %v112 = vld [vmem:[#allocation2 + $0xf0] sm:$0xff]
  %v113 = vld [vmem:[#allocation2 + $0xf8] sm:$0xff]
  %v114 = vld [vmem:[#allocation2 + $0x100] sm:$0xff]
  %v115 = vld [vmem:[#allocation2 + $0x108] sm:$0xff]
  %v116 = vld [vmem:[#allocation2 + $0x110] sm:$0xff]
  %v117 = vld [vmem:[#allocation2 + $0x118] sm:$0xff]
  %v118 = vld [vmem:[#allocation2 + $0x120] sm:$0xff]
  %v119 = vld [vmem:[#allocation2 + $0x128] sm:$0xff]
  %v120 = vld [vmem:[#allocation2 + $0x130] sm:$0xff]
  %v121 = vld [vmem:[#allocation2 + $0x138] sm:$0xff]
  %v122 = vld [vmem:[#allocation2 + $0x140] sm:$0xff]
  %v123 = vld [vmem:[#allocation2 + $0x148] sm:$0xff]
  %v124 = vld [vmem:[#allocation2 + $0x150] sm:$0xff]
  %v125 = vld [vmem:[#allocation2 + $0x158] sm:$0xff]
  %v126 = vld [vmem:[#allocation2 + $0x160] sm:$0xff]
  %v127 = vld [vmem:[#allocation2 + $0x168] sm:$0xff]
  %v128 = vld [vmem:[#allocation2 + $0x170] sm:$0xff]
  %v129 = vld [vmem:[#allocation2 + $0x178] sm:$0xff]
  %v130 = vld [vmem:[#allocation2 + $0x180] sm:$0xff]
  %v131 = vld [vmem:[#allocation2 + $0x188] sm:$0xff]
  %v132 = vld [vmem:[#allocation2 + $0x190] sm:$0xff]
  %v133 = vld [vmem:[#allocation2 + $0x198] sm:$0xff]
  %v134 = vld [vmem:[#allocation2 + $0x1a0] sm:$0xff]
  %v135 = vld [vmem:[#allocation2 + $0x1a8] sm:$0xff]
  %v136 = vld [vmem:[#allocation2 + $0x1b0] sm:$0xff]
  %v137 = vld [vmem:[#allocation2 + $0x1b8] sm:$0xff]
  %v138 = vld [vmem:[#allocation2 + $0x1c0] sm:$0xff]
  %v139 = vld [vmem:[#allocation2 + $0x1c8] sm:$0xff]
  %v140 = vld [vmem:[#allocation2 + $0x1d0] sm:$0xff]
  %v141 = vld [vmem:[#allocation2 + $0x1d8] sm:$0xff]
  %v142 = vld [vmem:[#allocation2 + $0x1e0] sm:$0xff]
  %v143 = vld [vmem:[#allocation2 + $0x1e8] sm:$0xff]
  %v144 = vld [vmem:[#allocation2 + $0x1f0] sm:$0xff]
  %v145 = vld [vmem:[#allocation2 + $0x1f8] sm:$0xff]
  %v146 = vld [vmem:[%s0] sm:$0xf]
  %v147 = vld [vmem:[%s0 + $0x4] sm:$0xf]
  %v148 = vld [vmem:[%s0 + $0x8] sm:$0xf]
  %v149 = vld [vmem:[%s0 + $0xc] sm:$0xf]
  %v150 = vld [vmem:[%s0 + $0x10] sm:$0xf]
  %v151 = vld [vmem:[%s0 + $0x14] sm:$0xf]
  %v152 = vld [vmem:[%s0 + $0x18] sm:$0xf]
  %v153 = vld [vmem:[%s0 + $0x1c] sm:$0xf]
  %v154 = vld [vmem:[%s0 + $0x20] sm:$0xf]
  %v155 = vld [vmem:[%s0 + $0x24] sm:$0xf]
  %v156 = vld [vmem:[%s0 + $0x28] sm:$0xf]
  %v157 = vld [vmem:[%s0 + $0x2c] sm:$0xf]
  %v158 = vld [vmem:[%s0 + $0x30] sm:$0xf]
  %v159 = vld [vmem:[%s0 + $0x34] sm:$0xf]
  %v160 = vld [vmem:[%s0 + $0x38] sm:$0xf]
  %v161 = vld [vmem:[%s0 + $0x3c] sm:$0xf]
  %v162 = vld [vmem:[%s0 + $0x40] sm:$0xf]
  %v163 = vld [vmem:[%s0 + $0x44] sm:$0xf]
  %v164 = vld [vmem:[%s0 + $0x48] sm:$0xf]
  %v165 = vld [vmem:[%s0 + $0x4c] sm:$0xf]
  %v166 = vld [vmem:[%s0 + $0x50] sm:$0xf]
  %v167 = vld [vmem:[%s0 + $0x54] sm:$0xf]
  %v168 = vld [vmem:[%s0 + $0x58] sm:$0xf]
  %v169 = vld [vmem:[%s0 + $0x5c] sm:$0xf]
  %v170 = vld [vmem:[%s0 + $0x60] sm:$0xf]
  %v171 = vld [vmem:[%s0 + $0x64] sm:$0xf]
  %v172 = vld [vmem:[%s0 + $0x68] sm:$0xf]
  %v173 = vld [vmem:[%s0 + $0x6c] sm:$0xf]
  %v174 = vld [vmem:[%s0 + $0x70] sm:$0xf]
  %v175 = vld [vmem:[%s0 + $0x74] sm:$0xf]
  %v176 = vld [vmem:[%s0 + $0x78] sm:$0xf]
  %v177 = vld [vmem:[%s0 + $0x7c] sm:$0xf]
  %v178 = vld [vmem:[%s0 + $0x80] sm:$0xf]
  %v179 = vld [vmem:[%s0 + $0x84] sm:$0xf]
  %v180 = vld [vmem:[%s0 + $0x88] sm:$0xf]
  %v181 = vld [vmem:[%s0 + $0x8c] sm:$0xf]
  %v182 = vld [vmem:[%s0 + $0x90] sm:$0xf]
  %v183 = vld [vmem:[%s0 + $0x94] sm:$0xf]
  %v184 = vld [vmem:[%s0 + $0x98] sm:$0xf]
  %v185 = vld [vmem:[%s0 + $0x9c] sm:$0xf]
  %v186 = vld [vmem:[%s0 + $0xa0] sm:$0xf]
  %v187 = vld [vmem:[%s0 + $0xa4] sm:$0xf]
  %v188 = vld [vmem:[%s0 + $0xa8] sm:$0xf]
  %v189 = vld [vmem:[%s0 + $0xac] sm:$0xf]
  %v190 = vld [vmem:[%s0 + $0xb0] sm:$0xf]
  %v191 = vld [vmem:[%s0 + $0xb4] sm:$0xf]
  %v192 = vld [vmem:[%s0 + $0xb8] sm:$0xf]
  %v193 = vld [vmem:[%s0 + $0xbc] sm:$0xf]
  %v194 = vld [vmem:[%s0 + $0xc0] sm:$0xf]
  %v195 = vld [vmem:[%s0 + $0xc4] sm:$0xf]
  %v196 = vld [vmem:[%s0 + $0xc8] sm:$0xf]
  %v197 = vld [vmem:[%s0 + $0xcc] sm:$0xf]
  %v198 = vld [vmem:[%s0 + $0xd0] sm:$0xf]
  %v199 = vld [vmem:[%s0 + $0xd4] sm:$0xf]
  %v200 = vld [vmem:[%s0 + $0xd8] sm:$0xf]
  %v201 = vld [vmem:[%s0 + $0xdc] sm:$0xf]
  %v202 = vld [vmem:[%s0 + $0xe0] sm:$0xf]
  %v203 = vld [vmem:[%s0 + $0xe4] sm:$0xf]
  %v204 = vld [vmem:[%s0 + $0xe8] sm:$0xf]
  %v205 = vld [vmem:[%s0 + $0xec] sm:$0xf]
  %v206 = vld [vmem:[%s0 + $0xf0] sm:$0xf]
  %v207 = vld [vmem:[%s0 + $0xf4] sm:$0xf]
  %v208 = vld [vmem:[%s0 + $0xf8] sm:$0xf]
  %v209 = vld [vmem:[%s0 + $0xfc] sm:$0xf]
  %v210 = vld [vmem:[%s1] sm:$0xf]
  %v211 = vld [vmem:[%s1 + $0x4] sm:$0xf]
  %v212 = vld [vmem:[%s1 + $0x8] sm:$0xf]
  %v213 = vld [vmem:[%s1 + $0xc] sm:$0xf]
  %v214 = vld [vmem:[%s1 + $0x10] sm:$0xf]
  %v215 = vld [vmem:[%s1 + $0x14] sm:$0xf]
  %v216 = vld [vmem:[%s1 + $0x18] sm:$0xf]
  %v217 = vld [vmem:[%s1 + $0x1c] sm:$0xf]
  %v218 = vld [vmem:[%s1 + $0x20] sm:$0xf]
  %v219 = vld [vmem:[%s1 + $0x24] sm:$0xf]
  %v220 = vld [vmem:[%s1 + $0x28] sm:$0xf]
  %v221 = vld [vmem:[%s1 + $0x2c] sm:$0xf]
  %v222 = vld [vmem:[%s1 + $0x30] sm:$0xf]
  %v223 = vld [vmem:[%s1 + $0x34] sm:$0xf]
  %v224 = vld [vmem:[%s1 + $0x38] sm:$0xf]
  %v225 = vld [vmem:[%s1 + $0x3c] sm:$0xf]
  %v290 = vunpack.c.l.b16 %v146
  %v291 = vunpack.c.l.b16 %v147
  %v292 = vunpack.c.l.b16 %v148
  %v293 = vunpack.c.l.b16 %v149
  %v294 = vunpack.c.l.b16 %v150
  %v295 = vunpack.c.l.b16 %v151
  %v296 = vunpack.c.l.b16 %v152
  %v297 = vunpack.c.l.b16 %v153
  %v298 = vunpack.c.l.b16 %v154
  %v299 = vunpack.c.l.b16 %v155
  %v300 = vunpack.c.l.b16 %v156
  %v301 = vunpack.c.l.b16 %v157
  %v302 = vunpack.c.l.b16 %v158
  %v303 = vunpack.c.l.b16 %v159
  %v304 = vunpack.c.l.b16 %v160
  %v305 = vunpack.c.l.b16 %v161
  %v306 = vunpack.c.l.b16 %v162
  %v307 = vunpack.c.l.b16 %v163
  %v308 = vunpack.c.l.b16 %v164
  %v309 = vunpack.c.l.b16 %v165
  %v310 = vunpack.c.l.b16 %v166
  %v311 = vunpack.c.l.b16 %v167
  %v312 = vunpack.c.l.b16 %v168
  %v313 = vunpack.c.l.b16 %v169
  %v314 = vunpack.c.l.b16 %v170
  %v315 = vunpack.c.l.b16 %v171
  %v316 = vunpack.c.l.b16 %v172
  %v317 = vunpack.c.l.b16 %v173
  %v318 = vunpack.c.l.b16 %v174
  %v319 = vunpack.c.l.b16 %v175
  %v320 = vunpack.c.l.b16 %v176
  %v321 = vunpack.c.l.b16 %v177
  %v322 = vunpack.c.l.b16 %v178
  %v323 = vunpack.c.l.b16 %v179
  %v324 = vunpack.c.l.b16 %v180
  %v325 = vunpack.c.l.b16 %v181
  %v326 = vunpack.c.l.b16 %v182
  %v327 = vunpack.c.l.b16 %v183
  %v328 = vunpack.c.l.b16 %v184
  %v329 = vunpack.c.l.b16 %v185
  %v330 = vunpack.c.l.b16 %v186
  %v331 = vunpack.c.l.b16 %v187
  %v332 = vunpack.c.l.b16 %v188
  %v333 = vunpack.c.l.b16 %v189
  %v334 = vunpack.c.l.b16 %v190
  %v335 = vunpack.c.l.b16 %v191
  %v336 = vunpack.c.l.b16 %v192
  %v337 = vunpack.c.l.b16 %v193
  %v338 = vunpack.c.l.b16 %v194
  %v339 = vunpack.c.l.b16 %v195
  %v340 = vunpack.c.l.b16 %v196
  %v341 = vunpack.c.l.b16 %v197
  %v342 = vunpack.c.l.b16 %v198
  %v343 = vunpack.c.l.b16 %v199
  %v344 = vunpack.c.l.b16 %v200
  %v345 = vunpack.c.l.b16 %v201
  %v346 = vunpack.c.l.b16 %v202
  %v347 = vunpack.c.l.b16 %v203
  %v348 = vunpack.c.l.b16 %v204
  %v349 = vunpack.c.l.b16 %v205
  %v350 = vunpack.c.l.b16 %v206
  %v351 = vunpack.c.l.b16 %v207
  %v352 = vunpack.c.l.b16 %v208
  %v353 = vunpack.c.l.b16 %v209
  %v354 = vpack.c.b16 %v291, %v290
  %v355 = vpack.c.b16 %v293, %v292
  %v356 = vpack.c.b16 %v295, %v294
  %v357 = vpack.c.b16 %v297, %v296
  %v358 = vpack.c.b16 %v299, %v298
  %v359 = vpack.c.b16 %v301, %v300
  %v360 = vpack.c.b16 %v303, %v302
  %v361 = vpack.c.b16 %v305, %v304
  %v362 = vpack.c.b16 %v307, %v306
  %v363 = vpack.c.b16 %v309, %v308
  %v364 = vpack.c.b16 %v311, %v310
  %v365 = vpack.c.b16 %v313, %v312
  %v366 = vpack.c.b16 %v315, %v314
  %v367 = vpack.c.b16 %v317, %v316
  %v368 = vpack.c.b16 %v319, %v318
  %v369 = vpack.c.b16 %v321, %v320
  %v370 = vpack.c.b16 %v323, %v322
  %v371 = vpack.c.b16 %v325, %v324
  %v372 = vpack.c.b16 %v327, %v326
  %v373 = vpack.c.b16 %v329, %v328
  %v374 = vpack.c.b16 %v331, %v330
  %v375 = vpack.c.b16 %v333, %v332
  %v376 = vpack.c.b16 %v335, %v334
  %v377 = vpack.c.b16 %v337, %v336
  %v378 = vpack.c.b16 %v339, %v338
  %v379 = vpack.c.b16 %v341, %v340
  %v380 = vpack.c.b16 %v343, %v342
  %v381 = vpack.c.b16 %v345, %v344
  %v382 = vpack.c.b16 %v347, %v346
  %v383 = vpack.c.b16 %v349, %v348
  %v384 = vpack.c.b16 %v351, %v350
  %v385 = vpack.c.b16 %v353, %v352
  %v434 = vunpack.c.l.b16 %v210
  %v435 = vunpack.c.l.b16 %v211
  %v436 = vunpack.c.l.b16 %v212
  %v437 = vunpack.c.l.b16 %v213
  %v438 = vunpack.c.l.b16 %v214
  %v439 = vunpack.c.l.b16 %v215
  %v440 = vunpack.c.l.b16 %v216
  %v441 = vunpack.c.l.b16 %v217
  %v442 = vunpack.c.l.b16 %v218
  %v443 = vunpack.c.l.b16 %v219
  %v444 = vunpack.c.l.b16 %v220
  %v445 = vunpack.c.l.b16 %v221
  %v446 = vunpack.c.l.b16 %v222
  %v447 = vunpack.c.l.b16 %v223
  %v448 = vunpack.c.l.b16 %v224
  %v449 = vunpack.c.l.b16 %v225
  %v450 = vpack.c.b16 %v435, %v434
  %v451 = vpack.c.b16 %v437, %v436
  %v452 = vpack.c.b16 %v439, %v438
  %v453 = vpack.c.b16 %v441, %v440
  %v454 = vpack.c.b16 %v443, %v442
  %v455 = vpack.c.b16 %v445, %v444
  %v456 = vpack.c.b16 %v447, %v446
  %v457 = vpack.c.b16 %v449, %v448
  %466 = vmatprep.subr.bf16.mxu0 0
  %467 = vmatpush1.bf16.msra.mxu0 %v450
  %468 = vmatprep.subr.bf16.mxu0 0
  %469 = vmatpush1.bf16.msra.mxu0 %v451
  %470 = vmatprep.subr.bf16.mxu0 0
  %471 = vmatpush1.bf16.msra.mxu0 %v452
  %472 = vmatprep.subr.bf16.mxu0 0
  %473 = vmatpush1.bf16.msra.mxu0 %v453
  %474 = vmatprep.subr.bf16.mxu0 0
  %475 = vmatpush1.bf16.msra.mxu0 %v454
  %476 = vmatprep.subr.bf16.mxu0 0
  %477 = vmatpush1.bf16.msra.mxu0 %v455
  %478 = vmatprep.subr.bf16.mxu0 0
  %479 = vmatpush1.bf16.msra.mxu0 %v456
  %480 = vmatprep.subr.bf16.mxu0 0
  %481 = vmatpush1.bf16.msra.mxu0 %v457
  %482 = vmatprep.subr.bf16.mxu0 0
  %483 = vmatpush1.bf16.msra.mxu0 0
  %484 = vmatprep.subr.bf16.mxu0 0
  %485 = vmatpush1.bf16.msra.mxu0 0
  %486 = vmatprep.subr.bf16.mxu0 0
  %487 = vmatpush1.bf16.msra.mxu0 0
  %488 = vmatprep.subr.bf16.mxu0 0
  %489 = vmatpush1.bf16.msra.mxu0 0
  %490 = vmatprep.subr.bf16.mxu0 0
  %491 = vmatpush1.bf16.msra.mxu0 0
  %492 = vmatprep.subr.bf16.mxu0 0
  %493 = vmatpush1.bf16.msra.mxu0 0
  %494 = vmatprep.subr.bf16.mxu0 0
  %495 = vmatpush1.bf16.msra.mxu0 0
  %496 = vmatprep.subr.bf16.mxu0 0
  %497 = vmatpush1.bf16.msra.mxu0 0
  %498 = vmatprep.mubr.bf16.mxu0 0
  %499 = vmatmul.mubr.bf16.gmra.mrb[0].mxu0 %v354
  %v500 = vpop.f32.mrb[0].mxu0
  %v501 = vadd.f32 0.0, %v500
  %v502 = vpop.f32.mrb[0].mxu0
  %v503 = vpop.f32.mrb[0].mxu0
  %v504 = vadd.f32 0.0, %v503
  %v505 = vpop.f32.mrb[0].mxu0
  %506 = vmatprep.mubr.bf16.mxu0 0
  %507 = vmatmul.mubr.bf16.gmra.mrb[0].mxu0 %v355
  %v508 = vpop.f32.mrb[0].mxu0
  %v509 = vadd.f32 0.0, %v508
  %v510 = vpop.f32.mrb[0].mxu0
  %v511 = vpop.f32.mrb[0].mxu0
  %v512 = vadd.f32 0.0, %v511
  %v513 = vpop.f32.mrb[0].mxu0
  %514 = vmatprep.mubr.bf16.mxu0 0
  %515 = vmatmul.mubr.bf16.gmra.mrb[0].mxu0 %v356
  %v516 = vpop.f32.mrb[0].mxu0
  %v517 = vadd.f32 0.0, %v516
  %v518 = vpop.f32.mrb[0].mxu0
  %v519 = vpop.f32.mrb[0].mxu0
  %v520 = vadd.f32 0.0, %v519
  %v521 = vpop.f32.mrb[0].mxu0
  %522 = vmatprep.mubr.bf16.mxu0 0
  %523 = vmatmul.mubr.bf16.gmra.mrb[0].mxu0 %v357
  %v524 = vpop.f32.mrb[0].mxu0
  %v525 = vadd.f32 0.0, %v524
  %v526 = vpop.f32.mrb[0].mxu0
  %v527 = vpop.f32.mrb[0].mxu0
  %v528 = vadd.f32 0.0, %v527
  %v529 = vpop.f32.mrb[0].mxu0
  %530 = vmatprep.mubr.bf16.mxu0 0
  %531 = vmatmul.mubr.bf16.gmra.mrb[0].mxu0 %v358
  %v532 = vpop.f32.mrb[0].mxu0
  %v533 = vadd.f32 0.0, %v532
  %v534 = vpop.f32.mrb[0].mxu0
  %v535 = vpop.f32.mrb[0].mxu0
  %v536 = vadd.f32 0.0, %v535
  %v537 = vpop.f32.mrb[0].mxu0
  %538 = vmatprep.mubr.bf16.mxu0 0
  %539 = vmatmul.mubr.bf16.gmra.mrb[0].mxu0 %v359
  %v540 = vpop.f32.mrb[0].mxu0
  %v541 = vadd.f32 0.0, %v540
  %v542 = vpop.f32.mrb[0].mxu0
  %v543 = vpop.f32.mrb[0].mxu0
  %v544 = vadd.f32 0.0, %v543
  %v545 = vpop.f32.mrb[0].mxu0
  %546 = vmatprep.mubr.bf16.mxu0 0
  %547 = vmatmul.mubr.bf16.gmra.mrb[0].mxu0 %v360
  %v548 = vpop.f32.mrb[0].mxu0
  %v549 = vadd.f32 0.0, %v548
  %v550 = vpop.f32.mrb[0].mxu0
  %v551 = vpop.f32.mrb[0].mxu0
  %v552 = vadd.f32 0.0, %v551
  %v553 = vpop.f32.mrb[0].mxu0
  %554 = vmatprep.mubr.bf16.mxu0 0
  %555 = vmatmul.mubr.bf16.gmra.mrb[0].mxu0 %v361
  %v556 = vpop.f32.mrb[0].mxu0
  %v557 = vadd.f32 0.0, %v556
  %v558 = vpop.f32.mrb[0].mxu0
  %v559 = vpop.f32.mrb[0].mxu0
  %v560 = vadd.f32 0.0, %v559
  %v561 = vpop.f32.mrb[0].mxu0
  %562 = vmatprep.mubr.bf16.mxu0 0
  %563 = vmatmul.mubr.bf16.gmra.mrb[0].mxu0 %v362
  %v564 = vpop.f32.mrb[0].mxu0
  %v565 = vadd.f32 0.0, %v564
  %v566 = vpop.f32.mrb[0].mxu0
  %v567 = vpop.f32.mrb[0].mxu0
  %v568 = vadd.f32 0.0, %v567
  %v569 = vpop.f32.mrb[0].mxu0
  %570 = vmatprep.mubr.bf16.mxu0 0
  %571 = vmatmul.mubr.bf16.gmra.mrb[0].mxu0 %v363
  %v572 = vpop.f32.mrb[0].mxu0
  %v573 = vadd.f32 0.0, %v572
  %v574 = vpop.f32.mrb[0].mxu0
  %v575 = vpop.f32.mrb[0].mxu0
  %v576 = vadd.f32 0.0, %v575
  %v577 = vpop.f32.mrb[0].mxu0
  %578 = vmatprep.mubr.bf16.mxu0 0
  %579 = vmatmul.mubr.bf16.gmra.mrb[0].mxu0 %v364
  %v580 = vpop.f32.mrb[0].mxu0
  %v581 = vadd.f32 0.0, %v580
  %v582 = vpop.f32.mrb[0].mxu0
  %v583 = vpop.f32.mrb[0].mxu0
  %v584 = vadd.f32 0.0, %v583
  %v585 = vpop.f32.mrb[0].mxu0
  %586 = vmatprep.mubr.bf16.mxu0 0
  %587 = vmatmul.mubr.bf16.gmra.mrb[0].mxu0 %v365
  %v588 = vpop.f32.mrb[0].mxu0
  %v589 = vadd.f32 0.0, %v588
  %v590 = vpop.f32.mrb[0].mxu0
  %v591 = vpop.f32.mrb[0].mxu0
  %v592 = vadd.f32 0.0, %v591
  %v593 = vpop.f32.mrb[0].mxu0
  %594 = vmatprep.mubr.bf16.mxu0 0
  %595 = vmatmul.mubr.bf16.gmra.mrb[0].mxu0 %v366
  %v596 = vpop.f32.mrb[0].mxu0
  %v597 = vadd.f32 0.0, %v596
  %v598 = vpop.f32.mrb[0].mxu0
  %v599 = vpop.f32.mrb[0].mxu0
  %v600 = vadd.f32 0.0, %v599
  %v601 = vpop.f32.mrb[0].mxu0
  %602 = vmatprep.mubr.bf16.mxu0 0
  %603 = vmatmul.mubr.bf16.gmra.mrb[0].mxu0 %v367
  %v604 = vpop.f32.mrb[0].mxu0
  %v605 = vadd.f32 0.0, %v604
  %v606 = vpop.f32.mrb[0].mxu0
  %v607 = vpop.f32.mrb[0].mxu0
  %v608 = vadd.f32 0.0, %v607
  %v609 = vpop.f32.mrb[0].mxu0
  %610 = vmatprep.mubr.bf16.mxu0 0
  %611 = vmatmul.mubr.bf16.gmra.mrb[0].mxu0 %v368
  %v612 = vpop.f32.mrb[0].mxu0
  %v613 = vadd.f32 0.0, %v612
  %v614 = vpop.f32.mrb[0].mxu0
  %v615 = vpop.f32.mrb[0].mxu0
  %v616 = vadd.f32 0.0, %v615
  %v617 = vpop.f32.mrb[0].mxu0
  %618 = vmatprep.mubr.bf16.mxu0 0
  %619 = vmatmul.mubr.bf16.gmra.mrb[0].mxu0 %v369
  %v620 = vpop.f32.mrb[0].mxu0
  %v621 = vadd.f32 0.0, %v620
  %v622 = vpop.f32.mrb[0].mxu0
  %v623 = vpop.f32.mrb[0].mxu0
  %v624 = vadd.f32 0.0, %v623
  %v625 = vpop.f32.mrb[0].mxu0
  %626 = vmatprep.mubr.bf16.mxu0 0
  %627 = vmatmul.mubr.bf16.gmra.mrb[0].mxu0 %v370
  %v628 = vpop.f32.mrb[0].mxu0
  %v629 = vadd.f32 0.0, %v628
  %v630 = vpop.f32.mrb[0].mxu0
  %v631 = vpop.f32.mrb[0].mxu0
  %v632 = vadd.f32 0.0, %v631
  %v633 = vpop.f32.mrb[0].mxu0
  %634 = vmatprep.mubr.bf16.mxu0 0
  %635 = vmatmul.mubr.bf16.gmra.mrb[0].mxu0 %v371
  %v636 = vpop.f32.mrb[0].mxu0
  %v637 = vadd.f32 0.0, %v636
  %v638 = vpop.f32.mrb[0].mxu0
  %v639 = vpop.f32.mrb[0].mxu0
  %v640 = vadd.f32 0.0, %v639
  %v641 = vpop.f32.mrb[0].mxu0
  %642 = vmatprep.mubr.bf16.mxu0 0
  %643 = vmatmul.mubr.bf16.gmra.mrb[0].mxu0 %v372
  %v644 = vpop.f32.mrb[0].mxu0
  %v645 = vadd.f32 0.0, %v644
  %v646 = vpop.f32.mrb[0].mxu0
  %v647 = vpop.f32.mrb[0].mxu0
  %v648 = vadd.f32 0.0, %v647
  %v649 = vpop.f32.mrb[0].mxu0
  %650 = vmatprep.mubr.bf16.mxu0 0
  %651 = vmatmul.mubr.bf16.gmra.mrb[0].mxu0 %v373
  %v652 = vpop.f32.mrb[0].mxu0
  %v653 = vadd.f32 0.0, %v652
  %v654 = vpop.f32.mrb[0].mxu0
  %v655 = vpop.f32.mrb[0].mxu0
  %v656 = vadd.f32 0.0, %v655
  %v657 = vpop.f32.mrb[0].mxu0
  %658 = vmatprep.mubr.bf16.mxu0 0
  %659 = vmatmul.mubr.bf16.gmra.mrb[0].mxu0 %v374
  %v660 = vpop.f32.mrb[0].mxu0
  %v661 = vadd.f32 0.0, %v660
  %v662 = vpop.f32.mrb[0].mxu0
  %v663 = vpop.f32.mrb[0].mxu0
  %v664 = vadd.f32 0.0, %v663
  %v665 = vpop.f32.mrb[0].mxu0
  %666 = vmatprep.mubr.bf16.mxu0 0
  %667 = vmatmul.mubr.bf16.gmra.mrb[0].mxu0 %v375
  %v668 = vpop.f32.mrb[0].mxu0
  %v669 = vadd.f32 0.0, %v668
  %v670 = vpop.f32.mrb[0].mxu0
  %v671 = vpop.f32.mrb[0].mxu0
  %v672 = vadd.f32 0.0, %v671
  %v673 = vpop.f32.mrb[0].mxu0
  %674 = vmatprep.mubr.bf16.mxu0 0
  %675 = vmatmul.mubr.bf16.gmra.mrb[0].mxu0 %v376
  %v676 = vpop.f32.mrb[0].mxu0
  %v677 = vadd.f32 0.0, %v676
  %v678 = vpop.f32.mrb[0].mxu0
  %v679 = vpop.f32.mrb[0].mxu0
  %v680 = vadd.f32 0.0, %v679
  %v681 = vpop.f32.mrb[0].mxu0
  %682 = vmatprep.mubr.bf16.mxu0 0
  %683 = vmatmul.mubr.bf16.gmra.mrb[0].mxu0 %v377
  %v684 = vpop.f32.mrb[0].mxu0
  %v685 = vadd.f32 0.0, %v684
  %v686 = vpop.f32.mrb[0].mxu0
  %v687 = vpop.f32.mrb[0].mxu0
  %v688 = vadd.f32 0.0, %v687
  %v689 = vpop.f32.mrb[0].mxu0
  %690 = vmatprep.mubr.bf16.mxu0 0
  %691 = vmatmul.mubr.bf16.gmra.mrb[0].mxu0 %v378
  %v692 = vpop.f32.mrb[0].mxu0
  %v693 = vadd.f32 0.0, %v692
  %v694 = vpop.f32.mrb[0].mxu0
  %v695 = vpop.f32.mrb[0].mxu0
  %v696 = vadd.f32 0.0, %v695
  %v697 = vpop.f32.mrb[0].mxu0
  %698 = vmatprep.mubr.bf16.mxu0 0
  %699 = vmatmul.mubr.bf16.gmra.mrb[0].mxu0 %v379
  %v700 = vpop.f32.mrb[0].mxu0
  %v701 = vadd.f32 0.0, %v700
  %v702 = vpop.f32.mrb[0].mxu0
  %v703 = vpop.f32.mrb[0].mxu0
  %v704 = vadd.f32 0.0, %v703
  %v705 = vpop.f32.mrb[0].mxu0
  %706 = vmatprep.mubr.bf16.mxu0 0
  %707 = vmatmul.mubr.bf16.gmra.mrb[0].mxu0 %v380
  %v708 = vpop.f32.mrb[0].mxu0
  %v709 = vadd.f32 0.0, %v708
  %v710 = vpop.f32.mrb[0].mxu0
  %v711 = vpop.f32.mrb[0].mxu0
  %v712 = vadd.f32 0.0, %v711
  %v713 = vpop.f32.mrb[0].mxu0
  %714 = vmatprep.mubr.bf16.mxu0 0
  %715 = vmatmul.mubr.bf16.gmra.mrb[0].mxu0 %v381
  %v716 = vpop.f32.mrb[0].mxu0
  %v717 = vadd.f32 0.0, %v716
  %v718 = vpop.f32.mrb[0].mxu0
  %v719 = vpop.f32.mrb[0].mxu0
  %v720 = vadd.f32 0.0, %v719
  %v721 = vpop.f32.mrb[0].mxu0
  %722 = vmatprep.mubr.bf16.mxu0 0
  %723 = vmatmul.mubr.bf16.gmra.mrb[0].mxu0 %v382
  %v724 = vpop.f32.mrb[0].mxu0
  %v725 = vadd.f32 0.0, %v724
  %v726 = vpop.f32.mrb[0].mxu0
  %v727 = vpop.f32.mrb[0].mxu0
  %v728 = vadd.f32 0.0, %v727
  %v729 = vpop.f32.mrb[0].mxu0
  %730 = vmatprep.mubr.bf16.mxu0 0
  %731 = vmatmul.mubr.bf16.gmra.mrb[0].mxu0 %v383
  %v732 = vpop.f32.mrb[0].mxu0
  %v733 = vadd.f32 0.0, %v732
  %v734 = vpop.f32.mrb[0].mxu0
  %v735 = vpop.f32.mrb[0].mxu0
  %v736 = vadd.f32 0.0, %v735
  %v737 = vpop.f32.mrb[0].mxu0
  %738 = vmatprep.mubr.bf16.mxu0 0
  %739 = vmatmul.mubr.bf16.gmra.mrb[0].mxu0 %v384
  %v740 = vpop.f32.mrb[0].mxu0
  %v741 = vadd.f32 0.0, %v740
  %v742 = vpop.f32.mrb[0].mxu0
  %v743 = vpop.f32.mrb[0].mxu0
  %v744 = vadd.f32 0.0, %v743
  %v745 = vpop.f32.mrb[0].mxu0
  %746 = vmatprep.mubr.bf16.mxu0 0
  %747 = vmatmul.mubr.bf16.gmra.mrb[0].mxu0 %v385
  %v748 = vpop.f32.mrb[0].mxu0
  %v749 = vadd.f32 0.0, %v748
  %v750 = vpop.f32.mrb[0].mxu0
  %v751 = vpop.f32.mrb[0].mxu0
  %v752 = vadd.f32 0.0, %v751
  %v753 = vpop.f32.mrb[0].mxu0
  %754 = vdwg.mxu0
  %v755 = vadd.f32 %v82, %v501
  %v756 = vadd.f32 %v83, %v504
  %v757 = vadd.f32 %v84, %v509
  %v758 = vadd.f32 %v85, %v512
  %v759 = vadd.f32 %v86, %v517
  %v760 = vadd.f32 %v87, %v520
  %v761 = vadd.f32 %v88, %v525
  %v762 = vadd.f32 %v89, %v528
  %v763 = vadd.f32 %v90, %v533
  %v764 = vadd.f32 %v91, %v536
  %v765 = vadd.f32 %v92, %v541
  %v766 = vadd.f32 %v93, %v544
  %v767 = vadd.f32 %v94, %v549
  %v768 = vadd.f32 %v95, %v552
  %v769 = vadd.f32 %v96, %v557
  %v770 = vadd.f32 %v97, %v560
  %v771 = vadd.f32 %v98, %v565
  %v772 = vadd.f32 %v99, %v568
  %v773 = vadd.f32 %v100, %v573
  %v774 = vadd.f32 %v101, %v576
  %v775 = vadd.f32 %v102, %v581
  %v776 = vadd.f32 %v103, %v584
  %v777 = vadd.f32 %v104, %v589
  %v778 = vadd.f32 %v105, %v592
  %v779 = vadd.f32 %v106, %v597
  %v780 = vadd.f32 %v107, %v600
  %v781 = vadd.f32 %v108, %v605
  %v782 = vadd.f32 %v109, %v608
  %v783 = vadd.f32 %v110, %v613
  %v784 = vadd.f32 %v111, %v616
  %v785 = vadd.f32 %v112, %v621
  %v786 = vadd.f32 %v113, %v624
  %v787 = vadd.f32 %v114, %v629
  %v788 = vadd.f32 %v115, %v632
  %v789 = vadd.f32 %v116, %v637
  %v790 = vadd.f32 %v117, %v640
  %v791 = vadd.f32 %v118, %v645
  %v792 = vadd.f32 %v119, %v648
  %v793 = vadd.f32 %v120, %v653
  %v794 = vadd.f32 %v121, %v656
  %v795 = vadd.f32 %v122, %v661
  %v796 = vadd.f32 %v123, %v664
  %v797 = vadd.f32 %v124, %v669
  %v798 = vadd.f32 %v125, %v672
  %v799 = vadd.f32 %v126, %v677
  %v800 = vadd.f32 %v127, %v680
  %v801 = vadd.f32 %v128, %v685
  %v802 = vadd.f32 %v129, %v688
  %v803 = vadd.f32 %v130, %v693
  %v804 = vadd.f32 %v131, %v696
  %v805 = vadd.f32 %v132, %v701
  %v806 = vadd.f32 %v133, %v704
  %v807 = vadd.f32 %v134, %v709
  %v808 = vadd.f32 %v135, %v712
  %v809 = vadd.f32 %v136, %v717
  %v810 = vadd.f32 %v137, %v720
  %v811 = vadd.f32 %v138, %v725
  %v812 = vadd.f32 %v139, %v728
  %v813 = vadd.f32 %v140, %v733
  %v814 = vadd.f32 %v141, %v736
  %v815 = vadd.f32 %v142, %v741
  %v816 = vadd.f32 %v143, %v744
  %v817 = vadd.f32 %v144, %v749
  %v818 = vadd.f32 %v145, %v752
  %819 = vst [vmem:[#allocation2] sm:$0xff] %v755
  %820 = vst [vmem:[#allocation2 + $0x8] sm:$0xff] %v756
  %821 = vst [vmem:[#allocation2 + $0x10] sm:$0xff] %v757
  %822 = vst [vmem:[#allocation2 + $0x18] sm:$0xff] %v758
  %823 = vst [vmem:[#allocation2 + $0x20] sm:$0xff] %v759
  %824 = vst [vmem:[#allocation2 + $0x28] sm:$0xff] %v760
  %825 = vst [vmem:[#allocation2 + $0x30] sm:$0xff] %v761
  %826 = vst [vmem:[#allocation2 + $0x38] sm:$0xff] %v762
  %827 = vst [vmem:[#allocation2 + $0x40] sm:$0xff] %v763
  %828 = vst [vmem:[#allocation2 + $0x48] sm:$0xff] %v764
  %829 = vst [vmem:[#allocation2 + $0x50] sm:$0xff] %v765
  %830 = vst [vmem:[#allocation2 + $0x58] sm:$0xff] %v766
  %831 = vst [vmem:[#allocation2 + $0x60] sm:$0xff] %v767
  %832 = vst [vmem:[#allocation2 + $0x68] sm:$0xff] %v768
  %833 = vst [vmem:[#allocation2 + $0x70] sm:$0xff] %v769
  %834 = vst [vmem:[#allocation2 + $0x78] sm:$0xff] %v770
  %835 = vst [vmem:[#allocation2 + $0x80] sm:$0xff] %v771
  %836 = vst [vmem:[#allocation2 + $0x88] sm:$0xff] %v772
  %837 = vst [vmem:[#allocation2 + $0x90] sm:$0xff] %v773
  %838 = vst [vmem:[#allocation2 + $0x98] sm:$0xff] %v774
  %839 = vst [vmem:[#allocation2 + $0xa0] sm:$0xff] %v775
  %840 = vst [vmem:[#allocation2 + $0xa8] sm:$0xff] %v776
  %841 = vst [vmem:[#allocation2 + $0xb0] sm:$0xff] %v777
  %842 = vst [vmem:[#allocation2 + $0xb8] sm:$0xff] %v778
  %843 = vst [vmem:[#allocation2 + $0xc0] sm:$0xff] %v779
  %844 = vst [vmem:[#allocation2 + $0xc8] sm:$0xff] %v780
  %845 = vst [vmem:[#allocation2 + $0xd0] sm:$0xff] %v781
  %846 = vst [vmem:[#allocation2 + $0xd8] sm:$0xff] %v782
  %847 = vst [vmem:[#allocation2 + $0xe0] sm:$0xff] %v783
  %848 = vst [vmem:[#allocation2 + $0xe8] sm:$0xff] %v784
  %849 = vst [vmem:[#allocation2 + $0xf0] sm:$0xff] %v785
  %850 = vst [vmem:[#allocation2 + $0xf8] sm:$0xff] %v786
  %851 = vst [vmem:[#allocation2 + $0x100] sm:$0xff] %v787
  %852 = vst [vmem:[#allocation2 + $0x108] sm:$0xff] %v788
  %853 = vst [vmem:[#allocation2 + $0x110] sm:$0xff] %v789
  %854 = vst [vmem:[#allocation2 + $0x118] sm:$0xff] %v790
  %855 = vst [vmem:[#allocation2 + $0x120] sm:$0xff] %v791
  %856 = vst [vmem:[#allocation2 + $0x128] sm:$0xff] %v792
  %857 = vst [vmem:[#allocation2 + $0x130] sm:$0xff] %v793
  %858 = vst [vmem:[#allocation2 + $0x138] sm:$0xff] %v794
  %859 = vst [vmem:[#allocation2 + $0x140] sm:$0xff] %v795
  %860 = vst [vmem:[#allocation2 + $0x148] sm:$0xff] %v796
  %861 = vst [vmem:[#allocation2 + $0x150] sm:$0xff] %v797
  %862 = vst [vmem:[#allocation2 + $0x158] sm:$0xff] %v798
  %863 = vst [vmem:[#allocation2 + $0x160] sm:$0xff] %v799
  %864 = vst [vmem:[#allocation2 + $0x168] sm:$0xff] %v800
  %865 = vst [vmem:[#allocation2 + $0x170] sm:$0xff] %v801
  %866 = vst [vmem:[#allocation2 + $0x178] sm:$0xff] %v802
  %867 = vst [vmem:[#allocation2 + $0x180] sm:$0xff] %v803
  %868 = vst [vmem:[#allocation2 + $0x188] sm:$0xff] %v804
  %869 = vst [vmem:[#allocation2 + $0x190] sm:$0xff] %v805
  %870 = vst [vmem:[#allocation2 + $0x198] sm:$0xff] %v806
  %871 = vst [vmem:[#allocation2 + $0x1a0] sm:$0xff] %v807
  %872 = vst [vmem:[#allocation2 + $0x1a8] sm:$0xff] %v808
  %873 = vst [vmem:[#allocation2 + $0x1b0] sm:$0xff] %v809
  %874 = vst [vmem:[#allocation2 + $0x1b8] sm:$0xff] %v810
  %875 = vst [vmem:[#allocation2 + $0x1c0] sm:$0xff] %v811
  %876 = vst [vmem:[#allocation2 + $0x1c8] sm:$0xff] %v812
  %877 = vst [vmem:[#allocation2 + $0x1d0] sm:$0xff] %v813
  %878 = vst [vmem:[#allocation2 + $0x1d8] sm:$0xff] %v814
  %879 = vst [vmem:[#allocation2 + $0x1e0] sm:$0xff] %v815
  %880 = vst [vmem:[#allocation2 + $0x1e8] sm:$0xff] %v816
  %881 = vst [vmem:[#allocation2 + $0x1f0] sm:$0xff] %v817
  %882 = vst [vmem:[#allocation2 + $0x1f8] sm:$0xff] %v818
  // Predicated region
  $region14: #{discriminator_forward.9} parent=0 // pred_check
    %p883 = pneg %p14
  $region15: #{discriminator_forward.9} parent=0 // pred_check_branch
    %885 = sbr.rel (%p883) target = $region17
  $region16: #{discriminator_forward.9} parent=0 // pred_region
    %v886 = vld [vmem:[#allocation2] sm:$0xff]
    %v887 = vld [vmem:[#allocation2 + $0x8] sm:$0xff]
    %v888 = vld [vmem:[#allocation2 + $0x10] sm:$0xff]
    %v889 = vld [vmem:[#allocation2 + $0x18] sm:$0xff]
    %v890 = vld [vmem:[#allocation2 + $0x20] sm:$0xff]
    %v891 = vld [vmem:[#allocation2 + $0x28] sm:$0xff]
    %v892 = vld [vmem:[#allocation2 + $0x30] sm:$0xff]
    %v893 = vld [vmem:[#allocation2 + $0x38] sm:$0xff]
    %v894 = vld [vmem:[#allocation2 + $0x40] sm:$0xff]
    %v895 = vld [vmem:[#allocation2 + $0x48] sm:$0xff]
    %v896 = vld [vmem:[#allocation2 + $0x50] sm:$0xff]
    %v897 = vld [vmem:[#allocation2 + $0x58] sm:$0xff]
    %v898 = vld [vmem:[#allocation2 + $0x60] sm:$0xff]
    %v899 = vld [vmem:[#allocation2 + $0x68] sm:$0xff]
    %v900 = vld [vmem:[#allocation2 + $0x70] sm:$0xff]
    %v901 = vld [vmem:[#allocation2 + $0x78] sm:$0xff]
    %v902 = vld [vmem:[#allocation2 + $0x80] sm:$0xff]
    %v903 = vld [vmem:[#allocation2 + $0x88] sm:$0xff]
    %v904 = vld [vmem:[#allocation2 + $0x90] sm:$0xff]
    %v905 = vld [vmem:[#allocation2 + $0x98] sm:$0xff]
    %v906 = vld [vmem:[#allocation2 + $0xa0] sm:$0xff]
    %v907 = vld [vmem:[#allocation2 + $0xa8] sm:$0xff]
    %v908 = vld [vmem:[#allocation2 + $0xb0] sm:$0xff]
    %v909 = vld [vmem:[#allocation2 + $0xb8] sm:$0xff]
    %v910 = vld [vmem:[#allocation2 + $0xc0] sm:$0xff]
    %v911 = vld [vmem:[#allocation2 + $0xc8] sm:$0xff]
    %v912 = vld [vmem:[#allocation2 + $0xd0] sm:$0xff]
    %v913 = vld [vmem:[#allocation2 + $0xd8] sm:$0xff]
    %v914 = vld [vmem:[#allocation2 + $0xe0] sm:$0xff]
    %v915 = vld [vmem:[#allocation2 + $0xe8] sm:$0xff]
    %v916 = vld [vmem:[#allocation2 + $0xf0] sm:$0xff]
    %v917 = vld [vmem:[#allocation2 + $0xf8] sm:$0xff]
    %v918 = vld [vmem:[#allocation2 + $0x100] sm:$0xff]
    %v919 = vld [vmem:[#allocation2 + $0x108] sm:$0xff]
    %v920 = vld [vmem:[#allocation2 + $0x110] sm:$0xff]
    %v921 = vld [vmem:[#allocation2 + $0x118] sm:$0xff]
    %v922 = vld [vmem:[#allocation2 + $0x120] sm:$0xff]
    %v923 = vld [vmem:[#allocation2 + $0x128] sm:$0xff]
    %v924 = vld [vmem:[#allocation2 + $0x130] sm:$0xff]
    %v925 = vld [vmem:[#allocation2 + $0x138] sm:$0xff]
    %v926 = vld [vmem:[#allocation2 + $0x140] sm:$0xff]
    %v927 = vld [vmem:[#allocation2 + $0x148] sm:$0xff]
    %v928 = vld [vmem:[#allocation2 + $0x150] sm:$0xff]
    %v929 = vld [vmem:[#allocation2 + $0x158] sm:$0xff]
    %v930 = vld [vmem:[#allocation2 + $0x160] sm:$0xff]
    %v931 = vld [vmem:[#allocation2 + $0x168] sm:$0xff]
    %v932 = vld [vmem:[#allocation2 + $0x170] sm:$0xff]
    %v933 = vld [vmem:[#allocation2 + $0x178] sm:$0xff]
    %v934 = vld [vmem:[#allocation2 + $0x180] sm:$0xff]
    %v935 = vld [vmem:[#allocation2 + $0x188] sm:$0xff]
    %v936 = vld [vmem:[#allocation2 + $0x190] sm:$0xff]
    %v937 = vld [vmem:[#allocation2 + $0x198] sm:$0xff]
    %v938 = vld [vmem:[#allocation2 + $0x1a0] sm:$0xff]
    %v939 = vld [vmem:[#allocation2 + $0x1a8] sm:$0xff]
    %v940 = vld [vmem:[#allocation2 + $0x1b0] sm:$0xff]
    %v941 = vld [vmem:[#allocation2 + $0x1b8] sm:$0xff]
    %v942 = vld [vmem:[#allocation2 + $0x1c0] sm:$0xff]
    %v943 = vld [vmem:[#allocation2 + $0x1c8] sm:$0xff]
    %v944 = vld [vmem:[#allocation2 + $0x1d0] sm:$0xff]
    %v945 = vld [vmem:[#allocation2 + $0x1d8] sm:$0xff]
    %v946 = vld [vmem:[#allocation2 + $0x1e0] sm:$0xff]
    %v947 = vld [vmem:[#allocation2 + $0x1e8] sm:$0xff]
    %v948 = vld [vmem:[#allocation2 + $0x1f0] sm:$0xff]
    %v949 = vld [vmem:[#allocation2 + $0x1f8] sm:$0xff]
    %950 = vst [vmem:[%s2] sm:$0xff] %v886
    %951 = vst [vmem:[%s2 + $0x8] sm:$0xff] %v887
    %952 = vst [vmem:[%s2 + $0x10] sm:$0xff] %v888
    %953 = vst [vmem:[%s2 + $0x18] sm:$0xff] %v889
    %954 = vst [vmem:[%s2 + $0x20] sm:$0xff] %v890
    %955 = vst [vmem:[%s2 + $0x28] sm:$0xff] %v891
    %956 = vst [vmem:[%s2 + $0x30] sm:$0xff] %v892
    %957 = vst [vmem:[%s2 + $0x38] sm:$0xff] %v893
    %958 = vst [vmem:[%s2 + $0x40] sm:$0xff] %v894
    %959 = vst [vmem:[%s2 + $0x48] sm:$0xff] %v895
    %960 = vst [vmem:[%s2 + $0x50] sm:$0xff] %v896
    %961 = vst [vmem:[%s2 + $0x58] sm:$0xff] %v897
    %962 = vst [vmem:[%s2 + $0x60] sm:$0xff] %v898
    %963 = vst [vmem:[%s2 + $0x68] sm:$0xff] %v899
    %964 = vst [vmem:[%s2 + $0x70] sm:$0xff] %v900
    %965 = vst [vmem:[%s2 + $0x78] sm:$0xff] %v901
    %966 = vst [vmem:[%s2 + $0x80] sm:$0xff] %v902
    %967 = vst [vmem:[%s2 + $0x88] sm:$0xff] %v903
    %968 = vst [vmem:[%s2 + $0x90] sm:$0xff] %v904
    %969 = vst [vmem:[%s2 + $0x98] sm:$0xff] %v905
    %970 = vst [vmem:[%s2 + $0xa0] sm:$0xff] %v906
    %971 = vst [vmem:[%s2 + $0xa8] sm:$0xff] %v907
    %972 = vst [vmem:[%s2 + $0xb0] sm:$0xff] %v908
    %973 = vst [vmem:[%s2 + $0xb8] sm:$0xff] %v909
    %974 = vst [vmem:[%s2 + $0xc0] sm:$0xff] %v910
    %975 = vst [vmem:[%s2 + $0xc8] sm:$0xff] %v911
    %976 = vst [vmem:[%s2 + $0xd0] sm:$0xff] %v912
    %977 = vst [vmem:[%s2 + $0xd8] sm:$0xff] %v913
    %978 = vst [vmem:[%s2 + $0xe0] sm:$0xff] %v914
    %979 = vst [vmem:[%s2 + $0xe8] sm:$0xff] %v915
    %980 = vst [vmem:[%s2 + $0xf0] sm:$0xff] %v916
    %981 = vst [vmem:[%s2 + $0xf8] sm:$0xff] %v917
    %982 = vst [vmem:[%s2 + $0x100] sm:$0xff] %v918
    %983 = vst [vmem:[%s2 + $0x108] sm:$0xff] %v919
    %984 = vst [vmem:[%s2 + $0x110] sm:$0xff] %v920
    %985 = vst [vmem:[%s2 + $0x118] sm:$0xff] %v921
    %986 = vst [vmem:[%s2 + $0x120] sm:$0xff] %v922
    %987 = vst [vmem:[%s2 + $0x128] sm:$0xff] %v923
    %988 = vst [vmem:[%s2 + $0x130] sm:$0xff] %v924
    %989 = vst [vmem:[%s2 + $0x138] sm:$0xff] %v925
    %990 = vst [vmem:[%s2 + $0x140] sm:$0xff] %v926
    %991 = vst [vmem:[%s2 + $0x148] sm:$0xff] %v927
    %992 = vst [vmem:[%s2 + $0x150] sm:$0xff] %v928
    %993 = vst [vmem:[%s2 + $0x158] sm:$0xff] %v929
    %994 = vst [vmem:[%s2 + $0x160] sm:$0xff] %v930
    %995 = vst [vmem:[%s2 + $0x168] sm:$0xff] %v931
    %996 = vst [vmem:[%s2 + $0x170] sm:$0xff] %v932
    %997 = vst [vmem:[%s2 + $0x178] sm:$0xff] %v933
    %998 = vst [vmem:[%s2 + $0x180] sm:$0xff] %v934
    %999 = vst [vmem:[%s2 + $0x188] sm:$0xff] %v935
    %1000 = vst [vmem:[%s2 + $0x190] sm:$0xff] %v936
    %1001 = vst [vmem:[%s2 + $0x198] sm:$0xff] %v937
    %1002 = vst [vmem:[%s2 + $0x1a0] sm:$0xff] %v938
    %1003 = vst [vmem:[%s2 + $0x1a8] sm:$0xff] %v939
    %1004 = vst [vmem:[%s2 + $0x1b0] sm:$0xff] %v940
    %1005 = vst [vmem:[%s2 + $0x1b8] sm:$0xff] %v941
    %1006 = vst [vmem:[%s2 + $0x1c0] sm:$0xff] %v942
    %1007 = vst [vmem:[%s2 + $0x1c8] sm:$0xff] %v943
    %1008 = vst [vmem:[%s2 + $0x1d0] sm:$0xff] %v944
    %1009 = vst [vmem:[%s2 + $0x1d8] sm:$0xff] %v945
    %1010 = vst [vmem:[%s2 + $0x1e0] sm:$0xff] %v946
    %1011 = vst [vmem:[%s2 + $0x1e8] sm:$0xff] %v947
    %1012 = vst [vmem:[%s2 + $0x1f0] sm:$0xff] %v948
    %1013 = vst [vmem:[%s2 + $0x1f8] sm:$0xff] %v949
    %v1014 = vadd.f32 %v886, %v887
    %v1015 = vadd.f32 %v1014, %v888
    %v1016 = vadd.f32 %v1015, %v889
    %v1017 = vadd.f32 %v1016, %v890
    %v1018 = vadd.f32 %v1017, %v891
    %v1019 = vadd.f32 %v1018, %v892
    %v1020 = vadd.f32 %v1019, %v893
    %v1021 = vadd.f32 %v1020, %v894
    %v1022 = vadd.f32 %v1021, %v895
    %v1023 = vadd.f32 %v1022, %v896
    %v1024 = vadd.f32 %v1023, %v897
    %v1025 = vadd.f32 %v1024, %v898
    %v1026 = vadd.f32 %v1025, %v899
    %v1027 = vadd.f32 %v1026, %v900
    %v1028 = vadd.f32 %v1027, %v901
    %v1029 = vadd.f32 %v1028, %v902
    %v1030 = vadd.f32 %v1029, %v903
    %v1031 = vadd.f32 %v1030, %v904
    %v1032 = vadd.f32 %v1031, %v905
    %v1033 = vadd.f32 %v1032, %v906
    %v1034 = vadd.f32 %v1033, %v907
    %v1035 = vadd.f32 %v1034, %v908
    %v1036 = vadd.f32 %v1035, %v909
    %v1037 = vadd.f32 %v1036, %v910
    %v1038 = vadd.f32 %v1037, %v911
    %v1039 = vadd.f32 %v1038, %v912
    %v1040 = vadd.f32 %v1039, %v913
    %v1041 = vadd.f32 %v1040, %v914
    %v1042 = vadd.f32 %v1041, %v915
    %v1043 = vadd.f32 %v1042, %v916
    %v1044 = vadd.f32 %v1043, %v917
    %v1045 = vadd.f32 %v1044, %v918
    %v1046 = vadd.f32 %v1045, %v919
    %v1047 = vadd.f32 %v1046, %v920
    %v1048 = vadd.f32 %v1047, %v921
    %v1049 = vadd.f32 %v1048, %v922
    %v1050 = vadd.f32 %v1049, %v923
    %v1051 = vadd.f32 %v1050, %v924
    %v1052 = vadd.f32 %v1051, %v925
    %v1053 = vadd.f32 %v1052, %v926
    %v1054 = vadd.f32 %v1053, %v927
    %v1055 = vadd.f32 %v1054, %v928
    %v1056 = vadd.f32 %v1055, %v929
    %v1057 = vadd.f32 %v1056, %v930
    %v1058 = vadd.f32 %v1057, %v931
    %v1059 = vadd.f32 %v1058, %v932
    %v1060 = vadd.f32 %v1059, %v933
    %v1061 = vadd.f32 %v1060, %v934
    %v1062 = vadd.f32 %v1061, %v935
    %v1063 = vadd.f32 %v1062, %v936
    %v1064 = vadd.f32 %v1063, %v937
    %v1065 = vadd.f32 %v1064, %v938
    %v1066 = vadd.f32 %v1065, %v939
    %v1067 = vadd.f32 %v1066, %v940
    %v1068 = vadd.f32 %v1067, %v941
    %v1069 = vadd.f32 %v1068, %v942
    %v1070 = vadd.f32 %v1069, %v943
    %v1071 = vadd.f32 %v1070, %v944
    %v1072 = vadd.f32 %v1071, %v945
    %v1073 = vadd.f32 %v1072, %v946
    %v1074 = vadd.f32 %v1073, %v947
    %v1075 = vadd.f32 %v1074, %v948
    %v1076 = vadd.f32 %v1075, %v949
    %v1077 = vrot.slane %v1076, 4
    %v1078 = vadd.f32 %v1076, %v1077
    %v1079 = vrot.slane %v1078, 2
    %v1080 = vadd.f32 %v1078, %v1079
    %v1081 = vrot.slane %v1080, 1
    %v1082 = vadd.f32 %v1080, %v1081
    %v1083 = vmul.f32 %v886, %v886
    %v1084 = vmul.f32 %v887, %v887
    %v1085 = vmul.f32 %v888, %v888
    %v1086 = vmul.f32 %v889, %v889
    %v1087 = vmul.f32 %v890, %v890
    %v1088 = vmul.f32 %v891, %v891
    %v1089 = vmul.f32 %v892, %v892
    %v1090 = vmul.f32 %v893, %v893
    %v1091 = vmul.f32 %v894, %v894
    %v1092 = vmul.f32 %v895, %v895
    %v1093 = vmul.f32 %v896, %v896
    %v1094 = vmul.f32 %v897, %v897
    %v1095 = vmul.f32 %v898, %v898
    %v1096 = vmul.f32 %v899, %v899
    %v1097 = vmul.f32 %v900, %v900
    %v1098 = vmul.f32 %v901, %v901
    %v1099 = vmul.f32 %v902, %v902
    %v1100 = vmul.f32 %v903, %v903
    %v1101 = vmul.f32 %v904, %v904
    %v1102 = vmul.f32 %v905, %v905
    %v1103 = vmul.f32 %v906, %v906
    %v1104 = vmul.f32 %v907, %v907
    %v1105 = vmul.f32 %v908, %v908
    %v1106 = vmul.f32 %v909, %v909
    %v1107 = vmul.f32 %v910, %v910
    %v1108 = vmul.f32 %v911, %v911
    %v1109 = vmul.f32 %v912, %v912
    %v1110 = vmul.f32 %v913, %v913
    %v1111 = vmul.f32 %v914, %v914
    %v1112 = vmul.f32 %v915, %v915
    %v1113 = vmul.f32 %v916, %v916
    %v1114 = vmul.f32 %v917, %v917
    %v1115 = vmul.f32 %v918, %v918
    %v1116 = vmul.f32 %v919, %v919
    %v1117 = vmul.f32 %v920, %v920
    %v1118 = vmul.f32 %v921, %v921
    %v1119 = vmul.f32 %v922, %v922
    %v1120 = vmul.f32 %v923, %v923
    %v1121 = vmul.f32 %v924, %v924
    %v1122 = vmul.f32 %v925, %v925
    %v1123 = vmul.f32 %v926, %v926
    %v1124 = vmul.f32 %v927, %v927
    %v1125 = vmul.f32 %v928, %v928
    %v1126 = vmul.f32 %v929, %v929
    %v1127 = vmul.f32 %v930, %v930
    %v1128 = vmul.f32 %v931, %v931
    %v1129 = vmul.f32 %v932, %v932
    %v1130 = vmul.f32 %v933, %v933
    %v1131 = vmul.f32 %v934, %v934
    %v1132 = vmul.f32 %v935, %v935
    %v1133 = vmul.f32 %v936, %v936
    %v1134 = vmul.f32 %v937, %v937
    %v1135 = vmul.f32 %v938, %v938
    %v1136 = vmul.f32 %v939, %v939
    %v1137 = vmul.f32 %v940, %v940
    %v1138 = vmul.f32 %v941, %v941
    %v1139 = vmul.f32 %v942, %v942
    %v1140 = vmul.f32 %v943, %v943
    %v1141 = vmul.f32 %v944, %v944
    %v1142 = vmul.f32 %v945, %v945
    %v1143 = vmul.f32 %v946, %v946
    %v1144 = vmul.f32 %v947, %v947
    %v1145 = vmul.f32 %v948, %v948
    %v1146 = vmul.f32 %v949, %v949
    %v1147 = vadd.f32 %v1083, %v1084
    %v1148 = vadd.f32 %v1147, %v1085
    %v1149 = vadd.f32 %v1148, %v1086
    %v1150 = vadd.f32 %v1149, %v1087
    %v1151 = vadd.f32 %v1150, %v1088
    %v1152 = vadd.f32 %v1151, %v1089
    %v1153 = vadd.f32 %v1152, %v1090
    %v1154 = vadd.f32 %v1153, %v1091
    %v1155 = vadd.f32 %v1154, %v1092
    %v1156 = vadd.f32 %v1155, %v1093
    %v1157 = vadd.f32 %v1156, %v1094
    %v1158 = vadd.f32 %v1157, %v1095
    %v1159 = vadd.f32 %v1158, %v1096
    %v1160 = vadd.f32 %v1159, %v1097
    %v1161 = vadd.f32 %v1160, %v1098
    %v1162 = vadd.f32 %v1161, %v1099
    %v1163 = vadd.f32 %v1162, %v1100
    %v1164 = vadd.f32 %v1163, %v1101
    %v1165 = vadd.f32 %v1164, %v1102
    %v1166 = vadd.f32 %v1165, %v1103
    %v1167 = vadd.f32 %v1166, %v1104
    %v1168 = vadd.f32 %v1167, %v1105
    %v1169 = vadd.f32 %v1168, %v1106
    %v1170 = vadd.f32 %v1169, %v1107
    %v1171 = vadd.f32 %v1170, %v1108
    %v1172 = vadd.f32 %v1171, %v1109
    %v1173 = vadd.f32 %v1172, %v1110
    %v1174 = vadd.f32 %v1173, %v1111
    %v1175 = vadd.f32 %v1174, %v1112
    %v1176 = vadd.f32 %v1175, %v1113
    %v1177 = vadd.f32 %v1176, %v1114
    %v1178 = vadd.f32 %v1177, %v1115
    %v1179 = vadd.f32 %v1178, %v1116
    %v1180 = vadd.f32 %v1179, %v1117
    %v1181 = vadd.f32 %v1180, %v1118
    %v1182 = vadd.f32 %v1181, %v1119
    %v1183 = vadd.f32 %v1182, %v1120
    %v1184 = vadd.f32 %v1183, %v1121
    %v1185 = vadd.f32 %v1184, %v1122
    %v1186 = vadd.f32 %v1185, %v1123
    %v1187 = vadd.f32 %v1186, %v1124
    %v1188 = vadd.f32 %v1187, %v1125
    %v1189 = vadd.f32 %v1188, %v1126
    %v1190 = vadd.f32 %v1189, %v1127
    %v1191 = vadd.f32 %v1190, %v1128
    %v1192 = vadd.f32 %v1191, %v1129
    %v1193 = vadd.f32 %v1192, %v1130
    %v1194 = vadd.f32 %v1193, %v1131
    %v1195 = vadd.f32 %v1194, %v1132
    %v1196 = vadd.f32 %v1195, %v1133
    %v1197 = vadd.f32 %v1196, %v1134
    %v1198 = vadd.f32 %v1197, %v1135
    %v1199 = vadd.f32 %v1198, %v1136
    %v1200 = vadd.f32 %v1199, %v1137
    %v1201 = vadd.f32 %v1200, %v1138
    %v1202 = vadd.f32 %v1201, %v1139
    %v1203 = vadd.f32 %v1202, %v1140
    %v1204 = vadd.f32 %v1203, %v1141
    %v1205 = vadd.f32 %v1204, %v1142
    %v1206 = vadd.f32 %v1205, %v1143
    %v1207 = vadd.f32 %v1206, %v1144
    %v1208 = vadd.f32 %v1207, %v1145
    %v1209 = vadd.f32 %v1208, %v1146
    %v1210 = vrot.slane %v1209, 4
    %v1211 = vadd.f32 %v1209, %v1210
    %v1212 = vrot.slane %v1211, 2
    %v1213 = vadd.f32 %v1211, %v1212
    %v1214 = vrot.slane %v1213, 1
    %v1215 = vadd.f32 %v1213, %v1214
    %v1216 = vlaneseq
    %v1217 = vshrl.u32 %v1216, 7
    %vm1218 = vcmp.eq.s32.totalorder %v1217, 0
    %vm1219 = vcmp.eq.s32.totalorder %v1217, 1
    %v1220 = vsel %vm1219, %v1215, 0.0
    %v1221 = vsel %vm1218, %v1082, %v1220
    %1222 = vst [vmem:[%s3] sm:$0xff] %v1221
  $region17: #{discriminator_forward.9} parent=0 // pred_fallthru
    _
  // Predicated region
  $region18: #{discriminator_forward.9} parent=0 // pred_check
    _
  $region19: #{discriminator_forward.9} parent=0 // pred_check_branch
    %1224 = sbr.rel (0) target = $region21
  $region20: #{discriminator_forward.9} parent=0 // pred_region
    _
  $region21: #{discriminator_forward.9} parent=0 // pred_fallthru
    _
  // Predicated region
  $region22: #{discriminator_forward.9} parent=0 // pred_check
    _
  $region23: #{discriminator_forward.9} parent=0 // pred_check_branch
    %1226 = sbr.rel (0) target = $region25
  $region24: #{discriminator_forward.9} parent=0 // pred_region
    _
  $region25: #{discriminator_forward.9} parent=0 // pred_fallthru
    _
  // Predicated region
  $region26: #{discriminator_forward.9} parent=0 // pred_check
    _
  $region27: #{discriminator_forward.9} parent=0 // pred_check_branch
    %1228 = sbr.rel (0) target = $region29
  $region28: #{discriminator_forward.9} parent=0 // pred_region
    _
  $region29: #{discriminator_forward.9} parent=0 // pred_fallthru
    _
  // Predicated region
  $region30: #{discriminator_forward.9} parent=0 // pred_check
    _
  $region31: #{discriminator_forward.9} parent=0 // pred_check_branch
    %1230 = sbr.rel (0) target = $region33
  $region32: #{discriminator_forward.9} parent=0 // pred_region
    _
  $region33: #{discriminator_forward.9} parent=0 // pred_fallthru
    _

// kernel: discriminator_forward.10
$region0: #{discriminator_forward.10}
  #allocation0 [shape = 'u32[]', space=smem, size = 0x4, offset = 0x4, fixed_abs, tag = 'smem constant byte address 0x4 - core index']
  #allocation1 [shape = 'u32[144,128]{1,0:T(1,128)}', space=vmem, size = 0x12000, scoped, tag = 'internal scratch']
  %s0 = inlined_call_operand.vmem [shape: f32[512,128], index: 0, kind: input, shape index: {}]
  %s1 = inlined_call_operand.vmem [shape: f32[1,128], index: 1, kind: input, shape index: {}]
  %s2 = inlined_call_operand.vmem [shape: f32[1,128], index: 2, kind: input, shape index: {}]
  %s3 = inlined_call_operand.vmem [shape: bf16[512,128], index: 3, kind: output, shape index: {}]
  %s4 = sld [smem:[#allocation0]]
  $region22: #{discriminator_forward.10} parent=0
    _
  %s6 = ssub.s32 1, %s4
  %s7 = scalar_select 0, %s6, %s4
  // Predicated region
  $region2: #{discriminator_forward.10} parent=0 // pred_check
    _
  $region3: #{discriminator_forward.10} parent=0 // pred_check_branch
    %9 = sbr.rel (0) target = $region5
  $region4: #{discriminator_forward.10} parent=0 // pred_region
    _
  $region5: #{discriminator_forward.10} parent=0 // pred_fallthru
    _
  // Predicated region
  $region6: #{discriminator_forward.10} parent=0 // pred_check
    _
  $region7: #{discriminator_forward.10} parent=0 // pred_check_branch
    %11 = sbr.rel (0) target = $region9
  $region8: #{discriminator_forward.10} parent=0 // pred_region
    _
  $region9: #{discriminator_forward.10} parent=0 // pred_fallthru
    _
  // Predicated region
  $region10: #{discriminator_forward.10} parent=0 // pred_check
    _
  $region11: #{discriminator_forward.10} parent=0 // pred_check_branch
    %13 = sbr.rel (0) target = $region13
  $region12: #{discriminator_forward.10} parent=0 // pred_region
    _
  $region13: #{discriminator_forward.10} parent=0 // pred_fallthru
    _
  %v14 = vld [vmem:[%s0] sm:$0xff]
  %v15 = vld [vmem:[%s0 + $0x8] sm:$0xff]
  %v16 = vld [vmem:[%s0 + $0x10] sm:$0xff]
  %v17 = vld [vmem:[%s0 + $0x18] sm:$0xff]
  %v18 = vld [vmem:[%s0 + $0x20] sm:$0xff]
  %v19 = vld [vmem:[%s0 + $0x28] sm:$0xff]
  %v20 = vld [vmem:[%s0 + $0x30] sm:$0xff]
  %v21 = vld [vmem:[%s0 + $0x38] sm:$0xff]
  %v22 = vld [vmem:[%s0 + $0x40] sm:$0xff]
  %v23 = vld [vmem:[%s0 + $0x48] sm:$0xff]
  %v24 = vld [vmem:[%s0 + $0x50] sm:$0xff]
  %v25 = vld [vmem:[%s0 + $0x58] sm:$0xff]
  %v26 = vld [vmem:[%s0 + $0x60] sm:$0xff]
  %v27 = vld [vmem:[%s0 + $0x68] sm:$0xff]
  %v28 = vld [vmem:[%s0 + $0x70] sm:$0xff]
  %v29 = vld [vmem:[%s0 + $0x78] sm:$0xff]
  %v30 = vld [vmem:[%s0 + $0x80] sm:$0xff]
  %v31 = vld [vmem:[%s0 + $0x88] sm:$0xff]
  %v32 = vld [vmem:[%s0 + $0x90] sm:$0xff]
  %v33 = vld [vmem:[%s0 + $0x98] sm:$0xff]
  %v34 = vld [vmem:[%s0 + $0xa0] sm:$0xff]
  %v35 = vld [vmem:[%s0 + $0xa8] sm:$0xff]
  %v36 = vld [vmem:[%s0 + $0xb0] sm:$0xff]
  %v37 = vld [vmem:[%s0 + $0xb8] sm:$0xff]
  %v38 = vld [vmem:[%s0 + $0xc0] sm:$0xff]
  %v39 = vld [vmem:[%s0 + $0xc8] sm:$0xff]
  %v40 = vld [vmem:[%s0 + $0xd0] sm:$0xff]
  %v41 = vld [vmem:[%s0 + $0xd8] sm:$0xff]
  %v42 = vld [vmem:[%s0 + $0xe0] sm:$0xff]
  %v43 = vld [vmem:[%s0 + $0xe8] sm:$0xff]
  %v44 = vld [vmem:[%s0 + $0xf0] sm:$0xff]
  %v45 = vld [vmem:[%s0 + $0xf8] sm:$0xff]
  %v46 = vld [vmem:[%s0 + $0x100] sm:$0xff]
  %v47 = vld [vmem:[%s0 + $0x108] sm:$0xff]
  %v48 = vld [vmem:[%s0 + $0x110] sm:$0xff]
  %v49 = vld [vmem:[%s0 + $0x118] sm:$0xff]
  %v50 = vld [vmem:[%s0 + $0x120] sm:$0xff]
  %v51 = vld [vmem:[%s0 + $0x128] sm:$0xff]
  %v52 = vld [vmem:[%s0 + $0x130] sm:$0xff]
  %v53 = vld [vmem:[%s0 + $0x138] sm:$0xff]
  %v54 = vld [vmem:[%s0 + $0x140] sm:$0xff]
  %v55 = vld [vmem:[%s0 + $0x148] sm:$0xff]
  %v56 = vld [vmem:[%s0 + $0x150] sm:$0xff]
  %v57 = vld [vmem:[%s0 + $0x158] sm:$0xff]
  %v58 = vld [vmem:[%s0 + $0x160] sm:$0xff]
  %v59 = vld [vmem:[%s0 + $0x168] sm:$0xff]
  %v60 = vld [vmem:[%s0 + $0x170] sm:$0xff]
  %v61 = vld [vmem:[%s0 + $0x178] sm:$0xff]
  %v62 = vld [vmem:[%s0 + $0x180] sm:$0xff]
  %v63 = vld [vmem:[%s0 + $0x188] sm:$0xff]
  %v64 = vld [vmem:[%s0 + $0x190] sm:$0xff]
  %v65 = vld [vmem:[%s0 + $0x198] sm:$0xff]
  %v66 = vld [vmem:[%s0 + $0x1a0] sm:$0xff]
  %v67 = vld [vmem:[%s0 + $0x1a8] sm:$0xff]
  %v68 = vld [vmem:[%s0 + $0x1b0] sm:$0xff]
  %v69 = vld [vmem:[%s0 + $0x1b8] sm:$0xff]
  %v70 = vld [vmem:[%s0 + $0x1c0] sm:$0xff]
  %v71 = vld [vmem:[%s0 + $0x1c8] sm:$0xff]
  %v72 = vld [vmem:[%s0 + $0x1d0] sm:$0xff]
  %v73 = vld [vmem:[%s0 + $0x1d8] sm:$0xff]
  %v74 = vld [vmem:[%s0 + $0x1e0] sm:$0xff]
  %v75 = vld [vmem:[%s0 + $0x1e8] sm:$0xff]
  %v76 = vld [vmem:[%s0 + $0x1f0] sm:$0xff]
  %v77 = vld [vmem:[%s0 + $0x1f8] sm:$0xff]
  %v78 = vld [vmem:[%s1] sm:$0x1]
  %v80 = vlaneseq
  %v81 = vshrl.u32 %v80, 7
  %v82 = vsub.s32 0, %v81
  %v83 = vrot.slane %v78, %v82
  %v85 = vmul.f32 %v14, %v83
  %v86 = vmul.f32 %v15, %v83
  %v87 = vmul.f32 %v16, %v83
  %v88 = vmul.f32 %v17, %v83
  %v89 = vmul.f32 %v18, %v83
  %v90 = vmul.f32 %v19, %v83
  %v91 = vmul.f32 %v20, %v83
  %v92 = vmul.f32 %v21, %v83
  %v93 = vmul.f32 %v22, %v83
  %v94 = vmul.f32 %v23, %v83
  %v95 = vmul.f32 %v24, %v83
  %v96 = vmul.f32 %v25, %v83
  %v97 = vmul.f32 %v26, %v83
  %v98 = vmul.f32 %v27, %v83
  %v99 = vmul.f32 %v28, %v83
  %v100 = vmul.f32 %v29, %v83
  %v101 = vmul.f32 %v30, %v83
  %v102 = vmul.f32 %v31, %v83
  %v103 = vmul.f32 %v32, %v83
  %v104 = vmul.f32 %v33, %v83
  %v105 = vmul.f32 %v34, %v83
  %v106 = vmul.f32 %v35, %v83
  %v107 = vmul.f32 %v36, %v83
  %v108 = vmul.f32 %v37, %v83
  %v109 = vmul.f32 %v38, %v83
  %v110 = vmul.f32 %v39, %v83
  %v111 = vmul.f32 %v40, %v83
  %v112 = vmul.f32 %v41, %v83
  %v113 = vmul.f32 %v42, %v83
  %v114 = vmul.f32 %v43, %v83
  %v115 = vmul.f32 %v44, %v83
  %v116 = vmul.f32 %v45, %v83
  %v117 = vmul.f32 %v46, %v83
  %v118 = vmul.f32 %v47, %v83
  %v119 = vmul.f32 %v48, %v83
  %v120 = vmul.f32 %v49, %v83
  %v121 = vmul.f32 %v50, %v83
  %v122 = vmul.f32 %v51, %v83
  %v123 = vmul.f32 %v52, %v83
  %v124 = vmul.f32 %v53, %v83
  %v125 = vmul.f32 %v54, %v83
  %v126 = vmul.f32 %v55, %v83
  %v127 = vmul.f32 %v56, %v83
  %v128 = vmul.f32 %v57, %v83
  %v129 = vmul.f32 %v58, %v83
  %v130 = vmul.f32 %v59, %v83
  %v131 = vmul.f32 %v60, %v83
  %v132 = vmul.f32 %v61, %v83
  %v133 = vmul.f32 %v62, %v83
  %v134 = vmul.f32 %v63, %v83
  %v135 = vmul.f32 %v64, %v83
  %v136 = vmul.f32 %v65, %v83
  %v137 = vmul.f32 %v66, %v83
  %v138 = vmul.f32 %v67, %v83
  %v139 = vmul.f32 %v68, %v83
  %v140 = vmul.f32 %v69, %v83
  %v141 = vmul.f32 %v70, %v83
  %v142 = vmul.f32 %v71, %v83
  %v143 = vmul.f32 %v72, %v83
  %v144 = vmul.f32 %v73, %v83
  %v145 = vmul.f32 %v74, %v83
  %v146 = vmul.f32 %v75, %v83
  %v147 = vmul.f32 %v76, %v83
  %v148 = vmul.f32 %v77, %v83
  %v149 = vld [vmem:[%s2] sm:$0x1]
  %v151 = vlaneseq
  %v152 = vshrl.u32 %v151, 7
  %v153 = vsub.s32 0, %v152
  %v154 = vrot.slane %v149, %v153
  %v156 = vadd.f32 %v85, %v154
  %v157 = vadd.f32 %v86, %v154
  %v158 = vadd.f32 %v87, %v154
  %v159 = vadd.f32 %v88, %v154
  %v160 = vadd.f32 %v89, %v154
  %v161 = vadd.f32 %v90, %v154
  %v162 = vadd.f32 %v91, %v154
  %v163 = vadd.f32 %v92, %v154
  %v164 = vadd.f32 %v93, %v154
  %v165 = vadd.f32 %v94, %v154
  %v166 = vadd.f32 %v95, %v154
  %v167 = vadd.f32 %v96, %v154
  %v168 = vadd.f32 %v97, %v154
  %v169 = vadd.f32 %v98, %v154
  %v170 = vadd.f32 %v99, %v154
  %v171 = vadd.f32 %v100, %v154
  %v172 = vadd.f32 %v101, %v154
  %v173 = vadd.f32 %v102, %v154
  %v174 = vadd.f32 %v103, %v154
  %v175 = vadd.f32 %v104, %v154
  %v176 = vadd.f32 %v105, %v154
  %v177 = vadd.f32 %v106, %v154
  %v178 = vadd.f32 %v107, %v154
  %v179 = vadd.f32 %v108, %v154
  %v180 = vadd.f32 %v109, %v154
  %v181 = vadd.f32 %v110, %v154
  %v182 = vadd.f32 %v111, %v154
  %v183 = vadd.f32 %v112, %v154
  %v184 = vadd.f32 %v113, %v154
  %v185 = vadd.f32 %v114, %v154
  %v186 = vadd.f32 %v115, %v154
  %v187 = vadd.f32 %v116, %v154
  %v188 = vadd.f32 %v117, %v154
  %v189 = vadd.f32 %v118, %v154
  %v190 = vadd.f32 %v119, %v154
  %v191 = vadd.f32 %v120, %v154
  %v192 = vadd.f32 %v121, %v154
  %v193 = vadd.f32 %v122, %v154
  %v194 = vadd.f32 %v123, %v154
  %v195 = vadd.f32 %v124, %v154
  %v196 = vadd.f32 %v125, %v154
  %v197 = vadd.f32 %v126, %v154
  %v198 = vadd.f32 %v127, %v154
  %v199 = vadd.f32 %v128, %v154
  %v200 = vadd.f32 %v129, %v154
  %v201 = vadd.f32 %v130, %v154
  %v202 = vadd.f32 %v131, %v154
  %v203 = vadd.f32 %v132, %v154
  %v204 = vadd.f32 %v133, %v154
  %v205 = vadd.f32 %v134, %v154
  %v206 = vadd.f32 %v135, %v154
  %v207 = vadd.f32 %v136, %v154
  %v208 = vadd.f32 %v137, %v154
  %v209 = vadd.f32 %v138, %v154
  %v210 = vadd.f32 %v139, %v154
  %v211 = vadd.f32 %v140, %v154
  %v212 = vadd.f32 %v141, %v154
  %v213 = vadd.f32 %v142, %v154
  %v214 = vadd.f32 %v143, %v154
  %v215 = vadd.f32 %v144, %v154
  %v216 = vadd.f32 %v145, %v154
  %v217 = vadd.f32 %v146, %v154
  %v218 = vadd.f32 %v147, %v154
  %v219 = vadd.f32 %v148, %v154
  %vm220 = vcmp.ge.f32.partialorder %v156, 0.0
  %vm221 = vcmp.ge.f32.partialorder %v157, 0.0
  %vm222 = vcmp.ge.f32.partialorder %v158, 0.0
  %vm223 = vcmp.ge.f32.partialorder %v159, 0.0
  %vm224 = vcmp.ge.f32.partialorder %v160, 0.0
  %vm225 = vcmp.ge.f32.partialorder %v161, 0.0
  %vm226 = vcmp.ge.f32.partialorder %v162, 0.0
  %vm227 = vcmp.ge.f32.partialorder %v163, 0.0
  %vm228 = vcmp.ge.f32.partialorder %v164, 0.0
  %vm229 = vcmp.ge.f32.partialorder %v165, 0.0
  %vm230 = vcmp.ge.f32.partialorder %v166, 0.0
  %vm231 = vcmp.ge.f32.partialorder %v167, 0.0
  %vm232 = vcmp.ge.f32.partialorder %v168, 0.0
  %vm233 = vcmp.ge.f32.partialorder %v169, 0.0
  %vm234 = vcmp.ge.f32.partialorder %v170, 0.0
  %vm235 = vcmp.ge.f32.partialorder %v171, 0.0
  %vm236 = vcmp.ge.f32.partialorder %v172, 0.0
  %vm237 = vcmp.ge.f32.partialorder %v173, 0.0
  %vm238 = vcmp.ge.f32.partialorder %v174, 0.0
  %vm239 = vcmp.ge.f32.partialorder %v175, 0.0
  %vm240 = vcmp.ge.f32.partialorder %v176, 0.0
  %vm241 = vcmp.ge.f32.partialorder %v177, 0.0
  %vm242 = vcmp.ge.f32.partialorder %v178, 0.0
  %vm243 = vcmp.ge.f32.partialorder %v179, 0.0
  %vm244 = vcmp.ge.f32.partialorder %v180, 0.0
  %vm245 = vcmp.ge.f32.partialorder %v181, 0.0
  %vm246 = vcmp.ge.f32.partialorder %v182, 0.0
  %vm247 = vcmp.ge.f32.partialorder %v183, 0.0
  %vm248 = vcmp.ge.f32.partialorder %v184, 0.0
  %vm249 = vcmp.ge.f32.partialorder %v185, 0.0
  %vm250 = vcmp.ge.f32.partialorder %v186, 0.0
  %vm251 = vcmp.ge.f32.partialorder %v187, 0.0
  %vm252 = vcmp.ge.f32.partialorder %v188, 0.0
  %vm253 = vcmp.ge.f32.partialorder %v189, 0.0
  %vm254 = vcmp.ge.f32.partialorder %v190, 0.0
  %vm255 = vcmp.ge.f32.partialorder %v191, 0.0
  %vm256 = vcmp.ge.f32.partialorder %v192, 0.0
  %vm257 = vcmp.ge.f32.partialorder %v193, 0.0
  %vm258 = vcmp.ge.f32.partialorder %v194, 0.0
  %vm259 = vcmp.ge.f32.partialorder %v195, 0.0
  %vm260 = vcmp.ge.f32.partialorder %v196, 0.0
  %vm261 = vcmp.ge.f32.partialorder %v197, 0.0
  %vm262 = vcmp.ge.f32.partialorder %v198, 0.0
  %vm263 = vcmp.ge.f32.partialorder %v199, 0.0
  %vm264 = vcmp.ge.f32.partialorder %v200, 0.0
  %vm265 = vcmp.ge.f32.partialorder %v201, 0.0
  %vm266 = vcmp.ge.f32.partialorder %v202, 0.0
  %vm267 = vcmp.ge.f32.partialorder %v203, 0.0
  %vm268 = vcmp.ge.f32.partialorder %v204, 0.0
  %vm269 = vcmp.ge.f32.partialorder %v205, 0.0
  %vm270 = vcmp.ge.f32.partialorder %v206, 0.0
  %vm271 = vcmp.ge.f32.partialorder %v207, 0.0
  %vm272 = vcmp.ge.f32.partialorder %v208, 0.0
  %vm273 = vcmp.ge.f32.partialorder %v209, 0.0
  %vm274 = vcmp.ge.f32.partialorder %v210, 0.0
  %vm275 = vcmp.ge.f32.partialorder %v211, 0.0
  %vm276 = vcmp.ge.f32.partialorder %v212, 0.0
  %vm277 = vcmp.ge.f32.partialorder %v213, 0.0
  %vm278 = vcmp.ge.f32.partialorder %v214, 0.0
  %vm279 = vcmp.ge.f32.partialorder %v215, 0.0
  %vm280 = vcmp.ge.f32.partialorder %v216, 0.0
  %vm281 = vcmp.ge.f32.partialorder %v217, 0.0
  %vm282 = vcmp.ge.f32.partialorder %v218, 0.0
  %vm283 = vcmp.ge.f32.partialorder %v219, 0.0
  %v284 = vmul.f32 %v156, 0.2
  %v285 = vmul.f32 %v157, 0.2
  %v286 = vmul.f32 %v158, 0.2
  %v287 = vmul.f32 %v159, 0.2
  %v288 = vmul.f32 %v160, 0.2
  %v289 = vmul.f32 %v161, 0.2
  %v290 = vmul.f32 %v162, 0.2
  %v291 = vmul.f32 %v163, 0.2
  %v292 = vmul.f32 %v164, 0.2
  %v293 = vmul.f32 %v165, 0.2
  %v294 = vmul.f32 %v166, 0.2
  %v295 = vmul.f32 %v167, 0.2
  %v296 = vmul.f32 %v168, 0.2
  %v297 = vmul.f32 %v169, 0.2
  %v298 = vmul.f32 %v170, 0.2
  %v299 = vmul.f32 %v171, 0.2
  %v300 = vmul.f32 %v172, 0.2
  %v301 = vmul.f32 %v173, 0.2
  %v302 = vmul.f32 %v174, 0.2
  %v303 = vmul.f32 %v175, 0.2
  %v304 = vmul.f32 %v176, 0.2
  %v305 = vmul.f32 %v177, 0.2
  %v306 = vmul.f32 %v178, 0.2
  %v307 = vmul.f32 %v179, 0.2
  %v308 = vmul.f32 %v180, 0.2
  %v309 = vmul.f32 %v181, 0.2
  %v310 = vmul.f32 %v182, 0.2
  %v311 = vmul.f32 %v183, 0.2
  %v312 = vmul.f32 %v184, 0.2
  %v313 = vmul.f32 %v185, 0.2
  %v314 = vmul.f32 %v186, 0.2
  %v315 = vmul.f32 %v187, 0.2
  %v316 = vmul.f32 %v188, 0.2
  %v317 = vmul.f32 %v189, 0.2
  %v318 = vmul.f32 %v190, 0.2
  %v319 = vmul.f32 %v191, 0.2
  %v320 = vmul.f32 %v192, 0.2
  %v321 = vmul.f32 %v193, 0.2
  %v322 = vmul.f32 %v194, 0.2
  %v323 = vmul.f32 %v195, 0.2
  %v324 = vmul.f32 %v196, 0.2
  %v325 = vmul.f32 %v197, 0.2
  %v326 = vmul.f32 %v198, 0.2
  %v327 = vmul.f32 %v199, 0.2
  %v328 = vmul.f32 %v200, 0.2
  %v329 = vmul.f32 %v201, 0.2
  %v330 = vmul.f32 %v202, 0.2
  %v331 = vmul.f32 %v203, 0.2
  %v332 = vmul.f32 %v204, 0.2
  %v333 = vmul.f32 %v205, 0.2
  %v334 = vmul.f32 %v206, 0.2
  %v335 = vmul.f32 %v207, 0.2
  %v336 = vmul.f32 %v208, 0.2
  %v337 = vmul.f32 %v209, 0.2
  %v338 = vmul.f32 %v210, 0.2
  %v339 = vmul.f32 %v211, 0.2
  %v340 = vmul.f32 %v212, 0.2
  %v341 = vmul.f32 %v213, 0.2
  %v342 = vmul.f32 %v214, 0.2
  %v343 = vmul.f32 %v215, 0.2
  %v344 = vmul.f32 %v216, 0.2
  %v345 = vmul.f32 %v217, 0.2
  %v346 = vmul.f32 %v218, 0.2
  %v347 = vmul.f32 %v219, 0.2
  %v348 = vsel %vm220, %v156, %v284
  %v349 = vsel %vm221, %v157, %v285
  %v350 = vsel %vm222, %v158, %v286
  %v351 = vsel %vm223, %v159, %v287
  %v352 = vsel %vm224, %v160, %v288
  %v353 = vsel %vm225, %v161, %v289
  %v354 = vsel %vm226, %v162, %v290
  %v355 = vsel %vm227, %v163, %v291
  %v356 = vsel %vm228, %v164, %v292
  %v357 = vsel %vm229, %v165, %v293
  %v358 = vsel %vm230, %v166, %v294
  %v359 = vsel %vm231, %v167, %v295
  %v360 = vsel %vm232, %v168, %v296
  %v361 = vsel %vm233, %v169, %v297
  %v362 = vsel %vm234, %v170, %v298
  %v363 = vsel %vm235, %v171, %v299
  %v364 = vsel %vm236, %v172, %v300
  %v365 = vsel %vm237, %v173, %v301
  %v366 = vsel %vm238, %v174, %v302
  %v367 = vsel %vm239, %v175, %v303
  %v368 = vsel %vm240, %v176, %v304
  %v369 = vsel %vm241, %v177, %v305
  %v370 = vsel %vm242, %v178, %v306
  %v371 = vsel %vm243, %v179, %v307
  %v372 = vsel %vm244, %v180, %v308
  %v373 = vsel %vm245, %v181, %v309
  %v374 = vsel %vm246, %v182, %v310
  %v375 = vsel %vm247, %v183, %v311
  %v376 = vsel %vm248, %v184, %v312
  %v377 = vsel %vm249, %v185, %v313
  %v378 = vsel %vm250, %v186, %v314
  %v379 = vsel %vm251, %v187, %v315
  %v380 = vsel %vm252, %v188, %v316
  %v381 = vsel %vm253, %v189, %v317
  %v382 = vsel %vm254, %v190, %v318
  %v383 = vsel %vm255, %v191, %v319
  %v384 = vsel %vm256, %v192, %v320
  %v385 = vsel %vm257, %v193, %v321
  %v386 = vsel %vm258, %v194, %v322
  %v387 = vsel %vm259, %v195, %v323
  %v388 = vsel %vm260, %v196, %v324
  %v389 = vsel %vm261, %v197, %v325
  %v390 = vsel %vm262, %v198, %v326
  %v391 = vsel %vm263, %v199, %v327
  %v392 = vsel %vm264, %v200, %v328
  %v393 = vsel %vm265, %v201, %v329
  %v394 = vsel %vm266, %v202, %v330
  %v395 = vsel %vm267, %v203, %v331
  %v396 = vsel %vm268, %v204, %v332
  %v397 = vsel %vm269, %v205, %v333
  %v398 = vsel %vm270, %v206, %v334
  %v399 = vsel %vm271, %v207, %v335
  %v400 = vsel %vm272, %v208, %v336
  %v401 = vsel %vm273, %v209, %v337
  %v402 = vsel %vm274, %v210, %v338
  %v403 = vsel %vm275, %v211, %v339
  %v404 = vsel %vm276, %v212, %v340
  %v405 = vsel %vm277, %v213, %v341
  %v406 = vsel %vm278, %v214, %v342
  %v407 = vsel %vm279, %v215, %v343
  %v408 = vsel %vm280, %v216, %v344
  %v409 = vsel %vm281, %v217, %v345
  %v410 = vsel %vm282, %v218, %v346
  %v411 = vsel %vm283, %v219, %v347
  %v412 = vpack.c.bf16 %v349, %v348
  %v413 = vpack.c.bf16 %v351, %v350
  %v414 = vpack.c.bf16 %v353, %v352
  %v415 = vpack.c.bf16 %v355, %v354
  %v416 = vpack.c.bf16 %v357, %v356
  %v417 = vpack.c.bf16 %v359, %v358
  %v418 = vpack.c.bf16 %v361, %v360
  %v419 = vpack.c.bf16 %v363, %v362
  %v420 = vpack.c.bf16 %v365, %v364
  %v421 = vpack.c.bf16 %v367, %v366
  %v422 = vpack.c.bf16 %v369, %v368
  %v423 = vpack.c.bf16 %v371, %v370
  %v424 = vpack.c.bf16 %v373, %v372
  %v425 = vpack.c.bf16 %v375, %v374
  %v426 = vpack.c.bf16 %v377, %v376
  %v427 = vpack.c.bf16 %v379, %v378
  %v428 = vpack.c.bf16 %v381, %v380
  %v429 = vpack.c.bf16 %v383, %v382
  %v430 = vpack.c.bf16 %v385, %v384
  %v431 = vpack.c.bf16 %v387, %v386
  %v432 = vpack.c.bf16 %v389, %v388
  %v433 = vpack.c.bf16 %v391, %v390
  %v434 = vpack.c.bf16 %v393, %v392
  %v435 = vpack.c.bf16 %v395, %v394
  %v436 = vpack.c.bf16 %v397, %v396
  %v437 = vpack.c.bf16 %v399, %v398
  %v438 = vpack.c.bf16 %v401, %v400
  %v439 = vpack.c.bf16 %v403, %v402
  %v440 = vpack.c.bf16 %v405, %v404
  %v441 = vpack.c.bf16 %v407, %v406
  %v442 = vpack.c.bf16 %v409, %v408
  %v443 = vpack.c.bf16 %v411, %v410
  %v476 = vunpack.c.l.b16 %v412
  %v477 = vunpack.c.h.b16 %v412
  %v478 = vunpack.c.l.b16 %v413
  %v479 = vunpack.c.h.b16 %v413
  %v480 = vunpack.c.l.b16 %v414
  %v481 = vunpack.c.h.b16 %v414
  %v482 = vunpack.c.l.b16 %v415
  %v483 = vunpack.c.h.b16 %v415
  %v484 = vunpack.c.l.b16 %v416
  %v485 = vunpack.c.h.b16 %v416
  %v486 = vunpack.c.l.b16 %v417
  %v487 = vunpack.c.h.b16 %v417
  %v488 = vunpack.c.l.b16 %v418
  %v489 = vunpack.c.h.b16 %v418
  %v490 = vunpack.c.l.b16 %v419
  %v491 = vunpack.c.h.b16 %v419
  %v492 = vunpack.c.l.b16 %v420
  %v493 = vunpack.c.h.b16 %v420
  %v494 = vunpack.c.l.b16 %v421
  %v495 = vunpack.c.h.b16 %v421
  %v496 = vunpack.c.l.b16 %v422
  %v497 = vunpack.c.h.b16 %v422
  %v498 = vunpack.c.l.b16 %v423
  %v499 = vunpack.c.h.b16 %v423
  %v500 = vunpack.c.l.b16 %v424
  %v501 = vunpack.c.h.b16 %v424
  %v502 = vunpack.c.l.b16 %v425
  %v503 = vunpack.c.h.b16 %v425
  %v504 = vunpack.c.l.b16 %v426
  %v505 = vunpack.c.h.b16 %v426
  %v506 = vunpack.c.l.b16 %v427
  %v507 = vunpack.c.h.b16 %v427
  %v508 = vunpack.c.l.b16 %v428
  %v509 = vunpack.c.h.b16 %v428
  %v510 = vunpack.c.l.b16 %v429
  %v511 = vunpack.c.h.b16 %v429
  %v512 = vunpack.c.l.b16 %v430
  %v513 = vunpack.c.h.b16 %v430
  %v514 = vunpack.c.l.b16 %v431
  %v515 = vunpack.c.h.b16 %v431
  %v516 = vunpack.c.l.b16 %v432
  %v517 = vunpack.c.h.b16 %v432
  %v518 = vunpack.c.l.b16 %v433
  %v519 = vunpack.c.h.b16 %v433
  %v520 = vunpack.c.l.b16 %v434
  %v521 = vunpack.c.h.b16 %v434
  %v522 = vunpack.c.l.b16 %v435
  %v523 = vunpack.c.h.b16 %v435
  %v524 = vunpack.c.l.b16 %v436
  %v525 = vunpack.c.h.b16 %v436
  %v526 = vunpack.c.l.b16 %v437
  %v527 = vunpack.c.h.b16 %v437
  %v528 = vunpack.c.l.b16 %v438
  %v529 = vunpack.c.h.b16 %v438
  %v530 = vunpack.c.l.b16 %v439
  %v531 = vunpack.c.h.b16 %v439
  %v532 = vunpack.c.l.b16 %v440
  %v533 = vunpack.c.h.b16 %v440
  %v534 = vunpack.c.l.b16 %v441
  %v535 = vunpack.c.h.b16 %v441
  %v536 = vunpack.c.l.b16 %v442
  %v537 = vunpack.c.h.b16 %v442
  %v538 = vunpack.c.l.b16 %v443
  %v539 = vunpack.c.h.b16 %v443
  %v540 = vpack.c.b16 %v476, %v476
  %v541 = vpack.c.b16 %v477, %v477
  %v542 = vpack.c.b16 %v478, %v478
  %v543 = vpack.c.b16 %v479, %v479
  %v544 = vpack.c.b16 %v480, %v480
  %v545 = vpack.c.b16 %v481, %v481
  %v546 = vpack.c.b16 %v482, %v482
  %v547 = vpack.c.b16 %v483, %v483
  %v548 = vpack.c.b16 %v484, %v484
  %v549 = vpack.c.b16 %v485, %v485
  %v550 = vpack.c.b16 %v486, %v486
  %v551 = vpack.c.b16 %v487, %v487
  %v552 = vpack.c.b16 %v488, %v488
  %v553 = vpack.c.b16 %v489, %v489
  %v554 = vpack.c.b16 %v490, %v490
  %v555 = vpack.c.b16 %v491, %v491
  %v556 = vpack.c.b16 %v492, %v492
  %v557 = vpack.c.b16 %v493, %v493
  %v558 = vpack.c.b16 %v494, %v494
  %v559 = vpack.c.b16 %v495, %v495
  %v560 = vpack.c.b16 %v496, %v496
  %v561 = vpack.c.b16 %v497, %v497
  %v562 = vpack.c.b16 %v498, %v498
  %v563 = vpack.c.b16 %v499, %v499
  %v564 = vpack.c.b16 %v500, %v500
  %v565 = vpack.c.b16 %v501, %v501
  %v566 = vpack.c.b16 %v502, %v502
  %v567 = vpack.c.b16 %v503, %v503
  %v568 = vpack.c.b16 %v504, %v504
  %v569 = vpack.c.b16 %v505, %v505
  %v570 = vpack.c.b16 %v506, %v506
  %v571 = vpack.c.b16 %v507, %v507
  %v572 = vpack.c.b16 %v508, %v508
  %v573 = vpack.c.b16 %v509, %v509
  %v574 = vpack.c.b16 %v510, %v510
  %v575 = vpack.c.b16 %v511, %v511
  %v576 = vpack.c.b16 %v512, %v512
  %v577 = vpack.c.b16 %v513, %v513
  %v578 = vpack.c.b16 %v514, %v514
  %v579 = vpack.c.b16 %v515, %v515
  %v580 = vpack.c.b16 %v516, %v516
  %v581 = vpack.c.b16 %v517, %v517
  %v582 = vpack.c.b16 %v518, %v518
  %v583 = vpack.c.b16 %v519, %v519
  %v584 = vpack.c.b16 %v520, %v520
  %v585 = vpack.c.b16 %v521, %v521
  %v586 = vpack.c.b16 %v522, %v522
  %v587 = vpack.c.b16 %v523, %v523
  %v588 = vpack.c.b16 %v524, %v524
  %v589 = vpack.c.b16 %v525, %v525
  %v590 = vpack.c.b16 %v526, %v526
  %v591 = vpack.c.b16 %v527, %v527
  %v592 = vpack.c.b16 %v528, %v528
  %v593 = vpack.c.b16 %v529, %v529
  %v594 = vpack.c.b16 %v530, %v530
  %v595 = vpack.c.b16 %v531, %v531
  %v596 = vpack.c.b16 %v532, %v532
  %v597 = vpack.c.b16 %v533, %v533
  %v598 = vpack.c.b16 %v534, %v534
  %v599 = vpack.c.b16 %v535, %v535
  %v600 = vpack.c.b16 %v536, %v536
  %v601 = vpack.c.b16 %v537, %v537
  %v602 = vpack.c.b16 %v538, %v538
  %v603 = vpack.c.b16 %v539, %v539
  %668 = vst [vmem:[%s3] sm:$0xf] %v540
  %669 = vst [vmem:[%s3 + $0x4] sm:$0xf] %v541
  %670 = vst [vmem:[%s3 + $0x8] sm:$0xf] %v542
  %671 = vst [vmem:[%s3 + $0xc] sm:$0xf] %v543
  %672 = vst [vmem:[%s3 + $0x10] sm:$0xf] %v544
  %673 = vst [vmem:[%s3 + $0x14] sm:$0xf] %v545
  %674 = vst [vmem:[%s3 + $0x18] sm:$0xf] %v546
  %675 = vst [vmem:[%s3 + $0x1c] sm:$0xf] %v547
  %676 = vst [vmem:[%s3 + $0x20] sm:$0xf] %v548
  %677 = vst [vmem:[%s3 + $0x24] sm:$0xf] %v549
  %678 = vst [vmem:[%s3 + $0x28] sm:$0xf] %v550
  %679 = vst [vmem:[%s3 + $0x2c] sm:$0xf] %v551
  %680 = vst [vmem:[%s3 + $0x30] sm:$0xf] %v552
  %681 = vst [vmem:[%s3 + $0x34] sm:$0xf] %v553
  %682 = vst [vmem:[%s3 + $0x38] sm:$0xf] %v554
  %683 = vst [vmem:[%s3 + $0x3c] sm:$0xf] %v555
  %684 = vst [vmem:[%s3 + $0x40] sm:$0xf] %v556
  %685 = vst [vmem:[%s3 + $0x44] sm:$0xf] %v557
  %686 = vst [vmem:[%s3 + $0x48] sm:$0xf] %v558
  %687 = vst [vmem:[%s3 + $0x4c] sm:$0xf] %v559
  %688 = vst [vmem:[%s3 + $0x50] sm:$0xf] %v560
  %689 = vst [vmem:[%s3 + $0x54] sm:$0xf] %v561
  %690 = vst [vmem:[%s3 + $0x58] sm:$0xf] %v562
  %691 = vst [vmem:[%s3 + $0x5c] sm:$0xf] %v563
  %692 = vst [vmem:[%s3 + $0x60] sm:$0xf] %v564
  %693 = vst [vmem:[%s3 + $0x64] sm:$0xf] %v565
  %694 = vst [vmem:[%s3 + $0x68] sm:$0xf] %v566
  %695 = vst [vmem:[%s3 + $0x6c] sm:$0xf] %v567
  %696 = vst [vmem:[%s3 + $0x70] sm:$0xf] %v568
  %697 = vst [vmem:[%s3 + $0x74] sm:$0xf] %v569
  %698 = vst [vmem:[%s3 + $0x78] sm:$0xf] %v570
  %699 = vst [vmem:[%s3 + $0x7c] sm:$0xf] %v571
  %700 = vst [vmem:[%s3 + $0x80] sm:$0xf] %v572
  %701 = vst [vmem:[%s3 + $0x84] sm:$0xf] %v573
  %702 = vst [vmem:[%s3 + $0x88] sm:$0xf] %v574
  %703 = vst [vmem:[%s3 + $0x8c] sm:$0xf] %v575
  %704 = vst [vmem:[%s3 + $0x90] sm:$0xf] %v576
  %705 = vst [vmem:[%s3 + $0x94] sm:$0xf] %v577
  %706 = vst [vmem:[%s3 + $0x98] sm:$0xf] %v578
  %707 = vst [vmem:[%s3 + $0x9c] sm:$0xf] %v579
  %708 = vst [vmem:[%s3 + $0xa0] sm:$0xf] %v580
  %709 = vst [vmem:[%s3 + $0xa4] sm:$0xf] %v581
  %710 = vst [vmem:[%s3 + $0xa8] sm:$0xf] %v582
  %711 = vst [vmem:[%s3 + $0xac] sm:$0xf] %v583
  %712 = vst [vmem:[%s3 + $0xb0] sm:$0xf] %v584
  %713 = vst [vmem:[%s3 + $0xb4] sm:$0xf] %v585
  %714 = vst [vmem:[%s3 + $0xb8] sm:$0xf] %v586
  %715 = vst [vmem:[%s3 + $0xbc] sm:$0xf] %v587
  %716 = vst [vmem:[%s3 + $0xc0] sm:$0xf] %v588
  %717 = vst [vmem:[%s3 + $0xc4] sm:$0xf] %v589
  %718 = vst [vmem:[%s3 + $0xc8] sm:$0xf] %v590
  %719 = vst [vmem:[%s3 + $0xcc] sm:$0xf] %v591
  %720 = vst [vmem:[%s3 + $0xd0] sm:$0xf] %v592
  %721 = vst [vmem:[%s3 + $0xd4] sm:$0xf] %v593
  %722 = vst [vmem:[%s3 + $0xd8] sm:$0xf] %v594
  %723 = vst [vmem:[%s3 + $0xdc] sm:$0xf] %v595
  %724 = vst [vmem:[%s3 + $0xe0] sm:$0xf] %v596
  %725 = vst [vmem:[%s3 + $0xe4] sm:$0xf] %v597
  %726 = vst [vmem:[%s3 + $0xe8] sm:$0xf] %v598
  %727 = vst [vmem:[%s3 + $0xec] sm:$0xf] %v599
  %728 = vst [vmem:[%s3 + $0xf0] sm:$0xf] %v600
  %729 = vst [vmem:[%s3 + $0xf4] sm:$0xf] %v601
  %730 = vst [vmem:[%s3 + $0xf8] sm:$0xf] %v602
  %731 = vst [vmem:[%s3 + $0xfc] sm:$0xf] %v603
  // Predicated region
  $region14: #{discriminator_forward.10} parent=0 // pred_check
    _
  $region15: #{discriminator_forward.10} parent=0 // pred_check_branch
    %733 = sbr.rel (0) target = $region17
  $region16: #{discriminator_forward.10} parent=0 // pred_region
    _
  $region17: #{discriminator_forward.10} parent=0 // pred_fallthru
    _
  // Predicated region
  $region18: #{discriminator_forward.10} parent=0 // pred_check
    _
  $region19: #{discriminator_forward.10} parent=0 // pred_check_branch
    %735 = sbr.rel (0) target = $region21
  $region20: #{discriminator_forward.10} parent=0 // pred_region
    _
  $region21: #{discriminator_forward.10} parent=0 // pred_fallthru
    _

// kernel: discriminator_forward.12
$region0: #{discriminator_forward.12}
  #allocation0 [shape = 'u32[]', space=smem, size = 0x4, offset = 0x4, fixed_abs, tag = 'smem constant byte address 0x4 - core index']
  #allocation1 [shape = 'u32[144,128]{1,0:T(1,128)}', space=vmem, size = 0x12000, scoped, tag = 'internal scratch']
  %s0 = inlined_call_operand.vmem [shape: f32[128,128], index: 0, kind: input, shape index: {}]
  %s1 = inlined_call_operand.vmem [shape: f32[1,128], index: 1, kind: input, shape index: {}]
  %s2 = inlined_call_operand.vmem [shape: f32[1,128], index: 2, kind: input, shape index: {}]
  %s3 = inlined_call_operand.vmem [shape: bf16[128,128], index: 3, kind: output, shape index: {}]
  %s4 = sld [smem:[#allocation0]]
  $region22: #{discriminator_forward.12} parent=0
    _
  %s6 = ssub.s32 1, %s4
  %s7 = scalar_select 0, %s6, %s4
  // Predicated region
  $region2: #{discriminator_forward.12} parent=0 // pred_check
    _
  $region3: #{discriminator_forward.12} parent=0 // pred_check_branch
    %9 = sbr.rel (0) target = $region5
  $region4: #{discriminator_forward.12} parent=0 // pred_region
    _
  $region5: #{discriminator_forward.12} parent=0 // pred_fallthru
    _
  // Predicated region
  $region6: #{discriminator_forward.12} parent=0 // pred_check
    _
  $region7: #{discriminator_forward.12} parent=0 // pred_check_branch
    %11 = sbr.rel (0) target = $region9
  $region8: #{discriminator_forward.12} parent=0 // pred_region
    _
  $region9: #{discriminator_forward.12} parent=0 // pred_fallthru
    _
  // Predicated region
  $region10: #{discriminator_forward.12} parent=0 // pred_check
    _
  $region11: #{discriminator_forward.12} parent=0 // pred_check_branch
    %13 = sbr.rel (0) target = $region13
  $region12: #{discriminator_forward.12} parent=0 // pred_region
    _
  $region13: #{discriminator_forward.12} parent=0 // pred_fallthru
    _
  %v14 = vld [vmem:[%s0] sm:$0xff]
  %v15 = vld [vmem:[%s0 + $0x8] sm:$0xff]
  %v16 = vld [vmem:[%s0 + $0x10] sm:$0xff]
  %v17 = vld [vmem:[%s0 + $0x18] sm:$0xff]
  %v18 = vld [vmem:[%s0 + $0x20] sm:$0xff]
  %v19 = vld [vmem:[%s0 + $0x28] sm:$0xff]
  %v20 = vld [vmem:[%s0 + $0x30] sm:$0xff]
  %v21 = vld [vmem:[%s0 + $0x38] sm:$0xff]
  %v22 = vld [vmem:[%s0 + $0x40] sm:$0xff]
  %v23 = vld [vmem:[%s0 + $0x48] sm:$0xff]
  %v24 = vld [vmem:[%s0 + $0x50] sm:$0xff]
  %v25 = vld [vmem:[%s0 + $0x58] sm:$0xff]
  %v26 = vld [vmem:[%s0 + $0x60] sm:$0xff]
  %v27 = vld [vmem:[%s0 + $0x68] sm:$0xff]
  %v28 = vld [vmem:[%s0 + $0x70] sm:$0xff]
  %v29 = vld [vmem:[%s0 + $0x78] sm:$0xff]
  %v30 = vld [vmem:[%s1] sm:$0x1]
  %v32 = vlaneseq
  %v33 = vshrl.u32 %v32, 7
  %v34 = vsub.s32 0, %v33
  %v35 = vrot.slane %v30, %v34
  %v37 = vmul.f32 %v14, %v35
  %v38 = vmul.f32 %v15, %v35
  %v39 = vmul.f32 %v16, %v35
  %v40 = vmul.f32 %v17, %v35
  %v41 = vmul.f32 %v18, %v35
  %v42 = vmul.f32 %v19, %v35
  %v43 = vmul.f32 %v20, %v35
  %v44 = vmul.f32 %v21, %v35
  %v45 = vmul.f32 %v22, %v35
  %v46 = vmul.f32 %v23, %v35
  %v47 = vmul.f32 %v24, %v35
  %v48 = vmul.f32 %v25, %v35
  %v49 = vmul.f32 %v26, %v35
  %v50 = vmul.f32 %v27, %v35
  %v51 = vmul.f32 %v28, %v35
  %v52 = vmul.f32 %v29, %v35
  %v53 = vld [vmem:[%s2] sm:$0x1]
  %v55 = vlaneseq
  %v56 = vshrl.u32 %v55, 7
  %v57 = vsub.s32 0, %v56
  %v58 = vrot.slane %v53, %v57
  %v60 = vadd.f32 %v37, %v58
  %v61 = vadd.f32 %v38, %v58
  %v62 = vadd.f32 %v39, %v58
  %v63 = vadd.f32 %v40, %v58
  %v64 = vadd.f32 %v41, %v58
  %v65 = vadd.f32 %v42, %v58
  %v66 = vadd.f32 %v43, %v58
  %v67 = vadd.f32 %v44, %v58
  %v68 = vadd.f32 %v45, %v58
  %v69 = vadd.f32 %v46, %v58
  %v70 = vadd.f32 %v47, %v58
  %v71 = vadd.f32 %v48, %v58
  %v72 = vadd.f32 %v49, %v58
  %v73 = vadd.f32 %v50, %v58
  %v74 = vadd.f32 %v51, %v58
  %v75 = vadd.f32 %v52, %v58
  %vm76 = vcmp.ge.f32.partialorder %v60, 0.0
  %vm77 = vcmp.ge.f32.partialorder %v61, 0.0
  %vm78 = vcmp.ge.f32.partialorder %v62, 0.0
  %vm79 = vcmp.ge.f32.partialorder %v63, 0.0
  %vm80 = vcmp.ge.f32.partialorder %v64, 0.0
  %vm81 = vcmp.ge.f32.partialorder %v65, 0.0
  %vm82 = vcmp.ge.f32.partialorder %v66, 0.0
  %vm83 = vcmp.ge.f32.partialorder %v67, 0.0
  %vm84 = vcmp.ge.f32.partialorder %v68, 0.0
  %vm85 = vcmp.ge.f32.partialorder %v69, 0.0
  %vm86 = vcmp.ge.f32.partialorder %v70, 0.0
  %vm87 = vcmp.ge.f32.partialorder %v71, 0.0
  %vm88 = vcmp.ge.f32.partialorder %v72, 0.0
  %vm89 = vcmp.ge.f32.partialorder %v73, 0.0
  %vm90 = vcmp.ge.f32.partialorder %v74, 0.0
  %vm91 = vcmp.ge.f32.partialorder %v75, 0.0
  %v92 = vmul.f32 %v60, 0.2
  %v93 = vmul.f32 %v61, 0.2
  %v94 = vmul.f32 %v62, 0.2
  %v95 = vmul.f32 %v63, 0.2
  %v96 = vmul.f32 %v64, 0.2
  %v97 = vmul.f32 %v65, 0.2
  %v98 = vmul.f32 %v66, 0.2
  %v99 = vmul.f32 %v67, 0.2
  %v100 = vmul.f32 %v68, 0.2
  %v101 = vmul.f32 %v69, 0.2
  %v102 = vmul.f32 %v70, 0.2
  %v103 = vmul.f32 %v71, 0.2
  %v104 = vmul.f32 %v72, 0.2
  %v105 = vmul.f32 %v73, 0.2
  %v106 = vmul.f32 %v74, 0.2
  %v107 = vmul.f32 %v75, 0.2
  %v108 = vsel %vm76, %v60, %v92
  %v109 = vsel %vm77, %v61, %v93
  %v110 = vsel %vm78, %v62, %v94
  %v111 = vsel %vm79, %v63, %v95
  %v112 = vsel %vm80, %v64, %v96
  %v113 = vsel %vm81, %v65, %v97
  %v114 = vsel %vm82, %v66, %v98
  %v115 = vsel %vm83, %v67, %v99
  %v116 = vsel %vm84, %v68, %v100
  %v117 = vsel %vm85, %v69, %v101
  %v118 = vsel %vm86, %v70, %v102
  %v119 = vsel %vm87, %v71, %v103
  %v120 = vsel %vm88, %v72, %v104
  %v121 = vsel %vm89, %v73, %v105
  %v122 = vsel %vm90, %v74, %v106
  %v123 = vsel %vm91, %v75, %v107
  %v124 = vpack.c.bf16 %v109, %v108
  %v125 = vpack.c.bf16 %v111, %v110
  %v126 = vpack.c.bf16 %v113, %v112
  %v127 = vpack.c.bf16 %v115, %v114
  %v128 = vpack.c.bf16 %v117, %v116
  %v129 = vpack.c.bf16 %v119, %v118
  %v130 = vpack.c.bf16 %v121, %v120
  %v131 = vpack.c.bf16 %v123, %v122
  %v140 = vunpack.c.l.b16 %v124
  %v141 = vunpack.c.h.b16 %v124
  %v142 = vunpack.c.l.b16 %v125
  %v143 = vunpack.c.h.b16 %v125
  %v144 = vunpack.c.l.b16 %v126
  %v145 = vunpack.c.h.b16 %v126
  %v146 = vunpack.c.l.b16 %v127
  %v147 = vunpack.c.h.b16 %v127
  %v148 = vunpack.c.l.b16 %v128
  %v149 = vunpack.c.h.b16 %v128
  %v150 = vunpack.c.l.b16 %v129
  %v151 = vunpack.c.h.b16 %v129
  %v152 = vunpack.c.l.b16 %v130
  %v153 = vunpack.c.h.b16 %v130
  %v154 = vunpack.c.l.b16 %v131
  %v155 = vunpack.c.h.b16 %v131
  %v156 = vpack.c.b16 %v140, %v140
  %v157 = vpack.c.b16 %v141, %v141
  %v158 = vpack.c.b16 %v142, %v142
  %v159 = vpack.c.b16 %v143, %v143
  %v160 = vpack.c.b16 %v144, %v144
  %v161 = vpack.c.b16 %v145, %v145
  %v162 = vpack.c.b16 %v146, %v146
  %v163 = vpack.c.b16 %v147, %v147
  %v164 = vpack.c.b16 %v148, %v148
  %v165 = vpack.c.b16 %v149, %v149
  %v166 = vpack.c.b16 %v150, %v150
  %v167 = vpack.c.b16 %v151, %v151
  %v168 = vpack.c.b16 %v152, %v152
  %v169 = vpack.c.b16 %v153, %v153
  %v170 = vpack.c.b16 %v154, %v154
  %v171 = vpack.c.b16 %v155, %v155
  %188 = vst [vmem:[%s3] sm:$0xf] %v156
  %189 = vst [vmem:[%s3 + $0x4] sm:$0xf] %v157
  %190 = vst [vmem:[%s3 + $0x8] sm:$0xf] %v158
  %191 = vst [vmem:[%s3 + $0xc] sm:$0xf] %v159
  %192 = vst [vmem:[%s3 + $0x10] sm:$0xf] %v160
  %193 = vst [vmem:[%s3 + $0x14] sm:$0xf] %v161
  %194 = vst [vmem:[%s3 + $0x18] sm:$0xf] %v162
  %195 = vst [vmem:[%s3 + $0x1c] sm:$0xf] %v163
  %196 = vst [vmem:[%s3 + $0x20] sm:$0xf] %v164
  %197 = vst [vmem:[%s3 + $0x24] sm:$0xf] %v165
  %198 = vst [vmem:[%s3 + $0x28] sm:$0xf] %v166
  %199 = vst [vmem:[%s3 + $0x2c] sm:$0xf] %v167
  %200 = vst [vmem:[%s3 + $0x30] sm:$0xf] %v168
  %201 = vst [vmem:[%s3 + $0x34] sm:$0xf] %v169
  %202 = vst [vmem:[%s3 + $0x38] sm:$0xf] %v170
  %203 = vst [vmem:[%s3 + $0x3c] sm:$0xf] %v171
  // Predicated region
  $region14: #{discriminator_forward.12} parent=0 // pred_check
    _
  $region15: #{discriminator_forward.12} parent=0 // pred_check_branch
    %205 = sbr.rel (0) target = $region17
  $region16: #{discriminator_forward.12} parent=0 // pred_region
    _
  $region17: #{discriminator_forward.12} parent=0 // pred_fallthru
    _
  // Predicated region
  $region18: #{discriminator_forward.12} parent=0 // pred_check
    _
  $region19: #{discriminator_forward.12} parent=0 // pred_check_branch
    %207 = sbr.rel (0) target = $region21
  $region20: #{discriminator_forward.12} parent=0 // pred_region
    _
  $region21: #{discriminator_forward.12} parent=0 // pred_fallthru
    _

// kernel: discriminator_forward.11
$region0: #{discriminator_forward.11}
  #allocation0 [shape = 'u32[]', space=smem, size = 0x4, offset = 0x4, fixed_abs, tag = 'smem constant byte address 0x4 - core index']
  #allocation1 [shape = 'u32[144,128]{1,0:T(1,128)}', space=vmem, size = 0x12000, scoped, tag = 'internal scratch']
  #allocation2 [shape = 'f32[128,128]{1,0:T(8,128)}', space=vmem, size = 0x10000, scoped, tag = 'scratch operand']
  %s0 = inlined_call_operand.vmem [shape: bf16[128,256], index: 0, kind: input, shape index: {}]
  %s1 = inlined_call_operand.vmem [shape: bf16[256,128], index: 1, kind: input, shape index: {}]
  %s2 = inlined_call_operand.vmem [shape: f32[128,128], index: 2, kind: output, shape index: {0}]
  %s3 = inlined_call_operand.vmem [shape: f32[8,128], index: 3, kind: output, shape index: {1}]
  %4 = xla_tuple %s2, %s3
  %s5 = sld [smem:[#allocation0]]
  $region34: #{discriminator_forward.11} parent=0
    _
  %s7 = ssub.s32 1, %s5
  %s8 = scalar_select 0, %s7, %s5
  // Predicated region
  $region2: #{discriminator_forward.11} parent=0 // pred_check
    _
  $region3: #{discriminator_forward.11} parent=0 // pred_check_branch
    %10 = sbr.rel (0) target = $region5
  $region4: #{discriminator_forward.11} parent=0 // pred_region
    _
  $region5: #{discriminator_forward.11} parent=0 // pred_fallthru
    _
  // Predicated region
  $region6: #{discriminator_forward.11} parent=0 // pred_check
    _
  $region7: #{discriminator_forward.11} parent=0 // pred_check_branch
    %12 = sbr.rel (0) target = $region9
  $region8: #{discriminator_forward.11} parent=0 // pred_region
    _
  $region9: #{discriminator_forward.11} parent=0 // pred_fallthru
    _
  %p14 = scmp.eq.s32.totalorder 0, 0
  // Predicated region
  $region10: #{discriminator_forward.11} parent=0 // pred_check
    %p15 = pneg %p14
  $region11: #{discriminator_forward.11} parent=0 // pred_check_branch
    %17 = sbr.rel (%p15) target = $region13
  $region12: #{discriminator_forward.11} parent=0 // pred_region
    %18 = vst [vmem:[#allocation2] sm:$0xff] 0.0
    %19 = vst [vmem:[#allocation2 + $0x8] sm:$0xff] 0.0
    %20 = vst [vmem:[#allocation2 + $0x10] sm:$0xff] 0.0
    %21 = vst [vmem:[#allocation2 + $0x18] sm:$0xff] 0.0
    %22 = vst [vmem:[#allocation2 + $0x20] sm:$0xff] 0.0
    %23 = vst [vmem:[#allocation2 + $0x28] sm:$0xff] 0.0
    %24 = vst [vmem:[#allocation2 + $0x30] sm:$0xff] 0.0
    %25 = vst [vmem:[#allocation2 + $0x38] sm:$0xff] 0.0
    %26 = vst [vmem:[#allocation2 + $0x40] sm:$0xff] 0.0
    %27 = vst [vmem:[#allocation2 + $0x48] sm:$0xff] 0.0
    %28 = vst [vmem:[#allocation2 + $0x50] sm:$0xff] 0.0
    %29 = vst [vmem:[#allocation2 + $0x58] sm:$0xff] 0.0
    %30 = vst [vmem:[#allocation2 + $0x60] sm:$0xff] 0.0
    %31 = vst [vmem:[#allocation2 + $0x68] sm:$0xff] 0.0
    %32 = vst [vmem:[#allocation2 + $0x70] sm:$0xff] 0.0
    %33 = vst [vmem:[#allocation2 + $0x78] sm:$0xff] 0.0
  $region13: #{discriminator_forward.11} parent=0 // pred_fallthru
    _
  %v34 = vld [vmem:[#allocation2] sm:$0xff]
  %v35 = vld [vmem:[#allocation2 + $0x8] sm:$0xff]
  %v36 = vld [vmem:[#allocation2 + $0x10] sm:$0xff]
  %v37 = vld [vmem:[#allocation2 + $0x18] sm:$0xff]
  %v38 = vld [vmem:[#allocation2 + $0x20] sm:$0xff]
  %v39 = vld [vmem:[#allocation2 + $0x28] sm:$0xff]
  %v40 = vld [vmem:[#allocation2 + $0x30] sm:$0xff]
  %v41 = vld [vmem:[#allocation2 + $0x38] sm:$0xff]
  %v42 = vld [vmem:[#allocation2 + $0x40] sm:$0xff]
  %v43 = vld [vmem:[#allocation2 + $0x48] sm:$0xff]
  %v44 = vld [vmem:[#allocation2 + $0x50] sm:$0xff]
  %v45 = vld [vmem:[#allocation2 + $0x58] sm:$0xff]
  %v46 = vld [vmem:[#allocation2 + $0x60] sm:$0xff]
  %v47 = vld [vmem:[#allocation2 + $0x68] sm:$0xff]
  %v48 = vld [vmem:[#allocation2 + $0x70] sm:$0xff]
  %v49 = vld [vmem:[#allocation2 + $0x78] sm:$0xff]
  %v50 = vld [vmem:[%s0] sm:$0xff]
  %v51 = vld [vmem:[%s0 + $0x8] sm:$0xff]
  %v52 = vld [vmem:[%s0 + $0x10] sm:$0xff]
  %v53 = vld [vmem:[%s0 + $0x18] sm:$0xff]
  %v54 = vld [vmem:[%s0 + $0x20] sm:$0xff]
  %v55 = vld [vmem:[%s0 + $0x28] sm:$0xff]
  %v56 = vld [vmem:[%s0 + $0x30] sm:$0xff]
  %v57 = vld [vmem:[%s0 + $0x38] sm:$0xff]
  %v58 = vld [vmem:[%s0 + $0x40] sm:$0xff]
  %v59 = vld [vmem:[%s0 + $0x48] sm:$0xff]
  %v60 = vld [vmem:[%s0 + $0x50] sm:$0xff]
  %v61 = vld [vmem:[%s0 + $0x58] sm:$0xff]
  %v62 = vld [vmem:[%s0 + $0x60] sm:$0xff]
  %v63 = vld [vmem:[%s0 + $0x68] sm:$0xff]
  %v64 = vld [vmem:[%s0 + $0x70] sm:$0xff]
  %v65 = vld [vmem:[%s0 + $0x78] sm:$0xff]
  %v66 = vld [vmem:[%s1] sm:$0xf]
  %v67 = vld [vmem:[%s1 + $0x4] sm:$0xf]
  %v68 = vld [vmem:[%s1 + $0x8] sm:$0xf]
  %v69 = vld [vmem:[%s1 + $0xc] sm:$0xf]
  %v70 = vld [vmem:[%s1 + $0x10] sm:$0xf]
  %v71 = vld [vmem:[%s1 + $0x14] sm:$0xf]
  %v72 = vld [vmem:[%s1 + $0x18] sm:$0xf]
  %v73 = vld [vmem:[%s1 + $0x1c] sm:$0xf]
  %v74 = vld [vmem:[%s1 + $0x20] sm:$0xf]
  %v75 = vld [vmem:[%s1 + $0x24] sm:$0xf]
  %v76 = vld [vmem:[%s1 + $0x28] sm:$0xf]
  %v77 = vld [vmem:[%s1 + $0x2c] sm:$0xf]
  %v78 = vld [vmem:[%s1 + $0x30] sm:$0xf]
  %v79 = vld [vmem:[%s1 + $0x34] sm:$0xf]
  %v80 = vld [vmem:[%s1 + $0x38] sm:$0xf]
  %v81 = vld [vmem:[%s1 + $0x3c] sm:$0xf]
  %v82 = vld [vmem:[%s1 + $0x40] sm:$0xf]
  %v83 = vld [vmem:[%s1 + $0x44] sm:$0xf]
  %v84 = vld [vmem:[%s1 + $0x48] sm:$0xf]
  %v85 = vld [vmem:[%s1 + $0x4c] sm:$0xf]
  %v86 = vld [vmem:[%s1 + $0x50] sm:$0xf]
  %v87 = vld [vmem:[%s1 + $0x54] sm:$0xf]
  %v88 = vld [vmem:[%s1 + $0x58] sm:$0xf]
  %v89 = vld [vmem:[%s1 + $0x5c] sm:$0xf]
  %v90 = vld [vmem:[%s1 + $0x60] sm:$0xf]
  %v91 = vld [vmem:[%s1 + $0x64] sm:$0xf]
  %v92 = vld [vmem:[%s1 + $0x68] sm:$0xf]
  %v93 = vld [vmem:[%s1 + $0x6c] sm:$0xf]
  %v94 = vld [vmem:[%s1 + $0x70] sm:$0xf]
  %v95 = vld [vmem:[%s1 + $0x74] sm:$0xf]
  %v96 = vld [vmem:[%s1 + $0x78] sm:$0xf]
  %v97 = vld [vmem:[%s1 + $0x7c] sm:$0xf]
  %v114 = vunpack.c.l.b16 %v50
  %v115 = vunpack.c.h.b16 %v50
  %v116 = vunpack.c.l.b16 %v51
  %v117 = vunpack.c.h.b16 %v51
  %v118 = vunpack.c.l.b16 %v52
  %v119 = vunpack.c.h.b16 %v52
  %v120 = vunpack.c.l.b16 %v53
  %v121 = vunpack.c.h.b16 %v53
  %v122 = vunpack.c.l.b16 %v54
  %v123 = vunpack.c.h.b16 %v54
  %v124 = vunpack.c.l.b16 %v55
  %v125 = vunpack.c.h.b16 %v55
  %v126 = vunpack.c.l.b16 %v56
  %v127 = vunpack.c.h.b16 %v56
  %v128 = vunpack.c.l.b16 %v57
  %v129 = vunpack.c.h.b16 %v57
  %v130 = vunpack.c.l.b16 %v58
  %v131 = vunpack.c.h.b16 %v58
  %v132 = vunpack.c.l.b16 %v59
  %v133 = vunpack.c.h.b16 %v59
  %v134 = vunpack.c.l.b16 %v60
  %v135 = vunpack.c.h.b16 %v60
  %v136 = vunpack.c.l.b16 %v61
  %v137 = vunpack.c.h.b16 %v61
  %v138 = vunpack.c.l.b16 %v62
  %v139 = vunpack.c.h.b16 %v62
  %v140 = vunpack.c.l.b16 %v63
  %v141 = vunpack.c.h.b16 %v63
  %v142 = vunpack.c.l.b16 %v64
  %v143 = vunpack.c.h.b16 %v64
  %v144 = vunpack.c.l.b16 %v65
  %v145 = vunpack.c.h.b16 %v65
  %v146 = vpack.c.b16 %v116, %v114
  %v147 = vpack.c.b16 %v117, %v115
  %v148 = vpack.c.b16 %v120, %v118
  %v149 = vpack.c.b16 %v121, %v119
  %v150 = vpack.c.b16 %v124, %v122
  %v151 = vpack.c.b16 %v125, %v123
  %v152 = vpack.c.b16 %v128, %v126
  %v153 = vpack.c.b16 %v129, %v127
  %v154 = vpack.c.b16 %v132, %v130
  %v155 = vpack.c.b16 %v133, %v131
  %v156 = vpack.c.b16 %v136, %v134
  %v157 = vpack.c.b16 %v137, %v135
  %v158 = vpack.c.b16 %v140, %v138
  %v159 = vpack.c.b16 %v141, %v139
  %v160 = vpack.c.b16 %v144, %v142
  %v161 = vpack.c.b16 %v145, %v143
  %v210 = vunpack.c.l.b16 %v66
  %v211 = vunpack.c.l.b16 %v67
  %v212 = vunpack.c.l.b16 %v68
  %v213 = vunpack.c.l.b16 %v69
  %v214 = vunpack.c.l.b16 %v70
  %v215 = vunpack.c.l.b16 %v71
  %v216 = vunpack.c.l.b16 %v72
  %v217 = vunpack.c.l.b16 %v73
  %v218 = vunpack.c.l.b16 %v74
  %v219 = vunpack.c.l.b16 %v75
  %v220 = vunpack.c.l.b16 %v76
  %v221 = vunpack.c.l.b16 %v77
  %v222 = vunpack.c.l.b16 %v78
  %v223 = vunpack.c.l.b16 %v79
  %v224 = vunpack.c.l.b16 %v80
  %v225 = vunpack.c.l.b16 %v81
  %v226 = vunpack.c.l.b16 %v82
  %v227 = vunpack.c.l.b16 %v83
  %v228 = vunpack.c.l.b16 %v84
  %v229 = vunpack.c.l.b16 %v85
  %v230 = vunpack.c.l.b16 %v86
  %v231 = vunpack.c.l.b16 %v87
  %v232 = vunpack.c.l.b16 %v88
  %v233 = vunpack.c.l.b16 %v89
  %v234 = vunpack.c.l.b16 %v90
  %v235 = vunpack.c.l.b16 %v91
  %v236 = vunpack.c.l.b16 %v92
  %v237 = vunpack.c.l.b16 %v93
  %v238 = vunpack.c.l.b16 %v94
  %v239 = vunpack.c.l.b16 %v95
  %v240 = vunpack.c.l.b16 %v96
  %v241 = vunpack.c.l.b16 %v97
  %v242 = vpack.c.b16 %v211, %v210
  %v243 = vpack.c.b16 %v213, %v212
  %v244 = vpack.c.b16 %v215, %v214
  %v245 = vpack.c.b16 %v217, %v216
  %v246 = vpack.c.b16 %v219, %v218
  %v247 = vpack.c.b16 %v221, %v220
  %v248 = vpack.c.b16 %v223, %v222
  %v249 = vpack.c.b16 %v225, %v224
  %v250 = vpack.c.b16 %v227, %v226
  %v251 = vpack.c.b16 %v229, %v228
  %v252 = vpack.c.b16 %v231, %v230
  %v253 = vpack.c.b16 %v233, %v232
  %v254 = vpack.c.b16 %v235, %v234
  %v255 = vpack.c.b16 %v237, %v236
  %v256 = vpack.c.b16 %v239, %v238
  %v257 = vpack.c.b16 %v241, %v240
  %274 = vmatprep.subr.bf16.mxu0 0
  %275 = vmatpush1.bf16.msra.mxu0 %v242
  %276 = vmatprep.subr.bf16.mxu0 0
  %277 = vmatpush1.bf16.msra.mxu0 %v243
  %278 = vmatprep.subr.bf16.mxu0 0
  %279 = vmatpush1.bf16.msra.mxu0 %v244
  %280 = vmatprep.subr.bf16.mxu0 0
  %281 = vmatpush1.bf16.msra.mxu0 %v245
  %282 = vmatprep.subr.bf16.mxu0 0
  %283 = vmatpush1.bf16.msra.mxu0 %v246
  %284 = vmatprep.subr.bf16.mxu0 0
  %285 = vmatpush1.bf16.msra.mxu0 %v247
  %286 = vmatprep.subr.bf16.mxu0 0
  %287 = vmatpush1.bf16.msra.mxu0 %v248
  %288 = vmatprep.subr.bf16.mxu0 0
  %289 = vmatpush1.bf16.msra.mxu0 %v249
  %290 = vmatprep.subr.bf16.mxu0 0
  %291 = vmatpush1.bf16.msra.mxu0 %v250
  %292 = vmatprep.subr.bf16.mxu0 0
  %293 = vmatpush1.bf16.msra.mxu0 %v251
  %294 = vmatprep.subr.bf16.mxu0 0
  %295 = vmatpush1.bf16.msra.mxu0 %v252
  %296 = vmatprep.subr.bf16.mxu0 0
  %297 = vmatpush1.bf16.msra.mxu0 %v253
  %298 = vmatprep.subr.bf16.mxu0 0
  %299 = vmatpush1.bf16.msra.mxu0 %v254
  %300 = vmatprep.subr.bf16.mxu0 0
  %301 = vmatpush1.bf16.msra.mxu0 %v255
  %302 = vmatprep.subr.bf16.mxu0 0
  %303 = vmatpush1.bf16.msra.mxu0 %v256
  %304 = vmatprep.subr.bf16.mxu0 0
  %305 = vmatpush1.bf16.msra.mxu0 %v257
  %306 = vmatprep.mubr.bf16.mxu0 %v147
  %307 = vmatmul.mubr.bf16.gmra.mrb[0].mxu0 %v146
  %v308 = vpop.f32.mrb[0].mxu0
  %v309 = vadd.f32 0.0, %v308
  %v310 = vpop.f32.mrb[0].mxu0
  %v311 = vpop.f32.mrb[0].mxu0
  %v312 = vadd.f32 0.0, %v311
  %v313 = vpop.f32.mrb[0].mxu0
  %314 = vmatprep.mubr.bf16.mxu0 %v149
  %315 = vmatmul.mubr.bf16.gmra.mrb[0].mxu0 %v148
  %v316 = vpop.f32.mrb[0].mxu0
  %v317 = vadd.f32 0.0, %v316
  %v318 = vpop.f32.mrb[0].mxu0
  %v319 = vpop.f32.mrb[0].mxu0
  %v320 = vadd.f32 0.0, %v319
  %v321 = vpop.f32.mrb[0].mxu0
  %322 = vmatprep.mubr.bf16.mxu0 %v151
  %323 = vmatmul.mubr.bf16.gmra.mrb[0].mxu0 %v150
  %v324 = vpop.f32.mrb[0].mxu0
  %v325 = vadd.f32 0.0, %v324
  %v326 = vpop.f32.mrb[0].mxu0
  %v327 = vpop.f32.mrb[0].mxu0
  %v328 = vadd.f32 0.0, %v327
  %v329 = vpop.f32.mrb[0].mxu0
  %330 = vmatprep.mubr.bf16.mxu0 %v153
  %331 = vmatmul.mubr.bf16.gmra.mrb[0].mxu0 %v152
  %v332 = vpop.f32.mrb[0].mxu0
  %v333 = vadd.f32 0.0, %v332
  %v334 = vpop.f32.mrb[0].mxu0
  %v335 = vpop.f32.mrb[0].mxu0
  %v336 = vadd.f32 0.0, %v335
  %v337 = vpop.f32.mrb[0].mxu0
  %338 = vmatprep.mubr.bf16.mxu0 %v155
  %339 = vmatmul.mubr.bf16.gmra.mrb[0].mxu0 %v154
  %v340 = vpop.f32.mrb[0].mxu0
  %v341 = vadd.f32 0.0, %v340
  %v342 = vpop.f32.mrb[0].mxu0
  %v343 = vpop.f32.mrb[0].mxu0
  %v344 = vadd.f32 0.0, %v343
  %v345 = vpop.f32.mrb[0].mxu0
  %346 = vmatprep.mubr.bf16.mxu0 %v157
  %347 = vmatmul.mubr.bf16.gmra.mrb[0].mxu0 %v156
  %v348 = vpop.f32.mrb[0].mxu0
  %v349 = vadd.f32 0.0, %v348
  %v350 = vpop.f32.mrb[0].mxu0
  %v351 = vpop.f32.mrb[0].mxu0
  %v352 = vadd.f32 0.0, %v351
  %v353 = vpop.f32.mrb[0].mxu0
  %354 = vmatprep.mubr.bf16.mxu0 %v159
  %355 = vmatmul.mubr.bf16.gmra.mrb[0].mxu0 %v158
  %v356 = vpop.f32.mrb[0].mxu0
  %v357 = vadd.f32 0.0, %v356
  %v358 = vpop.f32.mrb[0].mxu0
  %v359 = vpop.f32.mrb[0].mxu0
  %v360 = vadd.f32 0.0, %v359
  %v361 = vpop.f32.mrb[0].mxu0
  %362 = vmatprep.mubr.bf16.mxu0 %v161
  %363 = vmatmul.mubr.bf16.gmra.mrb[0].mxu0 %v160
  %v364 = vpop.f32.mrb[0].mxu0
  %v365 = vadd.f32 0.0, %v364
  %v366 = vpop.f32.mrb[0].mxu0
  %v367 = vpop.f32.mrb[0].mxu0
  %v368 = vadd.f32 0.0, %v367
  %v369 = vpop.f32.mrb[0].mxu0
  %370 = vdwg.mxu0
  %v371 = vadd.f32 %v34, %v309
  %v372 = vadd.f32 %v35, %v312
  %v373 = vadd.f32 %v36, %v317
  %v374 = vadd.f32 %v37, %v320
  %v375 = vadd.f32 %v38, %v325
  %v376 = vadd.f32 %v39, %v328
  %v377 = vadd.f32 %v40, %v333
  %v378 = vadd.f32 %v41, %v336
  %v379 = vadd.f32 %v42, %v341
  %v380 = vadd.f32 %v43, %v344
  %v381 = vadd.f32 %v44, %v349
  %v382 = vadd.f32 %v45, %v352
  %v383 = vadd.f32 %v46, %v357
  %v384 = vadd.f32 %v47, %v360
  %v385 = vadd.f32 %v48, %v365
  %v386 = vadd.f32 %v49, %v368
  %387 = vst [vmem:[#allocation2] sm:$0xff] %v371
  %388 = vst [vmem:[#allocation2 + $0x8] sm:$0xff] %v372
  %389 = vst [vmem:[#allocation2 + $0x10] sm:$0xff] %v373
  %390 = vst [vmem:[#allocation2 + $0x18] sm:$0xff] %v374
  %391 = vst [vmem:[#allocation2 + $0x20] sm:$0xff] %v375
  %392 = vst [vmem:[#allocation2 + $0x28] sm:$0xff] %v376
  %393 = vst [vmem:[#allocation2 + $0x30] sm:$0xff] %v377
  %394 = vst [vmem:[#allocation2 + $0x38] sm:$0xff] %v378
  %395 = vst [vmem:[#allocation2 + $0x40] sm:$0xff] %v379
  %396 = vst [vmem:[#allocation2 + $0x48] sm:$0xff] %v380
  %397 = vst [vmem:[#allocation2 + $0x50] sm:$0xff] %v381
  %398 = vst [vmem:[#allocation2 + $0x58] sm:$0xff] %v382
  %399 = vst [vmem:[#allocation2 + $0x60] sm:$0xff] %v383
  %400 = vst [vmem:[#allocation2 + $0x68] sm:$0xff] %v384
  %401 = vst [vmem:[#allocation2 + $0x70] sm:$0xff] %v385
  %402 = vst [vmem:[#allocation2 + $0x78] sm:$0xff] %v386
  // Predicated region
  $region14: #{discriminator_forward.11} parent=0 // pred_check
    %p403 = pneg %p14
  $region15: #{discriminator_forward.11} parent=0 // pred_check_branch
    %405 = sbr.rel (%p403) target = $region17
  $region16: #{discriminator_forward.11} parent=0 // pred_region
    %v406 = vld [vmem:[#allocation2] sm:$0xff]
    %v407 = vld [vmem:[#allocation2 + $0x8] sm:$0xff]
    %v408 = vld [vmem:[#allocation2 + $0x10] sm:$0xff]
    %v409 = vld [vmem:[#allocation2 + $0x18] sm:$0xff]
    %v410 = vld [vmem:[#allocation2 + $0x20] sm:$0xff]
    %v411 = vld [vmem:[#allocation2 + $0x28] sm:$0xff]
    %v412 = vld [vmem:[#allocation2 + $0x30] sm:$0xff]
    %v413 = vld [vmem:[#allocation2 + $0x38] sm:$0xff]
    %v414 = vld [vmem:[#allocation2 + $0x40] sm:$0xff]
    %v415 = vld [vmem:[#allocation2 + $0x48] sm:$0xff]
    %v416 = vld [vmem:[#allocation2 + $0x50] sm:$0xff]
    %v417 = vld [vmem:[#allocation2 + $0x58] sm:$0xff]
    %v418 = vld [vmem:[#allocation2 + $0x60] sm:$0xff]
    %v419 = vld [vmem:[#allocation2 + $0x68] sm:$0xff]
    %v420 = vld [vmem:[#allocation2 + $0x70] sm:$0xff]
    %v421 = vld [vmem:[#allocation2 + $0x78] sm:$0xff]
    %422 = vst [vmem:[%s2] sm:$0xff] %v406
    %423 = vst [vmem:[%s2 + $0x8] sm:$0xff] %v407
    %424 = vst [vmem:[%s2 + $0x10] sm:$0xff] %v408
    %425 = vst [vmem:[%s2 + $0x18] sm:$0xff] %v409
    %426 = vst [vmem:[%s2 + $0x20] sm:$0xff] %v410
    %427 = vst [vmem:[%s2 + $0x28] sm:$0xff] %v411
    %428 = vst [vmem:[%s2 + $0x30] sm:$0xff] %v412
    %429 = vst [vmem:[%s2 + $0x38] sm:$0xff] %v413
    %430 = vst [vmem:[%s2 + $0x40] sm:$0xff] %v414
    %431 = vst [vmem:[%s2 + $0x48] sm:$0xff] %v415
    %432 = vst [vmem:[%s2 + $0x50] sm:$0xff] %v416
    %433 = vst [vmem:[%s2 + $0x58] sm:$0xff] %v417
    %434 = vst [vmem:[%s2 + $0x60] sm:$0xff] %v418
    %435 = vst [vmem:[%s2 + $0x68] sm:$0xff] %v419
    %436 = vst [vmem:[%s2 + $0x70] sm:$0xff] %v420
    %437 = vst [vmem:[%s2 + $0x78] sm:$0xff] %v421
    %v438 = vadd.f32 %v406, %v407
    %v439 = vadd.f32 %v438, %v408
    %v440 = vadd.f32 %v439, %v409
    %v441 = vadd.f32 %v440, %v410
    %v442 = vadd.f32 %v441, %v411
    %v443 = vadd.f32 %v442, %v412
    %v444 = vadd.f32 %v443, %v413
    %v445 = vadd.f32 %v444, %v414
    %v446 = vadd.f32 %v445, %v415
    %v447 = vadd.f32 %v446, %v416
    %v448 = vadd.f32 %v447, %v417
    %v449 = vadd.f32 %v448, %v418
    %v450 = vadd.f32 %v449, %v419
    %v451 = vadd.f32 %v450, %v420
    %v452 = vadd.f32 %v451, %v421
    %v453 = vrot.slane %v452, 4
    %v454 = vadd.f32 %v452, %v453
    %v455 = vrot.slane %v454, 2
    %v456 = vadd.f32 %v454, %v455
    %v457 = vrot.slane %v456, 1
    %v458 = vadd.f32 %v456, %v457
    %v459 = vmul.f32 %v406, %v406
    %v460 = vmul.f32 %v407, %v407
    %v461 = vmul.f32 %v408, %v408
    %v462 = vmul.f32 %v409, %v409
    %v463 = vmul.f32 %v410, %v410
    %v464 = vmul.f32 %v411, %v411
    %v465 = vmul.f32 %v412, %v412
    %v466 = vmul.f32 %v413, %v413
    %v467 = vmul.f32 %v414, %v414
    %v468 = vmul.f32 %v415, %v415
    %v469 = vmul.f32 %v416, %v416
    %v470 = vmul.f32 %v417, %v417
    %v471 = vmul.f32 %v418, %v418
    %v472 = vmul.f32 %v419, %v419
    %v473 = vmul.f32 %v420, %v420
    %v474 = vmul.f32 %v421, %v421
    %v475 = vadd.f32 %v459, %v460
    %v476 = vadd.f32 %v475, %v461
    %v477 = vadd.f32 %v476, %v462
    %v478 = vadd.f32 %v477, %v463
    %v479 = vadd.f32 %v478, %v464
    %v480 = vadd.f32 %v479, %v465
    %v481 = vadd.f32 %v480, %v466
    %v482 = vadd.f32 %v481, %v467
    %v483 = vadd.f32 %v482, %v468
    %v484 = vadd.f32 %v483, %v469
    %v485 = vadd.f32 %v484, %v470
    %v486 = vadd.f32 %v485, %v471
    %v487 = vadd.f32 %v486, %v472
    %v488 = vadd.f32 %v487, %v473
    %v489 = vadd.f32 %v488, %v474
    %v490 = vrot.slane %v489, 4
    %v491 = vadd.f32 %v489, %v490
    %v492 = vrot.slane %v491, 2
    %v493 = vadd.f32 %v491, %v492
    %v494 = vrot.slane %v493, 1
    %v495 = vadd.f32 %v493, %v494
    %v496 = vlaneseq
    %v497 = vshrl.u32 %v496, 7
    %vm498 = vcmp.eq.s32.totalorder %v497, 0
    %vm499 = vcmp.eq.s32.totalorder %v497, 1
    %v500 = vsel %vm499, %v495, 0.0
    %v501 = vsel %vm498, %v458, %v500
    %502 = vst [vmem:[%s3] sm:$0xff] %v501
  $region17: #{discriminator_forward.11} parent=0 // pred_fallthru
    _
  // Predicated region
  $region18: #{discriminator_forward.11} parent=0 // pred_check
    _
  $region19: #{discriminator_forward.11} parent=0 // pred_check_branch
    %504 = sbr.rel (0) target = $region21
  $region20: #{discriminator_forward.11} parent=0 // pred_region
    _
  $region21: #{discriminator_forward.11} parent=0 // pred_fallthru
    _
  // Predicated region
  $region22: #{discriminator_forward.11} parent=0 // pred_check
    _
  $region23: #{discriminator_forward.11} parent=0 // pred_check_branch
    %506 = sbr.rel (0) target = $region25
  $region24: #{discriminator_forward.11} parent=0 // pred_region
    _
  $region25: #{discriminator_forward.11} parent=0 // pred_fallthru
    _
  // Predicated region
  $region26: #{discriminator_forward.11} parent=0 // pred_check
    _
  $region27: #{discriminator_forward.11} parent=0 // pred_check_branch
    %508 = sbr.rel (0) target = $region29
  $region28: #{discriminator_forward.11} parent=0 // pred_region
    _
  $region29: #{discriminator_forward.11} parent=0 // pred_fallthru
    _
  // Predicated region
  $region30: #{discriminator_forward.11} parent=0 // pred_check
    _
  $region31: #{discriminator_forward.11} parent=0 // pred_check_branch
    %510 = sbr.rel (0) target = $region33
  $region32: #{discriminator_forward.11} parent=0 // pred_region
    _
  $region33: #{discriminator_forward.11} parent=0 // pred_fallthru
    _

// kernel: discriminator_forward.14
$region0: #{discriminator_forward.14}
  #allocation0 [shape = 'u32[]', space=smem, size = 0x4, offset = 0x4, fixed_abs, tag = 'smem constant byte address 0x4 - core index']
  #allocation1 [shape = 'u32[144,128]{1,0:T(1,128)}', space=vmem, size = 0x12000, scoped, tag = 'internal scratch']
  %s0 = inlined_call_operand.vmem [shape: f32[32,128], index: 0, kind: input, shape index: {}]
  %s1 = inlined_call_operand.vmem [shape: f32[1,128], index: 1, kind: input, shape index: {}]
  %s2 = inlined_call_operand.vmem [shape: f32[1,128], index: 2, kind: input, shape index: {}]
  %s3 = inlined_call_operand.vmem [shape: bf16[32,128], index: 3, kind: output, shape index: {}]
  %s4 = sld [smem:[#allocation0]]
  $region22: #{discriminator_forward.14} parent=0
    _
  %s6 = ssub.s32 1, %s4
  %s7 = scalar_select 0, %s6, %s4
  // Predicated region
  $region2: #{discriminator_forward.14} parent=0 // pred_check
    _
  $region3: #{discriminator_forward.14} parent=0 // pred_check_branch
    %9 = sbr.rel (0) target = $region5
  $region4: #{discriminator_forward.14} parent=0 // pred_region
    _
  $region5: #{discriminator_forward.14} parent=0 // pred_fallthru
    _
  // Predicated region
  $region6: #{discriminator_forward.14} parent=0 // pred_check
    _
  $region7: #{discriminator_forward.14} parent=0 // pred_check_branch
    %11 = sbr.rel (0) target = $region9
  $region8: #{discriminator_forward.14} parent=0 // pred_region
    _
  $region9: #{discriminator_forward.14} parent=0 // pred_fallthru
    _
  // Predicated region
  $region10: #{discriminator_forward.14} parent=0 // pred_check
    _
  $region11: #{discriminator_forward.14} parent=0 // pred_check_branch
    %13 = sbr.rel (0) target = $region13
  $region12: #{discriminator_forward.14} parent=0 // pred_region
    _
  $region13: #{discriminator_forward.14} parent=0 // pred_fallthru
    _
  %v14 = vld [vmem:[%s0] sm:$0xff]
  %v15 = vld [vmem:[%s0 + $0x8] sm:$0xff]
  %v16 = vld [vmem:[%s0 + $0x10] sm:$0xff]
  %v17 = vld [vmem:[%s0 + $0x18] sm:$0xff]
  %v18 = vld [vmem:[%s1] sm:$0x1]
  %v20 = vlaneseq
  %v21 = vshrl.u32 %v20, 7
  %v22 = vsub.s32 0, %v21
  %v23 = vrot.slane %v18, %v22
  %v25 = vmul.f32 %v14, %v23
  %v26 = vmul.f32 %v15, %v23
  %v27 = vmul.f32 %v16, %v23
  %v28 = vmul.f32 %v17, %v23
  %v29 = vld [vmem:[%s2] sm:$0x1]
  %v31 = vlaneseq
  %v32 = vshrl.u32 %v31, 7
  %v33 = vsub.s32 0, %v32
  %v34 = vrot.slane %v29, %v33
  %v36 = vadd.f32 %v25, %v34
  %v37 = vadd.f32 %v26, %v34
  %v38 = vadd.f32 %v27, %v34
  %v39 = vadd.f32 %v28, %v34
  %vm40 = vcmp.ge.f32.partialorder %v36, 0.0
  %vm41 = vcmp.ge.f32.partialorder %v37, 0.0
  %vm42 = vcmp.ge.f32.partialorder %v38, 0.0
  %vm43 = vcmp.ge.f32.partialorder %v39, 0.0
  %v44 = vmul.f32 %v36, 0.2
  %v45 = vmul.f32 %v37, 0.2
  %v46 = vmul.f32 %v38, 0.2
  %v47 = vmul.f32 %v39, 0.2
  %v48 = vsel %vm40, %v36, %v44
  %v49 = vsel %vm41, %v37, %v45
  %v50 = vsel %vm42, %v38, %v46
  %v51 = vsel %vm43, %v39, %v47
  %v52 = vpack.c.bf16 %v49, %v48
  %v53 = vpack.c.bf16 %v51, %v50
  %v56 = vunpack.c.l.b16 %v52
  %v57 = vunpack.c.h.b16 %v52
  %v58 = vunpack.c.l.b16 %v53
  %v59 = vunpack.c.h.b16 %v53
  %v60 = vpack.c.b16 %v56, %v56
  %v61 = vpack.c.b16 %v57, %v57
  %v62 = vpack.c.b16 %v58, %v58
  %v63 = vpack.c.b16 %v59, %v59
  %68 = vst [vmem:[%s3] sm:$0xf] %v60
  %69 = vst [vmem:[%s3 + $0x4] sm:$0xf] %v61
  %70 = vst [vmem:[%s3 + $0x8] sm:$0xf] %v62
  %71 = vst [vmem:[%s3 + $0xc] sm:$0xf] %v63
  // Predicated region
  $region14: #{discriminator_forward.14} parent=0 // pred_check
    _
  $region15: #{discriminator_forward.14} parent=0 // pred_check_branch
    %73 = sbr.rel (0) target = $region17
  $region16: #{discriminator_forward.14} parent=0 // pred_region
    _
  $region17: #{discriminator_forward.14} parent=0 // pred_fallthru
    _
  // Predicated region
  $region18: #{discriminator_forward.14} parent=0 // pred_check
    _
  $region19: #{discriminator_forward.14} parent=0 // pred_check_branch
    %75 = sbr.rel (0) target = $region21
  $region20: #{discriminator_forward.14} parent=0 // pred_region
    _
  $region21: #{discriminator_forward.14} parent=0 // pred_fallthru
    _

// kernel: discriminator_forward.13
$region0: #{discriminator_forward.13}
  #allocation0 [shape = 'u32[]', space=smem, size = 0x4, offset = 0x4, fixed_abs, tag = 'smem constant byte address 0x4 - core index']
  #allocation1 [shape = 'u32[144,128]{1,0:T(1,128)}', space=vmem, size = 0x12000, scoped, tag = 'internal scratch']
  #allocation2 [shape = 'f32[32,128]{1,0:T(8,128)}', space=vmem, size = 0x4000, scoped, tag = 'scratch operand']
  %s0 = inlined_call_operand.vmem [shape: bf16[32,512], index: 0, kind: input, shape index: {}]
  %s1 = inlined_call_operand.vmem [shape: bf16[512,128], index: 1, kind: input, shape index: {}]
  %s2 = inlined_call_operand.vmem [shape: f32[32,128], index: 2, kind: output, shape index: {0}]
  %s3 = inlined_call_operand.vmem [shape: f32[8,128], index: 3, kind: output, shape index: {1}]
  %4 = xla_tuple %s2, %s3
  %s5 = sld [smem:[#allocation0]]
  $region34: #{discriminator_forward.13} parent=0
    _
  %s7 = ssub.s32 1, %s5
  %s8 = scalar_select 0, %s7, %s5
  // Predicated region
  $region2: #{discriminator_forward.13} parent=0 // pred_check
    _
  $region3: #{discriminator_forward.13} parent=0 // pred_check_branch
    %10 = sbr.rel (0) target = $region5
  $region4: #{discriminator_forward.13} parent=0 // pred_region
    _
  $region5: #{discriminator_forward.13} parent=0 // pred_fallthru
    _
  // Predicated region
  $region6: #{discriminator_forward.13} parent=0 // pred_check
    _
  $region7: #{discriminator_forward.13} parent=0 // pred_check_branch
    %12 = sbr.rel (0) target = $region9
  $region8: #{discriminator_forward.13} parent=0 // pred_region
    _
  $region9: #{discriminator_forward.13} parent=0 // pred_fallthru
    _
  %p14 = scmp.eq.s32.totalorder 0, 0
  // Predicated region
  $region10: #{discriminator_forward.13} parent=0 // pred_check
    %p15 = pneg %p14
  $region11: #{discriminator_forward.13} parent=0 // pred_check_branch
    %17 = sbr.rel (%p15) target = $region13
  $region12: #{discriminator_forward.13} parent=0 // pred_region
    %18 = vst [vmem:[#allocation2] sm:$0xff] 0.0
    %19 = vst [vmem:[#allocation2 + $0x8] sm:$0xff] 0.0
    %20 = vst [vmem:[#allocation2 + $0x10] sm:$0xff] 0.0
    %21 = vst [vmem:[#allocation2 + $0x18] sm:$0xff] 0.0
  $region13: #{discriminator_forward.13} parent=0 // pred_fallthru
    _
  %v22 = vld [vmem:[#allocation2] sm:$0xff]
  %v23 = vld [vmem:[#allocation2 + $0x8] sm:$0xff]
  %v24 = vld [vmem:[#allocation2 + $0x10] sm:$0xff]
  %v25 = vld [vmem:[#allocation2 + $0x18] sm:$0xff]
  %v26 = vld [vmem:[%s0] sm:$0xff]
  %v27 = vld [vmem:[%s0 + $0x8] sm:$0xff]
  %v28 = vld [vmem:[%s0 + $0x10] sm:$0xff]
  %v29 = vld [vmem:[%s0 + $0x18] sm:$0xff]
  %v30 = vld [vmem:[%s0 + $0x20] sm:$0xff]
  %v31 = vld [vmem:[%s0 + $0x28] sm:$0xff]
  %v32 = vld [vmem:[%s0 + $0x30] sm:$0xff]
  %v33 = vld [vmem:[%s0 + $0x38] sm:$0xff]
  %v34 = vld [vmem:[%s1] sm:$0xf]
  %v35 = vld [vmem:[%s1 + $0x4] sm:$0xf]
  %v36 = vld [vmem:[%s1 + $0x8] sm:$0xf]
  %v37 = vld [vmem:[%s1 + $0xc] sm:$0xf]
  %v38 = vld [vmem:[%s1 + $0x10] sm:$0xf]
  %v39 = vld [vmem:[%s1 + $0x14] sm:$0xf]
  %v40 = vld [vmem:[%s1 + $0x18] sm:$0xf]
  %v41 = vld [vmem:[%s1 + $0x1c] sm:$0xf]
  %v42 = vld [vmem:[%s1 + $0x20] sm:$0xf]
  %v43 = vld [vmem:[%s1 + $0x24] sm:$0xf]
  %v44 = vld [vmem:[%s1 + $0x28] sm:$0xf]
  %v45 = vld [vmem:[%s1 + $0x2c] sm:$0xf]
  %v46 = vld [vmem:[%s1 + $0x30] sm:$0xf]
  %v47 = vld [vmem:[%s1 + $0x34] sm:$0xf]
  %v48 = vld [vmem:[%s1 + $0x38] sm:$0xf]
  %v49 = vld [vmem:[%s1 + $0x3c] sm:$0xf]
  %v50 = vld [vmem:[%s1 + $0x40] sm:$0xf]
  %v51 = vld [vmem:[%s1 + $0x44] sm:$0xf]
  %v52 = vld [vmem:[%s1 + $0x48] sm:$0xf]
  %v53 = vld [vmem:[%s1 + $0x4c] sm:$0xf]
  %v54 = vld [vmem:[%s1 + $0x50] sm:$0xf]
  %v55 = vld [vmem:[%s1 + $0x54] sm:$0xf]
  %v56 = vld [vmem:[%s1 + $0x58] sm:$0xf]
  %v57 = vld [vmem:[%s1 + $0x5c] sm:$0xf]
  %v58 = vld [vmem:[%s1 + $0x60] sm:$0xf]
  %v59 = vld [vmem:[%s1 + $0x64] sm:$0xf]
  %v60 = vld [vmem:[%s1 + $0x68] sm:$0xf]
  %v61 = vld [vmem:[%s1 + $0x6c] sm:$0xf]
  %v62 = vld [vmem:[%s1 + $0x70] sm:$0xf]
  %v63 = vld [vmem:[%s1 + $0x74] sm:$0xf]
  %v64 = vld [vmem:[%s1 + $0x78] sm:$0xf]
  %v65 = vld [vmem:[%s1 + $0x7c] sm:$0xf]
  %v66 = vld [vmem:[%s1 + $0x80] sm:$0xf]
  %v67 = vld [vmem:[%s1 + $0x84] sm:$0xf]
  %v68 = vld [vmem:[%s1 + $0x88] sm:$0xf]
  %v69 = vld [vmem:[%s1 + $0x8c] sm:$0xf]
  %v70 = vld [vmem:[%s1 + $0x90] sm:$0xf]
  %v71 = vld [vmem:[%s1 + $0x94] sm:$0xf]
  %v72 = vld [vmem:[%s1 + $0x98] sm:$0xf]
  %v73 = vld [vmem:[%s1 + $0x9c] sm:$0xf]
  %v74 = vld [vmem:[%s1 + $0xa0] sm:$0xf]
  %v75 = vld [vmem:[%s1 + $0xa4] sm:$0xf]
  %v76 = vld [vmem:[%s1 + $0xa8] sm:$0xf]
  %v77 = vld [vmem:[%s1 + $0xac] sm:$0xf]
  %v78 = vld [vmem:[%s1 + $0xb0] sm:$0xf]
  %v79 = vld [vmem:[%s1 + $0xb4] sm:$0xf]
  %v80 = vld [vmem:[%s1 + $0xb8] sm:$0xf]
  %v81 = vld [vmem:[%s1 + $0xbc] sm:$0xf]
  %v82 = vld [vmem:[%s1 + $0xc0] sm:$0xf]
  %v83 = vld [vmem:[%s1 + $0xc4] sm:$0xf]
  %v84 = vld [vmem:[%s1 + $0xc8] sm:$0xf]
  %v85 = vld [vmem:[%s1 + $0xcc] sm:$0xf]
  %v86 = vld [vmem:[%s1 + $0xd0] sm:$0xf]
  %v87 = vld [vmem:[%s1 + $0xd4] sm:$0xf]
  %v88 = vld [vmem:[%s1 + $0xd8] sm:$0xf]
  %v89 = vld [vmem:[%s1 + $0xdc] sm:$0xf]
  %v90 = vld [vmem:[%s1 + $0xe0] sm:$0xf]
  %v91 = vld [vmem:[%s1 + $0xe4] sm:$0xf]
  %v92 = vld [vmem:[%s1 + $0xe8] sm:$0xf]
  %v93 = vld [vmem:[%s1 + $0xec] sm:$0xf]
  %v94 = vld [vmem:[%s1 + $0xf0] sm:$0xf]
  %v95 = vld [vmem:[%s1 + $0xf4] sm:$0xf]
  %v96 = vld [vmem:[%s1 + $0xf8] sm:$0xf]
  %v97 = vld [vmem:[%s1 + $0xfc] sm:$0xf]
  %v106 = vunpack.c.l.b16 %v26
  %v107 = vunpack.c.h.b16 %v26
  %v108 = vunpack.c.l.b16 %v27
  %v109 = vunpack.c.h.b16 %v27
  %v110 = vunpack.c.l.b16 %v28
  %v111 = vunpack.c.h.b16 %v28
  %v112 = vunpack.c.l.b16 %v29
  %v113 = vunpack.c.h.b16 %v29
  %v114 = vunpack.c.l.b16 %v30
  %v115 = vunpack.c.h.b16 %v30
  %v116 = vunpack.c.l.b16 %v31
  %v117 = vunpack.c.h.b16 %v31
  %v118 = vunpack.c.l.b16 %v32
  %v119 = vunpack.c.h.b16 %v32
  %v120 = vunpack.c.l.b16 %v33
  %v121 = vunpack.c.h.b16 %v33
  %v122 = vpack.c.b16 %v110, %v106
  %v123 = vpack.c.b16 %v111, %v107
  %v124 = vpack.c.b16 %v112, %v108
  %v125 = vpack.c.b16 %v113, %v109
  %v126 = vpack.c.b16 %v118, %v114
  %v127 = vpack.c.b16 %v119, %v115
  %v128 = vpack.c.b16 %v120, %v116
  %v129 = vpack.c.b16 %v121, %v117
  %v202 = vunpack.c.l.b16 %v34
  %v203 = vunpack.c.l.b16 %v35
  %v204 = vunpack.c.l.b16 %v36
  %v205 = vunpack.c.l.b16 %v37
  %v206 = vunpack.c.l.b16 %v38
  %v207 = vunpack.c.l.b16 %v39
  %v208 = vunpack.c.l.b16 %v40
  %v209 = vunpack.c.l.b16 %v41
  %v210 = vunpack.c.l.b16 %v42
  %v211 = vunpack.c.l.b16 %v43
  %v212 = vunpack.c.l.b16 %v44
  %v213 = vunpack.c.l.b16 %v45
  %v214 = vunpack.c.l.b16 %v46
  %v215 = vunpack.c.l.b16 %v47
  %v216 = vunpack.c.l.b16 %v48
  %v217 = vunpack.c.l.b16 %v49
  %v218 = vunpack.c.l.b16 %v50
  %v219 = vunpack.c.l.b16 %v51
  %v220 = vunpack.c.l.b16 %v52
  %v221 = vunpack.c.l.b16 %v53
  %v222 = vunpack.c.l.b16 %v54
  %v223 = vunpack.c.l.b16 %v55
  %v224 = vunpack.c.l.b16 %v56
  %v225 = vunpack.c.l.b16 %v57
  %v226 = vunpack.c.l.b16 %v58
  %v227 = vunpack.c.l.b16 %v59
  %v228 = vunpack.c.l.b16 %v60
  %v229 = vunpack.c.l.b16 %v61
  %v230 = vunpack.c.l.b16 %v62
  %v231 = vunpack.c.l.b16 %v63
  %v232 = vunpack.c.l.b16 %v64
  %v233 = vunpack.c.l.b16 %v65
  %v234 = vunpack.c.l.b16 %v66
  %v235 = vunpack.c.l.b16 %v67
  %v236 = vunpack.c.l.b16 %v68
  %v237 = vunpack.c.l.b16 %v69
  %v238 = vunpack.c.l.b16 %v70
  %v239 = vunpack.c.l.b16 %v71
  %v240 = vunpack.c.l.b16 %v72
  %v241 = vunpack.c.l.b16 %v73
  %v242 = vunpack.c.l.b16 %v74
  %v243 = vunpack.c.l.b16 %v75
  %v244 = vunpack.c.l.b16 %v76
  %v245 = vunpack.c.l.b16 %v77
  %v246 = vunpack.c.l.b16 %v78
  %v247 = vunpack.c.l.b16 %v79
  %v248 = vunpack.c.l.b16 %v80
  %v249 = vunpack.c.l.b16 %v81
  %v250 = vunpack.c.l.b16 %v82
  %v251 = vunpack.c.l.b16 %v83
  %v252 = vunpack.c.l.b16 %v84
  %v253 = vunpack.c.l.b16 %v85
  %v254 = vunpack.c.l.b16 %v86
  %v255 = vunpack.c.l.b16 %v87
  %v256 = vunpack.c.l.b16 %v88
  %v257 = vunpack.c.l.b16 %v89
  %v258 = vunpack.c.l.b16 %v90
  %v259 = vunpack.c.l.b16 %v91
  %v260 = vunpack.c.l.b16 %v92
  %v261 = vunpack.c.l.b16 %v93
  %v262 = vunpack.c.l.b16 %v94
  %v263 = vunpack.c.l.b16 %v95
  %v264 = vunpack.c.l.b16 %v96
  %v265 = vunpack.c.l.b16 %v97
  %v266 = vpack.c.b16 %v203, %v202
  %v267 = vpack.c.b16 %v205, %v204
  %v268 = vpack.c.b16 %v207, %v206
  %v269 = vpack.c.b16 %v209, %v208
  %v270 = vpack.c.b16 %v211, %v210
  %v271 = vpack.c.b16 %v213, %v212
  %v272 = vpack.c.b16 %v215, %v214
  %v273 = vpack.c.b16 %v217, %v216
  %v274 = vpack.c.b16 %v219, %v218
  %v275 = vpack.c.b16 %v221, %v220
  %v276 = vpack.c.b16 %v223, %v222
  %v277 = vpack.c.b16 %v225, %v224
  %v278 = vpack.c.b16 %v227, %v226
  %v279 = vpack.c.b16 %v229, %v228
  %v280 = vpack.c.b16 %v231, %v230
  %v281 = vpack.c.b16 %v233, %v232
  %v282 = vpack.c.b16 %v235, %v234
  %v283 = vpack.c.b16 %v237, %v236
  %v284 = vpack.c.b16 %v239, %v238
  %v285 = vpack.c.b16 %v241, %v240
  %v286 = vpack.c.b16 %v243, %v242
  %v287 = vpack.c.b16 %v245, %v244
  %v288 = vpack.c.b16 %v247, %v246
  %v289 = vpack.c.b16 %v249, %v248
  %v290 = vpack.c.b16 %v251, %v250
  %v291 = vpack.c.b16 %v253, %v252
  %v292 = vpack.c.b16 %v255, %v254
  %v293 = vpack.c.b16 %v257, %v256
  %v294 = vpack.c.b16 %v259, %v258
  %v295 = vpack.c.b16 %v261, %v260
  %v296 = vpack.c.b16 %v263, %v262
  %v297 = vpack.c.b16 %v265, %v264
  %330 = vmatprep.subr.bf16.mxu0 0
  %331 = vmatpush1.bf16.msra.mxu0 %v266
  %332 = vmatprep.subr.bf16.mxu0 0
  %333 = vmatpush1.bf16.msra.mxu0 %v267
  %334 = vmatprep.subr.bf16.mxu0 0
  %335 = vmatpush1.bf16.msra.mxu0 %v268
  %336 = vmatprep.subr.bf16.mxu0 0
  %337 = vmatpush1.bf16.msra.mxu0 %v269
  %338 = vmatprep.subr.bf16.mxu0 0
  %339 = vmatpush1.bf16.msra.mxu0 %v270
  %340 = vmatprep.subr.bf16.mxu0 0
  %341 = vmatpush1.bf16.msra.mxu0 %v271
  %342 = vmatprep.subr.bf16.mxu0 0
  %343 = vmatpush1.bf16.msra.mxu0 %v272
  %344 = vmatprep.subr.bf16.mxu0 0
  %345 = vmatpush1.bf16.msra.mxu0 %v273
  %346 = vmatprep.subr.bf16.mxu0 0
  %347 = vmatpush1.bf16.msra.mxu0 %v274
  %348 = vmatprep.subr.bf16.mxu0 0
  %349 = vmatpush1.bf16.msra.mxu0 %v275
  %350 = vmatprep.subr.bf16.mxu0 0
  %351 = vmatpush1.bf16.msra.mxu0 %v276
  %352 = vmatprep.subr.bf16.mxu0 0
  %353 = vmatpush1.bf16.msra.mxu0 %v277
  %354 = vmatprep.subr.bf16.mxu0 0
  %355 = vmatpush1.bf16.msra.mxu0 %v278
  %356 = vmatprep.subr.bf16.mxu0 0
  %357 = vmatpush1.bf16.msra.mxu0 %v279
  %358 = vmatprep.subr.bf16.mxu0 0
  %359 = vmatpush1.bf16.msra.mxu0 %v280
  %360 = vmatprep.subr.bf16.mxu0 0
  %361 = vmatpush1.bf16.msra.mxu0 %v281
  %362 = vmatprep.mubr.bf16.mxu0 %v123
  %363 = vmatmul.mubr.bf16.gmra.mrb[0].mxu0 %v122
  %v364 = vpop.f32.mrb[0].mxu0
  %v365 = vadd.f32 0.0, %v364
  %v366 = vpop.f32.mrb[0].mxu0
  %v367 = vpop.f32.mrb[0].mxu0
  %v368 = vadd.f32 0.0, %v367
  %v369 = vpop.f32.mrb[0].mxu0
  %370 = vmatprep.mubr.bf16.mxu0 %v127
  %371 = vmatmul.mubr.bf16.gmra.mrb[0].mxu0 %v126
  %v372 = vpop.f32.mrb[0].mxu0
  %v373 = vadd.f32 0.0, %v372
  %v374 = vpop.f32.mrb[0].mxu0
  %v375 = vpop.f32.mrb[0].mxu0
  %v376 = vadd.f32 0.0, %v375
  %v377 = vpop.f32.mrb[0].mxu0
  %378 = vdwg.mxu0
  %379 = vmatprep.subr.bf16.mxu0 0
  %380 = vmatpush1.bf16.msra.mxu0 %v282
  %381 = vmatprep.subr.bf16.mxu0 0
  %382 = vmatpush1.bf16.msra.mxu0 %v283
  %383 = vmatprep.subr.bf16.mxu0 0
  %384 = vmatpush1.bf16.msra.mxu0 %v284
  %385 = vmatprep.subr.bf16.mxu0 0
  %386 = vmatpush1.bf16.msra.mxu0 %v285
  %387 = vmatprep.subr.bf16.mxu0 0
  %388 = vmatpush1.bf16.msra.mxu0 %v286
  %389 = vmatprep.subr.bf16.mxu0 0
  %390 = vmatpush1.bf16.msra.mxu0 %v287
  %391 = vmatprep.subr.bf16.mxu0 0
  %392 = vmatpush1.bf16.msra.mxu0 %v288
  %393 = vmatprep.subr.bf16.mxu0 0
  %394 = vmatpush1.bf16.msra.mxu0 %v289
  %395 = vmatprep.subr.bf16.mxu0 0
  %396 = vmatpush1.bf16.msra.mxu0 %v290
  %397 = vmatprep.subr.bf16.mxu0 0
  %398 = vmatpush1.bf16.msra.mxu0 %v291
  %399 = vmatprep.subr.bf16.mxu0 0
  %400 = vmatpush1.bf16.msra.mxu0 %v292
  %401 = vmatprep.subr.bf16.mxu0 0
  %402 = vmatpush1.bf16.msra.mxu0 %v293
  %403 = vmatprep.subr.bf16.mxu0 0
  %404 = vmatpush1.bf16.msra.mxu0 %v294
  %405 = vmatprep.subr.bf16.mxu0 0
  %406 = vmatpush1.bf16.msra.mxu0 %v295
  %407 = vmatprep.subr.bf16.mxu0 0
  %408 = vmatpush1.bf16.msra.mxu0 %v296
  %409 = vmatprep.subr.bf16.mxu0 0
  %410 = vmatpush1.bf16.msra.mxu0 %v297
  %411 = vmatprep.mubr.bf16.mxu0 %v125
  %412 = vmatmul.mubr.bf16.gmra.mrb[0].mxu0 %v124
  %v413 = vpop.f32.mrb[0].mxu0
  %v414 = vadd.f32 %v365, %v413
  %v415 = vpop.f32.mrb[0].mxu0
  %v416 = vpop.f32.mrb[0].mxu0
  %v417 = vadd.f32 %v368, %v416
  %v418 = vpop.f32.mrb[0].mxu0
  %419 = vmatprep.mubr.bf16.mxu0 %v129
  %420 = vmatmul.mubr.bf16.gmra.mrb[0].mxu0 %v128
  %v421 = vpop.f32.mrb[0].mxu0
  %v422 = vadd.f32 %v373, %v421
  %v423 = vpop.f32.mrb[0].mxu0
  %v424 = vpop.f32.mrb[0].mxu0
  %v425 = vadd.f32 %v376, %v424
  %v426 = vpop.f32.mrb[0].mxu0
  %427 = vdwg.mxu0
  %v428 = vadd.f32 %v22, %v414
  %v429 = vadd.f32 %v23, %v417
  %v430 = vadd.f32 %v24, %v422
  %v431 = vadd.f32 %v25, %v425
  %432 = vst [vmem:[#allocation2] sm:$0xff] %v428
  %433 = vst [vmem:[#allocation2 + $0x8] sm:$0xff] %v429
  %434 = vst [vmem:[#allocation2 + $0x10] sm:$0xff] %v430
  %435 = vst [vmem:[#allocation2 + $0x18] sm:$0xff] %v431
  // Predicated region
  $region14: #{discriminator_forward.13} parent=0 // pred_check
    %p436 = pneg %p14
  $region15: #{discriminator_forward.13} parent=0 // pred_check_branch
    %438 = sbr.rel (%p436) target = $region17
  $region16: #{discriminator_forward.13} parent=0 // pred_region
    %v439 = vld [vmem:[#allocation2] sm:$0xff]
    %v440 = vld [vmem:[#allocation2 + $0x8] sm:$0xff]
    %v441 = vld [vmem:[#allocation2 + $0x10] sm:$0xff]
    %v442 = vld [vmem:[#allocation2 + $0x18] sm:$0xff]
    %443 = vst [vmem:[%s2] sm:$0xff] %v439
    %444 = vst [vmem:[%s2 + $0x8] sm:$0xff] %v440
    %445 = vst [vmem:[%s2 + $0x10] sm:$0xff] %v441
    %446 = vst [vmem:[%s2 + $0x18] sm:$0xff] %v442
    %v447 = vadd.f32 %v439, %v440
    %v448 = vadd.f32 %v447, %v441
    %v449 = vadd.f32 %v448, %v442
    %v450 = vrot.slane %v449, 4
    %v451 = vadd.f32 %v449, %v450
    %v452 = vrot.slane %v451, 2
    %v453 = vadd.f32 %v451, %v452
    %v454 = vrot.slane %v453, 1
    %v455 = vadd.f32 %v453, %v454
    %v456 = vmul.f32 %v439, %v439
    %v457 = vmul.f32 %v440, %v440
    %v458 = vmul.f32 %v441, %v441
    %v459 = vmul.f32 %v442, %v442
    %v460 = vadd.f32 %v456, %v457
    %v461 = vadd.f32 %v460, %v458
    %v462 = vadd.f32 %v461, %v459
    %v463 = vrot.slane %v462, 4
    %v464 = vadd.f32 %v462, %v463
    %v465 = vrot.slane %v464, 2
    %v466 = vadd.f32 %v464, %v465
    %v467 = vrot.slane %v466, 1
    %v468 = vadd.f32 %v466, %v467
    %v469 = vlaneseq
    %v470 = vshrl.u32 %v469, 7
    %vm471 = vcmp.eq.s32.totalorder %v470, 0
    %vm472 = vcmp.eq.s32.totalorder %v470, 1
    %v473 = vsel %vm472, %v468, 0.0
    %v474 = vsel %vm471, %v455, %v473
    %475 = vst [vmem:[%s3] sm:$0xff] %v474
  $region17: #{discriminator_forward.13} parent=0 // pred_fallthru
    _
  // Predicated region
  $region18: #{discriminator_forward.13} parent=0 // pred_check
    _
  $region19: #{discriminator_forward.13} parent=0 // pred_check_branch
    %477 = sbr.rel (0) target = $region21
  $region20: #{discriminator_forward.13} parent=0 // pred_region
    _
  $region21: #{discriminator_forward.13} parent=0 // pred_fallthru
    _
  // Predicated region
  $region22: #{discriminator_forward.13} parent=0 // pred_check
    _
  $region23: #{discriminator_forward.13} parent=0 // pred_check_branch
    %479 = sbr.rel (0) target = $region25
  $region24: #{discriminator_forward.13} parent=0 // pred_region
    _
  $region25: #{discriminator_forward.13} parent=0 // pred_fallthru
    _
  // Predicated region
  $region26: #{discriminator_forward.13} parent=0 // pred_check
    _
  $region27: #{discriminator_forward.13} parent=0 // pred_check_branch
    %481 = sbr.rel (0) target = $region29
  $region28: #{discriminator_forward.13} parent=0 // pred_region
    _
  $region29: #{discriminator_forward.13} parent=0 // pred_fallthru
    _
  // Predicated region
  $region30: #{discriminator_forward.13} parent=0 // pred_check
    _
  $region31: #{discriminator_forward.13} parent=0 // pred_check_branch
    %483 = sbr.rel (0) target = $region33
  $region32: #{discriminator_forward.13} parent=0 // pred_region
    _
  $region33: #{discriminator_forward.13} parent=0 // pred_fallthru
    _

// kernel: discriminator_forward.15
$region0: #{discriminator_forward.15}
  #allocation0 [shape = 'u32[]', space=smem, size = 0x4, offset = 0x4, fixed_abs, tag = 'smem constant byte address 0x4 - core index']
  #allocation1 [shape = 'u32[144,128]{1,0:T(1,128)}', space=vmem, size = 0x12000, scoped, tag = 'internal scratch']
  #allocation2 [shape = 'f32[16,128]{1,0:T(8,128)}', space=vmem, size = 0x2000, scoped, tag = 'scratch operand']
  %s0 = inlined_call_operand.vmem [shape: bf16[16,1024], index: 0, kind: input, shape index: {}]
  %s1 = inlined_call_operand.vmem [shape: bf16[1024,128], index: 1, kind: input, shape index: {}]
  %s2 = inlined_call_operand.vmem [shape: f32[1,128], index: 2, kind: input, shape index: {}]
  %s3 = inlined_call_operand.vmem [shape: f32[16,128], index: 3, kind: output, shape index: {}]
  %s4 = sld [smem:[#allocation0]]
  $region30: #{discriminator_forward.15} parent=0
    _
  %s6 = ssub.s32 1, %s4
  %s7 = scalar_select 0, %s6, %s4
  // Predicated region
  $region2: #{discriminator_forward.15} parent=0 // pred_check
    _
  $region3: #{discriminator_forward.15} parent=0 // pred_check_branch
    %9 = sbr.rel (0) target = $region5
  $region4: #{discriminator_forward.15} parent=0 // pred_region
    _
  $region5: #{discriminator_forward.15} parent=0 // pred_fallthru
    _
  // Predicated region
  $region6: #{discriminator_forward.15} parent=0 // pred_check
    _
  $region7: #{discriminator_forward.15} parent=0 // pred_check_branch
    %11 = sbr.rel (0) target = $region9
  $region8: #{discriminator_forward.15} parent=0 // pred_region
    _
  $region9: #{discriminator_forward.15} parent=0 // pred_fallthru
    _
  // Predicated region
  $region10: #{discriminator_forward.15} parent=0 // pred_check
    _
  $region11: #{discriminator_forward.15} parent=0 // pred_check_branch
    %13 = sbr.rel (0) target = $region13
  $region12: #{discriminator_forward.15} parent=0 // pred_region
    _
  $region13: #{discriminator_forward.15} parent=0 // pred_fallthru
    _
  %p15 = scmp.eq.s32.totalorder 0, 0
  // Predicated region
  $region14: #{discriminator_forward.15} parent=0 // pred_check
    %p16 = pneg %p15
  $region15: #{discriminator_forward.15} parent=0 // pred_check_branch
    %18 = sbr.rel (%p16) target = $region17
  $region16: #{discriminator_forward.15} parent=0 // pred_region
    %19 = vst [vmem:[#allocation2] sm:$0xff] 0.0
    %20 = vst [vmem:[#allocation2 + $0x8] sm:$0xff] 0.0
  $region17: #{discriminator_forward.15} parent=0 // pred_fallthru
    _
  %v21 = vld [vmem:[#allocation2] sm:$0xff]
  %v22 = vld [vmem:[#allocation2 + $0x8] sm:$0xff]
  %v23 = vld [vmem:[%s0] sm:$0xff]
  %v24 = vld [vmem:[%s0 + $0x8] sm:$0xff]
  %v25 = vld [vmem:[%s0 + $0x10] sm:$0xff]
  %v26 = vld [vmem:[%s0 + $0x18] sm:$0xff]
  %v27 = vld [vmem:[%s0 + $0x20] sm:$0xff]
  %v28 = vld [vmem:[%s0 + $0x28] sm:$0xff]
  %v29 = vld [vmem:[%s0 + $0x30] sm:$0xff]
  %v30 = vld [vmem:[%s0 + $0x38] sm:$0xff]
  %v31 = vld [vmem:[%s1] sm:$0xf]
  %v32 = vld [vmem:[%s1 + $0x4] sm:$0xf]
  %v33 = vld [vmem:[%s1 + $0x8] sm:$0xf]
  %v34 = vld [vmem:[%s1 + $0xc] sm:$0xf]
  %v35 = vld [vmem:[%s1 + $0x10] sm:$0xf]
  %v36 = vld [vmem:[%s1 + $0x14] sm:$0xf]
  %v37 = vld [vmem:[%s1 + $0x18] sm:$0xf]
  %v38 = vld [vmem:[%s1 + $0x1c] sm:$0xf]
  %v39 = vld [vmem:[%s1 + $0x20] sm:$0xf]
  %v40 = vld [vmem:[%s1 + $0x24] sm:$0xf]
  %v41 = vld [vmem:[%s1 + $0x28] sm:$0xf]
  %v42 = vld [vmem:[%s1 + $0x2c] sm:$0xf]
  %v43 = vld [vmem:[%s1 + $0x30] sm:$0xf]
  %v44 = vld [vmem:[%s1 + $0x34] sm:$0xf]
  %v45 = vld [vmem:[%s1 + $0x38] sm:$0xf]
  %v46 = vld [vmem:[%s1 + $0x3c] sm:$0xf]
  %v47 = vld [vmem:[%s1 + $0x40] sm:$0xf]
  %v48 = vld [vmem:[%s1 + $0x44] sm:$0xf]
  %v49 = vld [vmem:[%s1 + $0x48] sm:$0xf]
  %v50 = vld [vmem:[%s1 + $0x4c] sm:$0xf]
  %v51 = vld [vmem:[%s1 + $0x50] sm:$0xf]
  %v52 = vld [vmem:[%s1 + $0x54] sm:$0xf]
  %v53 = vld [vmem:[%s1 + $0x58] sm:$0xf]
  %v54 = vld [vmem:[%s1 + $0x5c] sm:$0xf]
  %v55 = vld [vmem:[%s1 + $0x60] sm:$0xf]
  %v56 = vld [vmem:[%s1 + $0x64] sm:$0xf]
  %v57 = vld [vmem:[%s1 + $0x68] sm:$0xf]
  %v58 = vld [vmem:[%s1 + $0x6c] sm:$0xf]
  %v59 = vld [vmem:[%s1 + $0x70] sm:$0xf]
  %v60 = vld [vmem:[%s1 + $0x74] sm:$0xf]
  %v61 = vld [vmem:[%s1 + $0x78] sm:$0xf]
  %v62 = vld [vmem:[%s1 + $0x7c] sm:$0xf]
  %v63 = vld [vmem:[%s1 + $0x80] sm:$0xf]
  %v64 = vld [vmem:[%s1 + $0x84] sm:$0xf]
  %v65 = vld [vmem:[%s1 + $0x88] sm:$0xf]
  %v66 = vld [vmem:[%s1 + $0x8c] sm:$0xf]
  %v67 = vld [vmem:[%s1 + $0x90] sm:$0xf]
  %v68 = vld [vmem:[%s1 + $0x94] sm:$0xf]
  %v69 = vld [vmem:[%s1 + $0x98] sm:$0xf]
  %v70 = vld [vmem:[%s1 + $0x9c] sm:$0xf]
  %v71 = vld [vmem:[%s1 + $0xa0] sm:$0xf]
  %v72 = vld [vmem:[%s1 + $0xa4] sm:$0xf]
  %v73 = vld [vmem:[%s1 + $0xa8] sm:$0xf]
  %v74 = vld [vmem:[%s1 + $0xac] sm:$0xf]
  %v75 = vld [vmem:[%s1 + $0xb0] sm:$0xf]
  %v76 = vld [vmem:[%s1 + $0xb4] sm:$0xf]
  %v77 = vld [vmem:[%s1 + $0xb8] sm:$0xf]
  %v78 = vld [vmem:[%s1 + $0xbc] sm:$0xf]
  %v79 = vld [vmem:[%s1 + $0xc0] sm:$0xf]
  %v80 = vld [vmem:[%s1 + $0xc4] sm:$0xf]
  %v81 = vld [vmem:[%s1 + $0xc8] sm:$0xf]
  %v82 = vld [vmem:[%s1 + $0xcc] sm:$0xf]
  %v83 = vld [vmem:[%s1 + $0xd0] sm:$0xf]
  %v84 = vld [vmem:[%s1 + $0xd4] sm:$0xf]
  %v85 = vld [vmem:[%s1 + $0xd8] sm:$0xf]
  %v86 = vld [vmem:[%s1 + $0xdc] sm:$0xf]
  %v87 = vld [vmem:[%s1 + $0xe0] sm:$0xf]
  %v88 = vld [vmem:[%s1 + $0xe4] sm:$0xf]
  %v89 = vld [vmem:[%s1 + $0xe8] sm:$0xf]
  %v90 = vld [vmem:[%s1 + $0xec] sm:$0xf]
  %v91 = vld [vmem:[%s1 + $0xf0] sm:$0xf]
  %v92 = vld [vmem:[%s1 + $0xf4] sm:$0xf]
  %v93 = vld [vmem:[%s1 + $0xf8] sm:$0xf]
  %v94 = vld [vmem:[%s1 + $0xfc] sm:$0xf]
  %v95 = vld [vmem:[%s1 + $0x100] sm:$0xf]
  %v96 = vld [vmem:[%s1 + $0x104] sm:$0xf]
  %v97 = vld [vmem:[%s1 + $0x108] sm:$0xf]
  %v98 = vld [vmem:[%s1 + $0x10c] sm:$0xf]
  %v99 = vld [vmem:[%s1 + $0x110] sm:$0xf]
  %v100 = vld [vmem:[%s1 + $0x114] sm:$0xf]
  %v101 = vld [vmem:[%s1 + $0x118] sm:$0xf]
  %v102 = vld [vmem:[%s1 + $0x11c] sm:$0xf]
  %v103 = vld [vmem:[%s1 + $0x120] sm:$0xf]
  %v104 = vld [vmem:[%s1 + $0x124] sm:$0xf]
  %v105 = vld [vmem:[%s1 + $0x128] sm:$0xf]
  %v106 = vld [vmem:[%s1 + $0x12c] sm:$0xf]
  %v107 = vld [vmem:[%s1 + $0x130] sm:$0xf]
  %v108 = vld [vmem:[%s1 + $0x134] sm:$0xf]
  %v109 = vld [vmem:[%s1 + $0x138] sm:$0xf]
  %v110 = vld [vmem:[%s1 + $0x13c] sm:$0xf]
  %v111 = vld [vmem:[%s1 + $0x140] sm:$0xf]
  %v112 = vld [vmem:[%s1 + $0x144] sm:$0xf]
  %v113 = vld [vmem:[%s1 + $0x148] sm:$0xf]
  %v114 = vld [vmem:[%s1 + $0x14c] sm:$0xf]
  %v115 = vld [vmem:[%s1 + $0x150] sm:$0xf]
  %v116 = vld [vmem:[%s1 + $0x154] sm:$0xf]
  %v117 = vld [vmem:[%s1 + $0x158] sm:$0xf]
  %v118 = vld [vmem:[%s1 + $0x15c] sm:$0xf]
  %v119 = vld [vmem:[%s1 + $0x160] sm:$0xf]
  %v120 = vld [vmem:[%s1 + $0x164] sm:$0xf]
  %v121 = vld [vmem:[%s1 + $0x168] sm:$0xf]
  %v122 = vld [vmem:[%s1 + $0x16c] sm:$0xf]
  %v123 = vld [vmem:[%s1 + $0x170] sm:$0xf]
  %v124 = vld [vmem:[%s1 + $0x174] sm:$0xf]
  %v125 = vld [vmem:[%s1 + $0x178] sm:$0xf]
  %v126 = vld [vmem:[%s1 + $0x17c] sm:$0xf]
  %v127 = vld [vmem:[%s1 + $0x180] sm:$0xf]
  %v128 = vld [vmem:[%s1 + $0x184] sm:$0xf]
  %v129 = vld [vmem:[%s1 + $0x188] sm:$0xf]
  %v130 = vld [vmem:[%s1 + $0x18c] sm:$0xf]
  %v131 = vld [vmem:[%s1 + $0x190] sm:$0xf]
  %v132 = vld [vmem:[%s1 + $0x194] sm:$0xf]
  %v133 = vld [vmem:[%s1 + $0x198] sm:$0xf]
  %v134 = vld [vmem:[%s1 + $0x19c] sm:$0xf]
  %v135 = vld [vmem:[%s1 + $0x1a0] sm:$0xf]
  %v136 = vld [vmem:[%s1 + $0x1a4] sm:$0xf]
  %v137 = vld [vmem:[%s1 + $0x1a8] sm:$0xf]
  %v138 = vld [vmem:[%s1 + $0x1ac] sm:$0xf]
  %v139 = vld [vmem:[%s1 + $0x1b0] sm:$0xf]
  %v140 = vld [vmem:[%s1 + $0x1b4] sm:$0xf]
  %v141 = vld [vmem:[%s1 + $0x1b8] sm:$0xf]
  %v142 = vld [vmem:[%s1 + $0x1bc] sm:$0xf]
  %v143 = vld [vmem:[%s1 + $0x1c0] sm:$0xf]
  %v144 = vld [vmem:[%s1 + $0x1c4] sm:$0xf]
  %v145 = vld [vmem:[%s1 + $0x1c8] sm:$0xf]
  %v146 = vld [vmem:[%s1 + $0x1cc] sm:$0xf]
  %v147 = vld [vmem:[%s1 + $0x1d0] sm:$0xf]
  %v148 = vld [vmem:[%s1 + $0x1d4] sm:$0xf]
  %v149 = vld [vmem:[%s1 + $0x1d8] sm:$0xf]
  %v150 = vld [vmem:[%s1 + $0x1dc] sm:$0xf]
  %v151 = vld [vmem:[%s1 + $0x1e0] sm:$0xf]
  %v152 = vld [vmem:[%s1 + $0x1e4] sm:$0xf]
  %v153 = vld [vmem:[%s1 + $0x1e8] sm:$0xf]
  %v154 = vld [vmem:[%s1 + $0x1ec] sm:$0xf]
  %v155 = vld [vmem:[%s1 + $0x1f0] sm:$0xf]
  %v156 = vld [vmem:[%s1 + $0x1f4] sm:$0xf]
  %v157 = vld [vmem:[%s1 + $0x1f8] sm:$0xf]
  %v158 = vld [vmem:[%s1 + $0x1fc] sm:$0xf]
  %v167 = vunpack.c.l.b16 %v23
  %v168 = vunpack.c.h.b16 %v23
  %v169 = vunpack.c.l.b16 %v24
  %v170 = vunpack.c.h.b16 %v24
  %v171 = vunpack.c.l.b16 %v25
  %v172 = vunpack.c.h.b16 %v25
  %v173 = vunpack.c.l.b16 %v26
  %v174 = vunpack.c.h.b16 %v26
  %v175 = vunpack.c.l.b16 %v27
  %v176 = vunpack.c.h.b16 %v27
  %v177 = vunpack.c.l.b16 %v28
  %v178 = vunpack.c.h.b16 %v28
  %v179 = vunpack.c.l.b16 %v29
  %v180 = vunpack.c.h.b16 %v29
  %v181 = vunpack.c.l.b16 %v30
  %v182 = vunpack.c.h.b16 %v30
  %v183 = vpack.c.b16 %v175, %v167
  %v184 = vpack.c.b16 %v176, %v168
  %v185 = vpack.c.b16 %v177, %v169
  %v186 = vpack.c.b16 %v178, %v170
  %v187 = vpack.c.b16 %v179, %v171
  %v188 = vpack.c.b16 %v180, %v172
  %v189 = vpack.c.b16 %v181, %v173
  %v190 = vpack.c.b16 %v182, %v174
  %v327 = vunpack.c.l.b16 %v31
  %v328 = vunpack.c.l.b16 %v32
  %v329 = vunpack.c.l.b16 %v33
  %v330 = vunpack.c.l.b16 %v34
  %v331 = vunpack.c.l.b16 %v35
  %v332 = vunpack.c.l.b16 %v36
  %v333 = vunpack.c.l.b16 %v37
  %v334 = vunpack.c.l.b16 %v38
  %v335 = vunpack.c.l.b16 %v39
  %v336 = vunpack.c.l.b16 %v40
  %v337 = vunpack.c.l.b16 %v41
  %v338 = vunpack.c.l.b16 %v42
  %v339 = vunpack.c.l.b16 %v43
  %v340 = vunpack.c.l.b16 %v44
  %v341 = vunpack.c.l.b16 %v45
  %v342 = vunpack.c.l.b16 %v46
  %v343 = vunpack.c.l.b16 %v47
  %v344 = vunpack.c.l.b16 %v48
  %v345 = vunpack.c.l.b16 %v49
  %v346 = vunpack.c.l.b16 %v50
  %v347 = vunpack.c.l.b16 %v51
  %v348 = vunpack.c.l.b16 %v52
  %v349 = vunpack.c.l.b16 %v53
  %v350 = vunpack.c.l.b16 %v54
  %v351 = vunpack.c.l.b16 %v55
  %v352 = vunpack.c.l.b16 %v56
  %v353 = vunpack.c.l.b16 %v57
  %v354 = vunpack.c.l.b16 %v58
  %v355 = vunpack.c.l.b16 %v59
  %v356 = vunpack.c.l.b16 %v60
  %v357 = vunpack.c.l.b16 %v61
  %v358 = vunpack.c.l.b16 %v62
  %v359 = vunpack.c.l.b16 %v63
  %v360 = vunpack.c.l.b16 %v64
  %v361 = vunpack.c.l.b16 %v65
  %v362 = vunpack.c.l.b16 %v66
  %v363 = vunpack.c.l.b16 %v67
  %v364 = vunpack.c.l.b16 %v68
  %v365 = vunpack.c.l.b16 %v69
  %v366 = vunpack.c.l.b16 %v70
  %v367 = vunpack.c.l.b16 %v71
  %v368 = vunpack.c.l.b16 %v72
  %v369 = vunpack.c.l.b16 %v73
  %v370 = vunpack.c.l.b16 %v74
  %v371 = vunpack.c.l.b16 %v75
  %v372 = vunpack.c.l.b16 %v76
  %v373 = vunpack.c.l.b16 %v77
  %v374 = vunpack.c.l.b16 %v78
  %v375 = vunpack.c.l.b16 %v79
  %v376 = vunpack.c.l.b16 %v80
  %v377 = vunpack.c.l.b16 %v81
  %v378 = vunpack.c.l.b16 %v82
  %v379 = vunpack.c.l.b16 %v83
  %v380 = vunpack.c.l.b16 %v84
  %v381 = vunpack.c.l.b16 %v85
  %v382 = vunpack.c.l.b16 %v86
  %v383 = vunpack.c.l.b16 %v87
  %v384 = vunpack.c.l.b16 %v88
  %v385 = vunpack.c.l.b16 %v89
  %v386 = vunpack.c.l.b16 %v90
  %v387 = vunpack.c.l.b16 %v91
  %v388 = vunpack.c.l.b16 %v92
  %v389 = vunpack.c.l.b16 %v93
  %v390 = vunpack.c.l.b16 %v94
  %v391 = vunpack.c.l.b16 %v95
  %v392 = vunpack.c.l.b16 %v96
  %v393 = vunpack.c.l.b16 %v97
  %v394 = vunpack.c.l.b16 %v98
  %v395 = vunpack.c.l.b16 %v99
  %v396 = vunpack.c.l.b16 %v100
  %v397 = vunpack.c.l.b16 %v101
  %v398 = vunpack.c.l.b16 %v102
  %v399 = vunpack.c.l.b16 %v103
  %v400 = vunpack.c.l.b16 %v104
  %v401 = vunpack.c.l.b16 %v105
  %v402 = vunpack.c.l.b16 %v106
  %v403 = vunpack.c.l.b16 %v107
  %v404 = vunpack.c.l.b16 %v108
  %v405 = vunpack.c.l.b16 %v109
  %v406 = vunpack.c.l.b16 %v110
  %v407 = vunpack.c.l.b16 %v111
  %v408 = vunpack.c.l.b16 %v112
  %v409 = vunpack.c.l.b16 %v113
  %v410 = vunpack.c.l.b16 %v114
  %v411 = vunpack.c.l.b16 %v115
  %v412 = vunpack.c.l.b16 %v116
  %v413 = vunpack.c.l.b16 %v117
  %v414 = vunpack.c.l.b16 %v118
  %v415 = vunpack.c.l.b16 %v119
  %v416 = vunpack.c.l.b16 %v120
  %v417 = vunpack.c.l.b16 %v121
  %v418 = vunpack.c.l.b16 %v122
  %v419 = vunpack.c.l.b16 %v123
  %v420 = vunpack.c.l.b16 %v124
  %v421 = vunpack.c.l.b16 %v125
  %v422 = vunpack.c.l.b16 %v126
  %v423 = vunpack.c.l.b16 %v127
  %v424 = vunpack.c.l.b16 %v128
  %v425 = vunpack.c.l.b16 %v129
  %v426 = vunpack.c.l.b16 %v130
  %v427 = vunpack.c.l.b16 %v131
  %v428 = vunpack.c.l.b16 %v132
  %v429 = vunpack.c.l.b16 %v133
  %v430 = vunpack.c.l.b16 %v134
  %v431 = vunpack.c.l.b16 %v135
  %v432 = vunpack.c.l.b16 %v136
  %v433 = vunpack.c.l.b16 %v137
  %v434 = vunpack.c.l.b16 %v138
  %v435 = vunpack.c.l.b16 %v139
  %v436 = vunpack.c.l.b16 %v140
  %v437 = vunpack.c.l.b16 %v141
  %v438 = vunpack.c.l.b16 %v142
  %v439 = vunpack.c.l.b16 %v143
  %v440 = vunpack.c.l.b16 %v144
  %v441 = vunpack.c.l.b16 %v145
  %v442 = vunpack.c.l.b16 %v146
  %v443 = vunpack.c.l.b16 %v147
  %v444 = vunpack.c.l.b16 %v148
  %v445 = vunpack.c.l.b16 %v149
  %v446 = vunpack.c.l.b16 %v150
  %v447 = vunpack.c.l.b16 %v151
  %v448 = vunpack.c.l.b16 %v152
  %v449 = vunpack.c.l.b16 %v153
  %v450 = vunpack.c.l.b16 %v154
  %v451 = vunpack.c.l.b16 %v155
  %v452 = vunpack.c.l.b16 %v156
  %v453 = vunpack.c.l.b16 %v157
  %v454 = vunpack.c.l.b16 %v158
  %v455 = vpack.c.b16 %v328, %v327
  %v456 = vpack.c.b16 %v330, %v329
  %v457 = vpack.c.b16 %v332, %v331
  %v458 = vpack.c.b16 %v334, %v333
  %v459 = vpack.c.b16 %v336, %v335
  %v460 = vpack.c.b16 %v338, %v337
  %v461 = vpack.c.b16 %v340, %v339
  %v462 = vpack.c.b16 %v342, %v341
  %v463 = vpack.c.b16 %v344, %v343
  %v464 = vpack.c.b16 %v346, %v345
  %v465 = vpack.c.b16 %v348, %v347
  %v466 = vpack.c.b16 %v350, %v349
  %v467 = vpack.c.b16 %v352, %v351
  %v468 = vpack.c.b16 %v354, %v353
  %v469 = vpack.c.b16 %v356, %v355
  %v470 = vpack.c.b16 %v358, %v357
  %v471 = vpack.c.b16 %v360, %v359
  %v472 = vpack.c.b16 %v362, %v361
  %v473 = vpack.c.b16 %v364, %v363
  %v474 = vpack.c.b16 %v366, %v365
  %v475 = vpack.c.b16 %v368, %v367
  %v476 = vpack.c.b16 %v370, %v369
  %v477 = vpack.c.b16 %v372, %v371
  %v478 = vpack.c.b16 %v374, %v373
  %v479 = vpack.c.b16 %v376, %v375
  %v480 = vpack.c.b16 %v378, %v377
  %v481 = vpack.c.b16 %v380, %v379
  %v482 = vpack.c.b16 %v382, %v381
  %v483 = vpack.c.b16 %v384, %v383
  %v484 = vpack.c.b16 %v386, %v385
  %v485 = vpack.c.b16 %v388, %v387
  %v486 = vpack.c.b16 %v390, %v389
  %v487 = vpack.c.b16 %v392, %v391
  %v488 = vpack.c.b16 %v394, %v393
  %v489 = vpack.c.b16 %v396, %v395
  %v490 = vpack.c.b16 %v398, %v397
  %v491 = vpack.c.b16 %v400, %v399
  %v492 = vpack.c.b16 %v402, %v401
  %v493 = vpack.c.b16 %v404, %v403
  %v494 = vpack.c.b16 %v406, %v405
  %v495 = vpack.c.b16 %v408, %v407
  %v496 = vpack.c.b16 %v410, %v409
  %v497 = vpack.c.b16 %v412, %v411
  %v498 = vpack.c.b16 %v414, %v413
  %v499 = vpack.c.b16 %v416, %v415
  %v500 = vpack.c.b16 %v418, %v417
  %v501 = vpack.c.b16 %v420, %v419
  %v502 = vpack.c.b16 %v422, %v421
  %v503 = vpack.c.b16 %v424, %v423
  %v504 = vpack.c.b16 %v426, %v425
  %v505 = vpack.c.b16 %v428, %v427
  %v506 = vpack.c.b16 %v430, %v429
  %v507 = vpack.c.b16 %v432, %v431
  %v508 = vpack.c.b16 %v434, %v433
  %v509 = vpack.c.b16 %v436, %v435
  %v510 = vpack.c.b16 %v438, %v437
  %v511 = vpack.c.b16 %v440, %v439
  %v512 = vpack.c.b16 %v442, %v441
  %v513 = vpack.c.b16 %v444, %v443
  %v514 = vpack.c.b16 %v446, %v445
  %v515 = vpack.c.b16 %v448, %v447
  %v516 = vpack.c.b16 %v450, %v449
  %v517 = vpack.c.b16 %v452, %v451
  %v518 = vpack.c.b16 %v454, %v453
  %583 = vmatprep.subr.bf16.mxu0 0
  %584 = vmatpush1.bf16.msra.mxu0 %v455
  %585 = vmatprep.subr.bf16.mxu0 0
  %586 = vmatpush1.bf16.msra.mxu0 %v456
  %587 = vmatprep.subr.bf16.mxu0 0
  %588 = vmatpush1.bf16.msra.mxu0 %v457
  %589 = vmatprep.subr.bf16.mxu0 0
  %590 = vmatpush1.bf16.msra.mxu0 %v458
  %591 = vmatprep.subr.bf16.mxu0 0
  %592 = vmatpush1.bf16.msra.mxu0 %v459
  %593 = vmatprep.subr.bf16.mxu0 0
  %594 = vmatpush1.bf16.msra.mxu0 %v460
  %595 = vmatprep.subr.bf16.mxu0 0
  %596 = vmatpush1.bf16.msra.mxu0 %v461
  %597 = vmatprep.subr.bf16.mxu0 0
  %598 = vmatpush1.bf16.msra.mxu0 %v462
  %599 = vmatprep.subr.bf16.mxu0 0
  %600 = vmatpush1.bf16.msra.mxu0 %v463
  %601 = vmatprep.subr.bf16.mxu0 0
  %602 = vmatpush1.bf16.msra.mxu0 %v464
  %603 = vmatprep.subr.bf16.mxu0 0
  %604 = vmatpush1.bf16.msra.mxu0 %v465
  %605 = vmatprep.subr.bf16.mxu0 0
  %606 = vmatpush1.bf16.msra.mxu0 %v466
  %607 = vmatprep.subr.bf16.mxu0 0
  %608 = vmatpush1.bf16.msra.mxu0 %v467
  %609 = vmatprep.subr.bf16.mxu0 0
  %610 = vmatpush1.bf16.msra.mxu0 %v468
  %611 = vmatprep.subr.bf16.mxu0 0
  %612 = vmatpush1.bf16.msra.mxu0 %v469
  %613 = vmatprep.subr.bf16.mxu0 0
  %614 = vmatpush1.bf16.msra.mxu0 %v470
  %615 = vmatprep.mubr.bf16.mxu0 %v184
  %616 = vmatmul.mubr.bf16.gmra.mrb[0].mxu0 %v183
  %v617 = vpop.f32.mrb[0].mxu0
  %v618 = vadd.f32 0.0, %v617
  %v619 = vpop.f32.mrb[0].mxu0
  %v620 = vpop.f32.mrb[0].mxu0
  %v621 = vadd.f32 0.0, %v620
  %v622 = vpop.f32.mrb[0].mxu0
  %623 = vdwg.mxu0
  %624 = vmatprep.subr.bf16.mxu0 0
  %625 = vmatpush1.bf16.msra.mxu0 %v471
  %626 = vmatprep.subr.bf16.mxu0 0
  %627 = vmatpush1.bf16.msra.mxu0 %v472
  %628 = vmatprep.subr.bf16.mxu0 0
  %629 = vmatpush1.bf16.msra.mxu0 %v473
  %630 = vmatprep.subr.bf16.mxu0 0
  %631 = vmatpush1.bf16.msra.mxu0 %v474
  %632 = vmatprep.subr.bf16.mxu0 0
  %633 = vmatpush1.bf16.msra.mxu0 %v475
  %634 = vmatprep.subr.bf16.mxu0 0
  %635 = vmatpush1.bf16.msra.mxu0 %v476
  %636 = vmatprep.subr.bf16.mxu0 0
  %637 = vmatpush1.bf16.msra.mxu0 %v477
  %638 = vmatprep.subr.bf16.mxu0 0
  %639 = vmatpush1.bf16.msra.mxu0 %v478
  %640 = vmatprep.subr.bf16.mxu0 0
  %641 = vmatpush1.bf16.msra.mxu0 %v479
  %642 = vmatprep.subr.bf16.mxu0 0
  %643 = vmatpush1.bf16.msra.mxu0 %v480
  %644 = vmatprep.subr.bf16.mxu0 0
  %645 = vmatpush1.bf16.msra.mxu0 %v481
  %646 = vmatprep.subr.bf16.mxu0 0
  %647 = vmatpush1.bf16.msra.mxu0 %v482
  %648 = vmatprep.subr.bf16.mxu0 0
  %649 = vmatpush1.bf16.msra.mxu0 %v483
  %650 = vmatprep.subr.bf16.mxu0 0
  %651 = vmatpush1.bf16.msra.mxu0 %v484
  %652 = vmatprep.subr.bf16.mxu0 0
  %653 = vmatpush1.bf16.msra.mxu0 %v485
  %654 = vmatprep.subr.bf16.mxu0 0
  %655 = vmatpush1.bf16.msra.mxu0 %v486
  %656 = vmatprep.mubr.bf16.mxu0 %v186
  %657 = vmatmul.mubr.bf16.gmra.mrb[0].mxu0 %v185
  %v658 = vpop.f32.mrb[0].mxu0
  %v659 = vadd.f32 %v618, %v658
  %v660 = vpop.f32.mrb[0].mxu0
  %v661 = vpop.f32.mrb[0].mxu0
  %v662 = vadd.f32 %v621, %v661
  %v663 = vpop.f32.mrb[0].mxu0
  %664 = vdwg.mxu0
  %665 = vmatprep.subr.bf16.mxu0 0
  %666 = vmatpush1.bf16.msra.mxu0 %v487
  %667 = vmatprep.subr.bf16.mxu0 0
  %668 = vmatpush1.bf16.msra.mxu0 %v488
  %669 = vmatprep.subr.bf16.mxu0 0
  %670 = vmatpush1.bf16.msra.mxu0 %v489
  %671 = vmatprep.subr.bf16.mxu0 0
  %672 = vmatpush1.bf16.msra.mxu0 %v490
  %673 = vmatprep.subr.bf16.mxu0 0
  %674 = vmatpush1.bf16.msra.mxu0 %v491
  %675 = vmatprep.subr.bf16.mxu0 0
  %676 = vmatpush1.bf16.msra.mxu0 %v492
  %677 = vmatprep.subr.bf16.mxu0 0
  %678 = vmatpush1.bf16.msra.mxu0 %v493
  %679 = vmatprep.subr.bf16.mxu0 0
  %680 = vmatpush1.bf16.msra.mxu0 %v494
  %681 = vmatprep.subr.bf16.mxu0 0
  %682 = vmatpush1.bf16.msra.mxu0 %v495
  %683 = vmatprep.subr.bf16.mxu0 0
  %684 = vmatpush1.bf16.msra.mxu0 %v496
  %685 = vmatprep.subr.bf16.mxu0 0
  %686 = vmatpush1.bf16.msra.mxu0 %v497
  %687 = vmatprep.subr.bf16.mxu0 0
  %688 = vmatpush1.bf16.msra.mxu0 %v498
  %689 = vmatprep.subr.bf16.mxu0 0
  %690 = vmatpush1.bf16.msra.mxu0 %v499
  %691 = vmatprep.subr.bf16.mxu0 0
  %692 = vmatpush1.bf16.msra.mxu0 %v500
  %693 = vmatprep.subr.bf16.mxu0 0
  %694 = vmatpush1.bf16.msra.mxu0 %v501
  %695 = vmatprep.subr.bf16.mxu0 0
  %696 = vmatpush1.bf16.msra.mxu0 %v502
  %697 = vmatprep.mubr.bf16.mxu0 %v188
  %698 = vmatmul.mubr.bf16.gmra.mrb[0].mxu0 %v187
  %v699 = vpop.f32.mrb[0].mxu0
  %v700 = vadd.f32 %v659, %v699
  %v701 = vpop.f32.mrb[0].mxu0
  %v702 = vpop.f32.mrb[0].mxu0
  %v703 = vadd.f32 %v662, %v702
  %v704 = vpop.f32.mrb[0].mxu0
  %705 = vdwg.mxu0
  %706 = vmatprep.subr.bf16.mxu0 0
  %707 = vmatpush1.bf16.msra.mxu0 %v503
  %708 = vmatprep.subr.bf16.mxu0 0
  %709 = vmatpush1.bf16.msra.mxu0 %v504
  %710 = vmatprep.subr.bf16.mxu0 0
  %711 = vmatpush1.bf16.msra.mxu0 %v505
  %712 = vmatprep.subr.bf16.mxu0 0
  %713 = vmatpush1.bf16.msra.mxu0 %v506
  %714 = vmatprep.subr.bf16.mxu0 0
  %715 = vmatpush1.bf16.msra.mxu0 %v507
  %716 = vmatprep.subr.bf16.mxu0 0
  %717 = vmatpush1.bf16.msra.mxu0 %v508
  %718 = vmatprep.subr.bf16.mxu0 0
  %719 = vmatpush1.bf16.msra.mxu0 %v509
  %720 = vmatprep.subr.bf16.mxu0 0
  %721 = vmatpush1.bf16.msra.mxu0 %v510
  %722 = vmatprep.subr.bf16.mxu0 0
  %723 = vmatpush1.bf16.msra.mxu0 %v511
  %724 = vmatprep.subr.bf16.mxu0 0
  %725 = vmatpush1.bf16.msra.mxu0 %v512
  %726 = vmatprep.subr.bf16.mxu0 0
  %727 = vmatpush1.bf16.msra.mxu0 %v513
  %728 = vmatprep.subr.bf16.mxu0 0
  %729 = vmatpush1.bf16.msra.mxu0 %v514
  %730 = vmatprep.subr.bf16.mxu0 0
  %731 = vmatpush1.bf16.msra.mxu0 %v515
  %732 = vmatprep.subr.bf16.mxu0 0
  %733 = vmatpush1.bf16.msra.mxu0 %v516
  %734 = vmatprep.subr.bf16.mxu0 0
  %735 = vmatpush1.bf16.msra.mxu0 %v517
  %736 = vmatprep.subr.bf16.mxu0 0
  %737 = vmatpush1.bf16.msra.mxu0 %v518
  %738 = vmatprep.mubr.bf16.mxu0 %v190
  %739 = vmatmul.mubr.bf16.gmra.mrb[0].mxu0 %v189
  %v740 = vpop.f32.mrb[0].mxu0
  %v741 = vadd.f32 %v700, %v740
  %v742 = vpop.f32.mrb[0].mxu0
  %v743 = vpop.f32.mrb[0].mxu0
  %v744 = vadd.f32 %v703, %v743
  %v745 = vpop.f32.mrb[0].mxu0
  %746 = vdwg.mxu0
  %v747 = vadd.f32 %v21, %v741
  %v748 = vadd.f32 %v22, %v744
  %749 = vst [vmem:[#allocation2] sm:$0xff] %v747
  %750 = vst [vmem:[#allocation2 + $0x8] sm:$0xff] %v748
  // Predicated region
  $region18: #{discriminator_forward.15} parent=0 // pred_check
    %p751 = pneg %p15
  $region19: #{discriminator_forward.15} parent=0 // pred_check_branch
    %753 = sbr.rel (%p751) target = $region21
  $region20: #{discriminator_forward.15} parent=0 // pred_region
    %v754 = vld [vmem:[#allocation2] sm:$0xff]
    %v755 = vld [vmem:[#allocation2 + $0x8] sm:$0xff]
    %v756 = vld [vmem:[%s2] sm:$0x1]
    %v758 = vlaneseq
    %v759 = vshrl.u32 %v758, 7
    %v760 = vsub.s32 0, %v759
    %v761 = vrot.slane %v756, %v760
    %v763 = vadd.f32 %v754, %v761
    %v764 = vadd.f32 %v755, %v761
    %v765 = vsub.f32 0.0, %v763
    %v766 = vsub.f32 0.0, %v764
    %v767 = vmul.f32 %v765, 1.442695
    %v768 = vpow.pop %v767
    %v769 = vmul.f32 %v766, 1.442695
    %v770 = vpow.pop %v769
    %v771 = vadd.f32 %v768, 1.0
    %v772 = vadd.f32 %v770, 1.0
    %v773 = vrcp.pop %v771
    %v774 = vmul.f32 1.0, %v773
    %v775 = vrcp.pop %v772
    %v776 = vmul.f32 1.0, %v775
    %777 = vst [vmem:[%s3] sm:$0xff] %v774
    %778 = vst [vmem:[%s3 + $0x8] sm:$0xff] %v776
  $region21: #{discriminator_forward.15} parent=0 // pred_fallthru
    _
  // Predicated region
  $region22: #{discriminator_forward.15} parent=0 // pred_check
    _
  $region23: #{discriminator_forward.15} parent=0 // pred_check_branch
    %780 = sbr.rel (0) target = $region25
  $region24: #{discriminator_forward.15} parent=0 // pred_region
    _
  $region25: #{discriminator_forward.15} parent=0 // pred_fallthru
    _
  // Predicated region
  $region26: #{discriminator_forward.15} parent=0 // pred_check
    _
  $region27: #{discriminator_forward.15} parent=0 // pred_check_branch
    %782 = sbr.rel (0) target = $region29
  $region28: #{discriminator_forward.15} parent=0 // pred_region
    _
  $region29: #{discriminator_forward.15} parent=0 // pred_fallthru
    _

</llo_original>
